<compile_context>
chip_gen: v6e
topology: v6e:2x2x1
jax: 0.10.0
libtpu: 0.0.40
codegen_flags: <defaults>
</compile_context>

<pallas_src>
import jax
import jax.numpy as jnp
from jax.experimental import pallas as pl
from jax.experimental.pallas import tpu as pltpu


def _round_up(x, m):
    return (x + m - 1) // m * m


def _vmem_capacity_bytes():
    """Physical VMEM of the local TPU; conservative (v7x) fallback."""
    try:
        return int(pltpu.get_tpu_info().vmem_capacity_bytes)
    except Exception:
        return 64 * 1024 * 1024


def _vmem_bytes_per_step(th, w, cin_p, cmid_p, cout_s):
    """Rough per-grid-step VMEM footprint (double-buffered IO + scratch + temps)."""
    th1 = th + 1
    r2 = 2 * th + 2
    ro = 2 * th
    in_blk = (th + 2) * (w + 2) * cin_p * 2                 # bf16 input strip
    out_blk = ro * w * (2 * cout_s) * 2                     # bf16 output tile
    wts = (2 * 2 * 4 * cin_p * cmid_p + 3 * 3 * cmid_p * cout_s) * 2
    scratch = 2 * r2 * (w + 2) * cmid_p * 2 + 2 * ro * w * cout_s * 4
    tmp_conv1 = (in_blk                                     # loaded strip
                 + th1 * w * 6 * cin_p * 2                  # shared im2col LHS
                 + 2 * th1 * w * cmid_p * 4                 # two live f32 dots
                 + r2 * w * cmid_p * 2)                     # interleaved value
    tmp_conv2 = ro * w * 4 * cmid_p * 2 + 2 * ro * w * cout_s * 4
    return 2 * in_blk + 2 * out_blk + 2 * wts + scratch + max(tmp_conv1, tmp_conv2)


def _pick_tile_h(h, n, w, cin_p, cmid_p, cout_s, budget_bytes, max_tile=64):
    divs = [d for d in range(1, min(h, max_tile) + 1) if h % d == 0]
    fits = [d for d in divs
            if _vmem_bytes_per_step(d, w, cin_p, cmid_p, cout_s) <= budget_bytes]
    cands = fits if fits else [divs[0]]
    # Keep at least 2 grid steps so both v7x TensorCores get work.
    if n * (h // max(cands)) < 2:
        multi = [d for d in cands if n * (h // d) >= 2]
        if multi:
            cands = multi
    return max(cands)


def _decoder_block_kernel(x_ref, w1f_ref, w2f_ref, o_ref,
                          meh_ref, moh_ref, acc_e_ref, acc_o_ref):
    # x_ref  : (1, TH+2, W+2, Cin_p) bf16  pre-upsample strip, 1-row/col halo
    # w1f_ref: (2, 2, 4*Cin_p, Cmid_p) bf16 conv1 2x2-polyphase weights,
    #          taps K-fused in (b-major, a-minor) order
    # w2f_ref: (3, 3*Cmid_p, Cout_s) bf16   conv2 weights, dx taps K-fused
    # o_ref  : (1, 2*TH, W, 2*Cout_s) bf16  even cols in lanes [:Cout_s],
    #                                       odd cols in lanes [Cout_s:]
    th2 = x_ref.shape[1]           # TH + 2
    wp2 = x_ref.shape[2]           # W + 2
    w = wp2 - 2
    cin_p = x_ref.shape[3]
    cmid_p = meh_ref.shape[2]
    cout_s = acc_e_ref.shape[1]
    th = th2 - 2
    th1 = th + 1                   # rows per conv1 phase stream
    r2 = 2 * th + 2                # intermediate rows (incl. 1-row halo each side)
    ro = 2 * th                    # output rows per strip

    strip = x_ref[0]                                        # (TH+2, W+2, Cin_p)

    # ---- conv1 (+ReLU): 2x2 polyphase (H+W upsample folded), K-fused taps ---
    # Shared im2col: blocks ordered q = c*2 + a  (c = col shift 0..2, a = row
    # shift 0..1).  Even-col phases read L1[:, :4C], odd-col phases L1[:, 2C:].
    blocks = [strip[a:a + th1, c:c + w, :] for c in range(3) for a in range(2)]
    l1 = jnp.concatenate(blocks, axis=-1).reshape(th1 * w, 6 * cin_p)

    def conv1_phase(er, ec):
        ks = slice(0, 4 * cin_p) if ec == 0 else slice(2 * cin_p, 6 * cin_p)
        y = jnp.dot(l1[:, ks], w1f_ref[er, ec],
                    preferred_element_type=jnp.float32)
        return jnp.maximum(y, 0.0).astype(jnp.bfloat16).reshape(th1, w, cmid_p)

    # Even-output-column stream: interleave odd-row (even t) / even-row (odd t)
    # phases so buffer row t corresponds to intermediate row 2*m0 - 1 + t.
    ee = conv1_phase(0, 0)
    oe = conv1_phase(1, 0)
    me = jnp.stack([oe, ee], axis=1).reshape(r2, w, cmid_p)
    meh_ref[:, 1:w + 1, :] = me
    # Odd-output-column stream.
    eo = conv1_phase(0, 1)
    oo = conv1_phase(1, 1)
    mo = jnp.stack([oo, eo], axis=1).reshape(r2, w, cmid_p)
    moh_ref[:, 1:w + 1, :] = mo

    # Only the two halo columns conv2 actually reads need to be zero
    # (conv2's left/right zero padding); the other two are never read.
    zc = jnp.zeros((r2, 1, cmid_p), jnp.bfloat16)
    moh_ref[:, 0:1, :] = zc            # odd cols tap at k = -1
    meh_ref[:, w + 1:w + 2, :] = zc    # even cols tap at k = W

    # Zero the intermediate halo rows only at the image boundary
    # (conv2's zero padding at rows -1 and 2H of the full intermediate).
    s = pl.program_id(1)
    zrow = jnp.zeros((wp2, cmid_p), jnp.bfloat16)

    @pl.when(s == 0)
    def _():
        meh_ref[0] = zrow
        moh_ref[0] = zrow

    @pl.when(s == pl.num_programs(1) - 1)
    def _():
        meh_ref[r2 - 1] = zrow
        moh_ref[r2 - 1] = zrow

    # ---- conv2 (+ReLU): 3 column taps K-fused per (dy, col parity) ----------
    for dy in range(3):
        me_rows = meh_ref[dy:dy + ro]                       # (RO, W+2, Cmid_p)
        mo_rows = moh_ref[dy:dy + ro]
        # Block order [odd(k-1), even(k), odd(k), even(k+1)]:
        #   even output cols use L2[:, :3C], odd output cols use L2[:, C:].
        l2 = jnp.concatenate(
            [mo_rows[:, 0:w, :], me_rows[:, 1:w + 1, :],
             mo_rows[:, 1:w + 1, :], me_rows[:, 2:w + 2, :]],
            axis=-1).reshape(ro * w, 4 * cmid_p)
        w2d = w2f_ref[dy]                                   # (3*Cmid_p, Cout_s)
        de = jnp.dot(l2[:, :3 * cmid_p], w2d, preferred_element_type=jnp.float32)
        do = jnp.dot(l2[:, cmid_p:], w2d, preferred_element_type=jnp.float32)
        if dy == 0:
            acc_e_ref[...] = de
            acc_o_ref[...] = do
        else:
            acc_e_ref[...] += de
            acc_o_ref[...] += do

    ye = jnp.maximum(acc_e_ref[...], 0.0).reshape(ro, w, cout_s)
    yo = jnp.maximum(acc_o_ref[...], 0.0).reshape(ro, w, cout_s)
    o_ref[0] = jnp.concatenate([ye, yo], axis=-1).astype(o_ref.dtype)


def decoder_block_forward(xs_nchw, w1, w2, *, tile_h=None,
                          out_layout="NCHW", out_dtype=jnp.float32):
    """DecoderBlock.forward (is_deconv=False).

    xs_nchw: list of (N, C_i, H, W) arrays (concatenated along channels).
    w1: (3, 3, in_channels, middle_channels) HWIO, no bias.
    w2: (3, 3, middle_channels, out_channels) HWIO, no bias.
    Returns (N, out_channels, 2H, 2W) in out_dtype (NCHW, matching PyTorch),
    or NHWC if out_layout == "NHWC" (cheaper if the consumer accepts it).
    """
    x = jnp.concatenate(xs_nchw, axis=1)                    # (N, Cin, H, W)
    n, cin, h, w = x.shape
    assert w1.shape[:3] == (3, 3, cin), w1.shape
    cmid = w1.shape[3]
    assert w2.shape[:3] == (3, 3, cmid), w2.shape
    cout = w2.shape[3]

    cin_p = _round_up(cin, 128)
    cmid_p = _round_up(cmid, 128)
    cout_p = _round_up(cout, 128)
    # Lane-dense output only when the 128-padding is cheap (< 2x bytes).
    cout_s = cout_p if cout_p <= 2 * cout else cout

    # ---- VMEM budget / tile selection --------------------------------------
    cap = _vmem_capacity_bytes()
    vmem_limit = min(int(cap * 0.85), 100 * 1024 * 1024)
    budget = int(vmem_limit * 0.7)
    th = tile_h if tile_h is not None else _pick_tile_h(
        h, n, w, cin_p, cmid_p, cout_s, budget)
    assert h % th == 0, "tile_h must divide H"
    ns = h // th
    r2 = 2 * th + 2
    ro = 2 * th

    # ---- conv1 weights: 2x2 polyphase fold + K-fusion ----------------------
    w1p = jnp.pad(w1.astype(jnp.float32),
                  ((0, 0), (0, 0), (0, cin_p - cin), (0, cmid_p - cmid)))
    # Row fold: er=0 (even output rows) -> taps X[m-1] (dy=0), X[m] (dy=1+2);
    #           er=1 (odd  output rows) -> taps X[m] (dy=0+1), X[m+1] (dy=2).
    rowf = [[w1p[0], w1p[1] + w1p[2]],
            [w1p[0] + w1p[1], w1p[2]]]

    def _colfold(t, ec, b):          # same fold along dx for the column taps
        if ec == 0:
            return t[0] if b == 0 else t[1] + t[2]
        return (t[0] + t[1]) if b == 0 else t[2]

    # K-fused block order must match the kernel's im2col: (b-major, a-minor).
    w1f = jnp.stack([
        jnp.stack([
            jnp.concatenate([_colfold(rowf[er][0], ec, 0),
                             _colfold(rowf[er][1], ec, 0),
                             _colfold(rowf[er][0], ec, 1),
                             _colfold(rowf[er][1], ec, 1)], axis=0)
            for ec in (0, 1)], axis=0)
        for er in (0, 1)], axis=0).astype(jnp.bfloat16)     # (2,2,4*Cin_p,Cmid_p)

    # ---- conv2 weights: pad + fuse the 3 dx taps along K -------------------
    w2p = jnp.pad(w2.astype(jnp.float32),
                  ((0, 0), (0, 0), (0, cmid_p - cmid), (0, cout_s - cout)))
    w2f = w2p.reshape(3, 3 * cmid_p, cout_s).astype(jnp.bfloat16)

    # ---- input prep: NHWC bf16, zero halo ring, channel pad, row strips ----
    xh = jnp.transpose(x, (0, 2, 3, 1)).astype(jnp.bfloat16)
    xp = jnp.pad(xh, ((0, 0), (1, 1), (1, 1), (0, cin_p - cin)))
    strips = jnp.stack([xp[:, t * th: t * th + th + 2] for t in range(ns)],
                       axis=1).reshape(n * ns, th + 2, w + 2, cin_p)

    conv1_macs = n * ns * 4 * (th + 1) * w * 4 * cin_p * cmid_p
    conv2_macs = n * ns * 3 * 2 * ro * w * 3 * cmid_p * cout_s
    flops = 2 * (conv1_macs + conv2_macs)
    bytes_accessed = 2 * (n * ns * (th + 2) * (w + 2) * cin_p
                          + 16 * cin_p * cmid_p + 9 * cmid_p * cout_s
                          + n * 2 * h * w * 2 * cout_s)

    out = pl.pallas_call(
        _decoder_block_kernel,
        out_shape=jax.ShapeDtypeStruct((n, 2 * h, w, 2 * cout_s), jnp.bfloat16),
        grid=(n, ns),
        in_specs=[
            pl.BlockSpec((1, th + 2, w + 2, cin_p),
                         lambda i, s: (i * ns + s, 0, 0, 0)),
            pl.BlockSpec((2, 2, 4 * cin_p, cmid_p), lambda i, s: (0, 0, 0, 0)),
            pl.BlockSpec((3, 3 * cmid_p, cout_s), lambda i, s: (0, 0, 0)),
        ],
        out_specs=pl.BlockSpec((1, ro, w, 2 * cout_s),
                               lambda i, s: (i, s, 0, 0)),
        scratch_shapes=[
            pltpu.VMEM((r2, w + 2, cmid_p), jnp.bfloat16),  # even-col stream
            pltpu.VMEM((r2, w + 2, cmid_p), jnp.bfloat16),  # odd-col stream
            pltpu.VMEM((ro * w, cout_s), jnp.float32),      # conv2 acc (even)
            pltpu.VMEM((ro * w, cout_s), jnp.float32),      # conv2 acc (odd)
        ],
        compiler_params=pltpu.CompilerParams(
            dimension_semantics=("parallel", "parallel"),
            vmem_limit_bytes=vmem_limit),
        cost_estimate=pl.CostEstimate(flops=flops, transcendentals=0,
                                      bytes_accessed=bytes_accessed),
    )(strips, w1f, w2f)

    # (N, 2H, W, 2*Cout_s): lanes [:Cout_s] = even columns, rest = odd columns.
    out = out.reshape(n, 2 * h, w, 2, cout_s)[..., :cout]
    out = out.reshape(n, 2 * h, 2 * w, cout)                # NHWC (interleave)
    if out_layout == "NCHW":
        out = jnp.transpose(out, (0, 3, 1, 2))
    return out.astype(out_dtype)


def _reference_forward(xs_nchw, w1, w2):
    """Pure-JAX reference (lax conv) with matching bf16 operand rounding."""
    x = jnp.concatenate(xs_nchw, axis=1).astype(jnp.bfloat16)
    x = jnp.repeat(jnp.repeat(x, 2, axis=2), 2, axis=3)     # nearest upsample

    def conv(x_, w_):
        y = jax.lax.conv_general_dilated(
            x_.astype(jnp.bfloat16), w_.astype(jnp.bfloat16),
            window_strides=(1, 1), padding=((1, 1), (1, 1)),
            dimension_numbers=("NCHW", "HWIO", "NCHW"),
            preferred_element_type=jnp.float32)
        return jnp.maximum(y, 0.0)

    y1 = conv(x, w1)
    return conv(y1.astype(jnp.bfloat16), w2)


if __name__ == "__main__":
    key = jax.random.PRNGKey(0)
    k1, k2, k3, k4 = jax.random.split(key, 4)

    # Two skip tensors of 2 channels each -> in_channels = 4.
    N, H, W = 2, 16, 16
    in_channels, middle_channels, out_channels = 4, 8, 4

    x_a = jax.random.normal(k1, (N, 2, H, W), dtype=jnp.float32)
    x_b = jax.random.normal(k2, (N, 2, H, W), dtype=jnp.float32)
    w1 = (jax.random.normal(k3, (3, 3, in_channels, middle_channels),
                            dtype=jnp.float32) * 0.1)
    w2 = (jax.random.normal(k4, (3, 3, middle_channels, out_channels),
                            dtype=jnp.float32) * 0.1)

    ref = jax.block_until_ready(_reference_forward([x_a, x_b], w1, w2))

    # Multi-strip path (exercises boundary pl.when + inter-strip halos).
    out = jax.block_until_ready(
        decoder_block_forward([x_a, x_b], w1, w2, tile_h=4))
    assert out.shape == (N, out_channels, 2 * H, 2 * W), out.shape
    err = float(jnp.max(jnp.abs(out - ref)))
    # bf16 operands/output + folded-weight rounding differ slightly from the
    # reference's per-tap rounding.
    assert err < 4e-2, f"mismatch vs reference (tile_h=4): max abs err = {err}"

    # Auto (VMEM-budgeted) tile selection.
    out2 = jax.block_until_ready(decoder_block_forward([x_a, x_b], w1, w2))
    err2 = float(jnp.max(jnp.abs(out2 - ref)))
    assert err2 < 4e-2, f"mismatch vs reference (auto tile): max abs err = {err2}"

    print("KERNEL_OK")
</pallas_src>

<mosaic_0001>
module attributes {stable_mosaic.version = 11 : i64} {
  func.func @_decoder_block_kernel(%arg0: i32, %arg1: i32, %arg2: memref<1x6x18x128xbf16, #tpu.memory_space<vmem>>, %arg3: memref<2x2x512x128xbf16, #tpu.memory_space<vmem>>, %arg4: memref<3x384x4xbf16, #tpu.memory_space<vmem>>, %arg5: memref<1x8x16x8xbf16, #tpu.memory_space<vmem>>, %arg6: memref<10x18x128xbf16, #tpu.memory_space<vmem>>, %arg7: memref<10x18x128xbf16, #tpu.memory_space<vmem>>, %arg8: memref<128x4xf32, #tpu.memory_space<vmem>>, %arg9: memref<128x4xf32, #tpu.memory_space<vmem>>) attributes {dimension_semantics = [#tpu.dimension_semantics<parallel>, #tpu.dimension_semantics<parallel>], iteration_bounds = array<i64: 2, 4>, scalar_prefetch = 0 : i64, scratch_operands = 4 : i64, tpu.core_type = #tpu.core_type<tc>, window_params = [{transform_indices = @transform_0, window_bounds = array<i64: 1, 6, 18, 128>}, {pipeline_mode = #tpu.pipeline_mode<synchronous>, transform_indices = @transform_1, window_bounds = array<i64: 2, 2, 512, 128>}, {pipeline_mode = #tpu.pipeline_mode<synchronous>, transform_indices = @transform_2, window_bounds = array<i64: 3, 384, 4>}, {transform_indices = @transform_3, window_bounds = array<i64: 1, 8, 16, 8>}]} {
    %c0 = arith.constant 0 : index
    %c0_0 = arith.constant 0 : index
    %c0_1 = arith.constant 0 : index
    %c0_2 = arith.constant 0 : index
    %0 = vector.load %arg2[%c0, %c0_0, %c0_1, %c0_2] : memref<1x6x18x128xbf16, #tpu.memory_space<vmem>>, vector<1x6x18x128xbf16>
    %1 = vector.shape_cast %0 : vector<1x6x18x128xbf16> to vector<6x18x128xbf16>
    %2 = vector.extract_strided_slice %1 {offsets = [0, 0, 0], sizes = [5, 16, 128], strides = [1, 1, 1]} : vector<6x18x128xbf16> to vector<5x16x128xbf16>
    %3 = vector.extract_strided_slice %1 {offsets = [1, 0, 0], sizes = [5, 16, 128], strides = [1, 1, 1]} : vector<6x18x128xbf16> to vector<5x16x128xbf16>
    %4 = vector.extract_strided_slice %1 {offsets = [0, 1, 0], sizes = [5, 16, 128], strides = [1, 1, 1]} : vector<6x18x128xbf16> to vector<5x16x128xbf16>
    %5 = vector.extract_strided_slice %1 {offsets = [1, 1, 0], sizes = [5, 16, 128], strides = [1, 1, 1]} : vector<6x18x128xbf16> to vector<5x16x128xbf16>
    %6 = vector.extract_strided_slice %1 {offsets = [0, 2, 0], sizes = [5, 16, 128], strides = [1, 1, 1]} : vector<6x18x128xbf16> to vector<5x16x128xbf16>
    %7 = vector.extract_strided_slice %1 {offsets = [1, 2, 0], sizes = [5, 16, 128], strides = [1, 1, 1]} : vector<6x18x128xbf16> to vector<5x16x128xbf16>
    %8 = tpu.concatenate %2, %3, %4, %5, %6, %7 in 2 : vector<5x16x128xbf16>, vector<5x16x128xbf16>, vector<5x16x128xbf16>, vector<5x16x128xbf16>, vector<5x16x128xbf16>, vector<5x16x128xbf16> -> vector<5x16x768xbf16>
    %9 = vector.shape_cast %8 : vector<5x16x768xbf16> to vector<80x768xbf16>
    %10 = vector.extract_strided_slice %9 {offsets = [0, 0], sizes = [80, 512], strides = [1, 1]} : vector<80x768xbf16> to vector<80x512xbf16>
    %c0_3 = arith.constant 0 : index
    %c0_4 = arith.constant 0 : index
    %c0_5 = arith.constant 0 : index
    %c0_6 = arith.constant 0 : index
    %11 = vector.load %arg3[%c0_3, %c0_4, %c0_5, %c0_6] : memref<2x2x512x128xbf16, #tpu.memory_space<vmem>>, vector<1x1x512x128xbf16>
    %12 = vector.shape_cast %11 : vector<1x1x512x128xbf16> to vector<512x128xbf16>
    %cst = arith.constant dense<0.000000e+00> : vector<80x128xf32>
    %13 = tpu.matmul %10, %12, %cst {dimension_numbers = #tpu.dot_dimension_numbers<[1], [0], [0], [1], [0, 0, 1, 1], [], []>} : vector<80x512xbf16>, vector<512x128xbf16>, vector<80x128xf32> -> vector<80x128xf32>
    %cst_7 = arith.constant 0.000000e+00 : f32
    %14 = vector.broadcast %cst_7 : f32 to vector<80x128xf32>
    %15 = arith.maximumf %13, %14 : vector<80x128xf32>
    %16 = arith.truncf %15 : vector<80x128xf32> to vector<80x128xbf16>
    %17 = vector.shape_cast %16 : vector<80x128xbf16> to vector<5x16x128xbf16>
    %18 = vector.extract_strided_slice %9 {offsets = [0, 0], sizes = [80, 512], strides = [1, 1]} : vector<80x768xbf16> to vector<80x512xbf16>
    %c1 = arith.constant 1 : index
    %c0_8 = arith.constant 0 : index
    %c0_9 = arith.constant 0 : index
    %c0_10 = arith.constant 0 : index
    %19 = vector.load %arg3[%c1, %c0_8, %c0_9, %c0_10] : memref<2x2x512x128xbf16, #tpu.memory_space<vmem>>, vector<1x1x512x128xbf16>
    %20 = vector.shape_cast %19 : vector<1x1x512x128xbf16> to vector<512x128xbf16>
    %cst_11 = arith.constant dense<0.000000e+00> : vector<80x128xf32>
    %21 = tpu.matmul %18, %20, %cst_11 {dimension_numbers = #tpu.dot_dimension_numbers<[1], [0], [0], [1], [0, 0, 1, 1], [], []>} : vector<80x512xbf16>, vector<512x128xbf16>, vector<80x128xf32> -> vector<80x128xf32>
    %cst_12 = arith.constant 0.000000e+00 : f32
    %22 = vector.broadcast %cst_12 : f32 to vector<80x128xf32>
    %23 = arith.maximumf %21, %22 : vector<80x128xf32>
    %24 = arith.truncf %23 : vector<80x128xf32> to vector<80x128xbf16>
    %25 = vector.shape_cast %24 : vector<80x128xbf16> to vector<5x16x128xbf16>
    %26 = vector.shape_cast %25 : vector<5x16x128xbf16> to vector<5x1x16x128xbf16>
    %27 = vector.shape_cast %17 : vector<5x16x128xbf16> to vector<5x1x16x128xbf16>
    %28 = tpu.concatenate %26, %27 in 1 : vector<5x1x16x128xbf16>, vector<5x1x16x128xbf16> -> vector<5x2x16x128xbf16>
    %29 = vector.shape_cast %28 : vector<5x2x16x128xbf16> to vector<10x16x128xbf16>
    %c0_13 = arith.constant 0 : index
    %c1_14 = arith.constant 1 : index
    %c0_15 = arith.constant 0 : index
    %30 = vector.load %arg6[%c0_13, %c1_14, %c0_15] : memref<10x18x128xbf16, #tpu.memory_space<vmem>>, vector<10x16x128xbf16>
    tpu.vector_store %arg6[%c0_13, %c1_14, %c0_15], %29 {strides = array<i32>} : memref<10x18x128xbf16, #tpu.memory_space<vmem>>, vector<10x16x128xbf16>,
    %31 = vector.extract_strided_slice %9 {offsets = [0, 256], sizes = [80, 512], strides = [1, 1]} : vector<80x768xbf16> to vector<80x512xbf16>
    %c0_16 = arith.constant 0 : index
    %c1_17 = arith.constant 1 : index
    %c0_18 = arith.constant 0 : index
    %c0_19 = arith.constant 0 : index
    %32 = vector.load %arg3[%c0_16, %c1_17, %c0_18, %c0_19] : memref<2x2x512x128xbf16, #tpu.memory_space<vmem>>, vector<1x1x512x128xbf16>
    %33 = vector.shape_cast %32 : vector<1x1x512x128xbf16> to vector<512x128xbf16>
    %cst_20 = arith.constant dense<0.000000e+00> : vector<80x128xf32>
    %34 = tpu.matmul %31, %33, %cst_20 {dimension_numbers = #tpu.dot_dimension_numbers<[1], [0], [0], [1], [0, 0, 1, 1], [], []>} : vector<80x512xbf16>, vector<512x128xbf16>, vector<80x128xf32> -> vector<80x128xf32>
    %cst_21 = arith.constant 0.000000e+00 : f32
    %35 = vector.broadcast %cst_21 : f32 to vector<80x128xf32>
    %36 = arith.maximumf %34, %35 : vector<80x128xf32>
    %37 = arith.truncf %36 : vector<80x128xf32> to vector<80x128xbf16>
    %38 = vector.shape_cast %37 : vector<80x128xbf16> to vector<5x16x128xbf16>
    %39 = vector.extract_strided_slice %9 {offsets = [0, 256], sizes = [80, 512], strides = [1, 1]} : vector<80x768xbf16> to vector<80x512xbf16>
    %c1_22 = arith.constant 1 : index
    %c1_23 = arith.constant 1 : index
    %c0_24 = arith.constant 0 : index
    %c0_25 = arith.constant 0 : index
    %40 = vector.load %arg3[%c1_22, %c1_23, %c0_24, %c0_25] : memref<2x2x512x128xbf16, #tpu.memory_space<vmem>>, vector<1x1x512x128xbf16>
    %41 = vector.shape_cast %40 : vector<1x1x512x128xbf16> to vector<512x128xbf16>
    %cst_26 = arith.constant dense<0.000000e+00> : vector<80x128xf32>
    %42 = tpu.matmul %39, %41, %cst_26 {dimension_numbers = #tpu.dot_dimension_numbers<[1], [0], [0], [1], [0, 0, 1, 1], [], []>} : vector<80x512xbf16>, vector<512x128xbf16>, vector<80x128xf32> -> vector<80x128xf32>
    %cst_27 = arith.constant 0.000000e+00 : f32
    %43 = vector.broadcast %cst_27 : f32 to vector<80x128xf32>
    %44 = arith.maximumf %42, %43 : vector<80x128xf32>
    %45 = arith.truncf %44 : vector<80x128xf32> to vector<80x128xbf16>
    %46 = vector.shape_cast %45 : vector<80x128xbf16> to vector<5x16x128xbf16>
    %47 = vector.shape_cast %46 : vector<5x16x128xbf16> to vector<5x1x16x128xbf16>
    %48 = vector.shape_cast %38 : vector<5x16x128xbf16> to vector<5x1x16x128xbf16>
    %49 = tpu.concatenate %47, %48 in 1 : vector<5x1x16x128xbf16>, vector<5x1x16x128xbf16> -> vector<5x2x16x128xbf16>
    %50 = vector.shape_cast %49 : vector<5x2x16x128xbf16> to vector<10x16x128xbf16>
    %c0_28 = arith.constant 0 : index
    %c1_29 = arith.constant 1 : index
    %c0_30 = arith.constant 0 : index
    %51 = vector.load %arg7[%c0_28, %c1_29, %c0_30] : memref<10x18x128xbf16, #tpu.memory_space<vmem>>, vector<10x16x128xbf16>
    tpu.vector_store %arg7[%c0_28, %c1_29, %c0_30], %50 {strides = array<i32>} : memref<10x18x128xbf16, #tpu.memory_space<vmem>>, vector<10x16x128xbf16>,
    %cst_31 = arith.constant 0.000000e+00 : bf16
    %52 = vector.broadcast %cst_31 : bf16 to vector<10x1x128xbf16>
    %c0_32 = arith.constant 0 : index
    %c0_33 = arith.constant 0 : index
    %c0_34 = arith.constant 0 : index
    %53 = vector.load %arg7[%c0_32, %c0_33, %c0_34] : memref<10x18x128xbf16, #tpu.memory_space<vmem>>, vector<10x1x128xbf16>
    tpu.vector_store %arg7[%c0_32, %c0_33, %c0_34], %52 {strides = array<i32>} : memref<10x18x128xbf16, #tpu.memory_space<vmem>>, vector<10x1x128xbf16>,
    %c0_35 = arith.constant 0 : index
    %c17 = arith.constant 17 : index
    %c0_36 = arith.constant 0 : index
    %54 = vector.load %arg6[%c0_35, %c17, %c0_36] : memref<10x18x128xbf16, #tpu.memory_space<vmem>>, vector<10x1x128xbf16>
    tpu.vector_store %arg6[%c0_35, %c17, %c0_36], %52 {strides = array<i32>} : memref<10x18x128xbf16, #tpu.memory_space<vmem>>, vector<10x1x128xbf16>,
    %cst_37 = arith.constant 0.000000e+00 : bf16
    %55 = vector.broadcast %cst_37 : bf16 to vector<18x128xbf16>
    %c0_i32 = arith.constant 0 : i32
    %56 = arith.cmpi eq, %arg1, %c0_i32 : i32
    %57 = arith.extui %56 : i1 to i32
    %c0_i32_38 = arith.constant 0 : i32
    %58 = arith.cmpi ne, %57, %c0_i32_38 : i32
    scf.if %58 {
      %c0_102 = arith.constant 0 : index
      %c0_103 = arith.constant 0 : index
      %c0_104 = arith.constant 0 : index
      %131 = vector.load %arg6[%c0_102, %c0_103, %c0_104] : memref<10x18x128xbf16, #tpu.memory_space<vmem>>, vector<1x18x128xbf16>
      %132 = vector.shape_cast %131 : vector<1x18x128xbf16> to vector<18x128xbf16>
      %133 = vector.shape_cast %55 : vector<18x128xbf16> to vector<1x18x128xbf16>
      tpu.vector_store %arg6[%c0_102, %c0_103, %c0_104], %133 {strides = array<i32>} : memref<10x18x128xbf16, #tpu.memory_space<vmem>>, vector<1x18x128xbf16>,
      %c0_105 = arith.constant 0 : index
      %c0_106 = arith.constant 0 : index
      %c0_107 = arith.constant 0 : index
      %134 = vector.load %arg7[%c0_105, %c0_106, %c0_107] : memref<10x18x128xbf16, #tpu.memory_space<vmem>>, vector<1x18x128xbf16>
      %135 = vector.shape_cast %134 : vector<1x18x128xbf16> to vector<18x128xbf16>
      %136 = vector.shape_cast %55 : vector<18x128xbf16> to vector<1x18x128xbf16>
      tpu.vector_store %arg7[%c0_105, %c0_106, %c0_107], %136 {strides = array<i32>} : memref<10x18x128xbf16, #tpu.memory_space<vmem>>, vector<1x18x128xbf16>,
    } else {
    }
    %c3_i32 = arith.constant 3 : i32
    %59 = arith.cmpi eq, %arg1, %c3_i32 : i32
    %60 = arith.extui %59 : i1 to i32
    %c0_i32_39 = arith.constant 0 : i32
    %61 = arith.cmpi ne, %60, %c0_i32_39 : i32
    scf.if %61 {
      %c9 = arith.constant 9 : index
      %c0_102 = arith.constant 0 : index
      %c0_103 = arith.constant 0 : index
      %131 = vector.load %arg6[%c9, %c0_102, %c0_103] : memref<10x18x128xbf16, #tpu.memory_space<vmem>>, vector<1x18x128xbf16>
      %132 = vector.shape_cast %131 : vector<1x18x128xbf16> to vector<18x128xbf16>
      %133 = vector.shape_cast %55 : vector<18x128xbf16> to vector<1x18x128xbf16>
      tpu.vector_store %arg6[%c9, %c0_102, %c0_103], %133 {strides = array<i32>} : memref<10x18x128xbf16, #tpu.memory_space<vmem>>, vector<1x18x128xbf16>,
      %c9_104 = arith.constant 9 : index
      %c0_105 = arith.constant 0 : index
      %c0_106 = arith.constant 0 : index
      %134 = vector.load %arg7[%c9_104, %c0_105, %c0_106] : memref<10x18x128xbf16, #tpu.memory_space<vmem>>, vector<1x18x128xbf16>
      %135 = vector.shape_cast %134 : vector<1x18x128xbf16> to vector<18x128xbf16>
      %136 = vector.shape_cast %55 : vector<18x128xbf16> to vector<1x18x128xbf16>
      tpu.vector_store %arg7[%c9_104, %c0_105, %c0_106], %136 {strides = array<i32>} : memref<10x18x128xbf16, #tpu.memory_space<vmem>>, vector<1x18x128xbf16>,
    } else {
    }
    %c0_40 = arith.constant 0 : index
    %c0_41 = arith.constant 0 : index
    %c0_42 = arith.constant 0 : index
    %62 = vector.load %arg6[%c0_40, %c0_41, %c0_42] : memref<10x18x128xbf16, #tpu.memory_space<vmem>>, vector<8x18x128xbf16>
    %c0_43 = arith.constant 0 : index
    %c0_44 = arith.constant 0 : index
    %c0_45 = arith.constant 0 : index
    %63 = vector.load %arg7[%c0_43, %c0_44, %c0_45] : memref<10x18x128xbf16, #tpu.memory_space<vmem>>, vector<8x18x128xbf16>
    %64 = vector.extract_strided_slice %63 {offsets = [0, 0, 0], sizes = [8, 16, 128], strides = [1, 1, 1]} : vector<8x18x128xbf16> to vector<8x16x128xbf16>
    %65 = vector.extract_strided_slice %62 {offsets = [0, 1, 0], sizes = [8, 16, 128], strides = [1, 1, 1]} : vector<8x18x128xbf16> to vector<8x16x128xbf16>
    %66 = vector.extract_strided_slice %63 {offsets = [0, 1, 0], sizes = [8, 16, 128], strides = [1, 1, 1]} : vector<8x18x128xbf16> to vector<8x16x128xbf16>
    %67 = vector.extract_strided_slice %62 {offsets = [0, 2, 0], sizes = [8, 16, 128], strides = [1, 1, 1]} : vector<8x18x128xbf16> to vector<8x16x128xbf16>
    %68 = tpu.concatenate %64, %65, %66, %67 in 2 : vector<8x16x128xbf16>, vector<8x16x128xbf16>, vector<8x16x128xbf16>, vector<8x16x128xbf16> -> vector<8x16x512xbf16>
    %69 = vector.shape_cast %68 : vector<8x16x512xbf16> to vector<128x512xbf16>
    %c0_46 = arith.constant 0 : index
    %c0_47 = arith.constant 0 : index
    %c0_48 = arith.constant 0 : index
    %70 = vector.load %arg4[%c0_46, %c0_47, %c0_48] : memref<3x384x4xbf16, #tpu.memory_space<vmem>>, vector<1x384x4xbf16>
    %71 = vector.shape_cast %70 : vector<1x384x4xbf16> to vector<384x4xbf16>
    %72 = vector.extract_strided_slice %69 {offsets = [0, 0], sizes = [128, 384], strides = [1, 1]} : vector<128x512xbf16> to vector<128x384xbf16>
    %cst_49 = arith.constant dense<0.000000e+00> : vector<128x4xf32>
    %73 = tpu.matmul %72, %71, %cst_49 {dimension_numbers = #tpu.dot_dimension_numbers<[1], [0], [0], [1], [0, 0, 1, 1], [], []>} : vector<128x384xbf16>, vector<384x4xbf16>, vector<128x4xf32> -> vector<128x4xf32>
    %74 = vector.extract_strided_slice %69 {offsets = [0, 128], sizes = [128, 384], strides = [1, 1]} : vector<128x512xbf16> to vector<128x384xbf16>
    %cst_50 = arith.constant dense<0.000000e+00> : vector<128x4xf32>
    %75 = tpu.matmul %74, %71, %cst_50 {dimension_numbers = #tpu.dot_dimension_numbers<[1], [0], [0], [1], [0, 0, 1, 1], [], []>} : vector<128x384xbf16>, vector<384x4xbf16>, vector<128x4xf32> -> vector<128x4xf32>
    %c0_51 = arith.constant 0 : index
    %c0_52 = arith.constant 0 : index
    %76 = vector.load %arg8[%c0_51, %c0_52] : memref<128x4xf32, #tpu.memory_space<vmem>>, vector<128x4xf32>
    tpu.vector_store %arg8[%c0_51, %c0_52], %73 {strides = array<i32>} : memref<128x4xf32, #tpu.memory_space<vmem>>, vector<128x4xf32>,
    %c0_53 = arith.constant 0 : index
    %c0_54 = arith.constant 0 : index
    %77 = vector.load %arg9[%c0_53, %c0_54] : memref<128x4xf32, #tpu.memory_space<vmem>>, vector<128x4xf32>
    tpu.vector_store %arg9[%c0_53, %c0_54], %75 {strides = array<i32>} : memref<128x4xf32, #tpu.memory_space<vmem>>, vector<128x4xf32>,
    %c1_55 = arith.constant 1 : index
    %c0_56 = arith.constant 0 : index
    %c0_57 = arith.constant 0 : index
    %78 = vector.load %arg6[%c1_55, %c0_56, %c0_57] : memref<10x18x128xbf16, #tpu.memory_space<vmem>>, vector<8x18x128xbf16>
    %c1_58 = arith.constant 1 : index
    %c0_59 = arith.constant 0 : index
    %c0_60 = arith.constant 0 : index
    %79 = vector.load %arg7[%c1_58, %c0_59, %c0_60] : memref<10x18x128xbf16, #tpu.memory_space<vmem>>, vector<8x18x128xbf16>
    %80 = vector.extract_strided_slice %79 {offsets = [0, 0, 0], sizes = [8, 16, 128], strides = [1, 1, 1]} : vector<8x18x128xbf16> to vector<8x16x128xbf16>
    %81 = vector.extract_strided_slice %78 {offsets = [0, 1, 0], sizes = [8, 16, 128], strides = [1, 1, 1]} : vector<8x18x128xbf16> to vector<8x16x128xbf16>
    %82 = vector.extract_strided_slice %79 {offsets = [0, 1, 0], sizes = [8, 16, 128], strides = [1, 1, 1]} : vector<8x18x128xbf16> to vector<8x16x128xbf16>
    %83 = vector.extract_strided_slice %78 {offsets = [0, 2, 0], sizes = [8, 16, 128], strides = [1, 1, 1]} : vector<8x18x128xbf16> to vector<8x16x128xbf16>
    %84 = tpu.concatenate %80, %81, %82, %83 in 2 : vector<8x16x128xbf16>, vector<8x16x128xbf16>, vector<8x16x128xbf16>, vector<8x16x128xbf16> -> vector<8x16x512xbf16>
    %85 = vector.shape_cast %84 : vector<8x16x512xbf16> to vector<128x512xbf16>
    %c1_61 = arith.constant 1 : index
    %c0_62 = arith.constant 0 : index
    %c0_63 = arith.constant 0 : index
    %86 = vector.load %arg4[%c1_61, %c0_62, %c0_63] : memref<3x384x4xbf16, #tpu.memory_space<vmem>>, vector<1x384x4xbf16>
    %87 = vector.shape_cast %86 : vector<1x384x4xbf16> to vector<384x4xbf16>
    %88 = vector.extract_strided_slice %85 {offsets = [0, 0], sizes = [128, 384], strides = [1, 1]} : vector<128x512xbf16> to vector<128x384xbf16>
    %cst_64 = arith.constant dense<0.000000e+00> : vector<128x4xf32>
    %89 = tpu.matmul %88, %87, %cst_64 {dimension_numbers = #tpu.dot_dimension_numbers<[1], [0], [0], [1], [0, 0, 1, 1], [], []>} : vector<128x384xbf16>, vector<384x4xbf16>, vector<128x4xf32> -> vector<128x4xf32>
    %90 = vector.extract_strided_slice %85 {offsets = [0, 128], sizes = [128, 384], strides = [1, 1]} : vector<128x512xbf16> to vector<128x384xbf16>
    %cst_65 = arith.constant dense<0.000000e+00> : vector<128x4xf32>
    %91 = tpu.matmul %90, %87, %cst_65 {dimension_numbers = #tpu.dot_dimension_numbers<[1], [0], [0], [1], [0, 0, 1, 1], [], []>} : vector<128x384xbf16>, vector<384x4xbf16>, vector<128x4xf32> -> vector<128x4xf32>
    %c0_66 = arith.constant 0 : index
    %c0_67 = arith.constant 0 : index
    %92 = vector.load %arg8[%c0_66, %c0_67] : memref<128x4xf32, #tpu.memory_space<vmem>>, vector<128x4xf32>
    %93 = arith.addf %92, %89 : vector<128x4xf32>
    %c0_68 = arith.constant 0 : index
    %c0_69 = arith.constant 0 : index
    %94 = vector.load %arg8[%c0_68, %c0_69] : memref<128x4xf32, #tpu.memory_space<vmem>>, vector<128x4xf32>
    tpu.vector_store %arg8[%c0_68, %c0_69], %93 {strides = array<i32>} : memref<128x4xf32, #tpu.memory_space<vmem>>, vector<128x4xf32>,
    %c0_70 = arith.constant 0 : index
    %c0_71 = arith.constant 0 : index
    %95 = vector.load %arg9[%c0_70, %c0_71] : memref<128x4xf32, #tpu.memory_space<vmem>>, vector<128x4xf32>
    %96 = arith.addf %95, %91 : vector<128x4xf32>
    %c0_72 = arith.constant 0 : index
    %c0_73 = arith.constant 0 : index
    %97 = vector.load %arg9[%c0_72, %c0_73] : memref<128x4xf32, #tpu.memory_space<vmem>>, vector<128x4xf32>
    tpu.vector_store %arg9[%c0_72, %c0_73], %96 {strides = array<i32>} : memref<128x4xf32, #tpu.memory_space<vmem>>, vector<128x4xf32>,
    %c2 = arith.constant 2 : index
    %c0_74 = arith.constant 0 : index
    %c0_75 = arith.constant 0 : index
    %98 = vector.load %arg6[%c2, %c0_74, %c0_75] : memref<10x18x128xbf16, #tpu.memory_space<vmem>>, vector<8x18x128xbf16>
    %c2_76 = arith.constant 2 : index
    %c0_77 = arith.constant 0 : index
    %c0_78 = arith.constant 0 : index
    %99 = vector.load %arg7[%c2_76, %c0_77, %c0_78] : memref<10x18x128xbf16, #tpu.memory_space<vmem>>, vector<8x18x128xbf16>
    %100 = vector.extract_strided_slice %99 {offsets = [0, 0, 0], sizes = [8, 16, 128], strides = [1, 1, 1]} : vector<8x18x128xbf16> to vector<8x16x128xbf16>
    %101 = vector.extract_strided_slice %98 {offsets = [0, 1, 0], sizes = [8, 16, 128], strides = [1, 1, 1]} : vector<8x18x128xbf16> to vector<8x16x128xbf16>
    %102 = vector.extract_strided_slice %99 {offsets = [0, 1, 0], sizes = [8, 16, 128], strides = [1, 1, 1]} : vector<8x18x128xbf16> to vector<8x16x128xbf16>
    %103 = vector.extract_strided_slice %98 {offsets = [0, 2, 0], sizes = [8, 16, 128], strides = [1, 1, 1]} : vector<8x18x128xbf16> to vector<8x16x128xbf16>
    %104 = tpu.concatenate %100, %101, %102, %103 in 2 : vector<8x16x128xbf16>, vector<8x16x128xbf16>, vector<8x16x128xbf16>, vector<8x16x128xbf16> -> vector<8x16x512xbf16>
    %105 = vector.shape_cast %104 : vector<8x16x512xbf16> to vector<128x512xbf16>
    %c2_79 = arith.constant 2 : index
    %c0_80 = arith.constant 0 : index
    %c0_81 = arith.constant 0 : index
    %106 = vector.load %arg4[%c2_79, %c0_80, %c0_81] : memref<3x384x4xbf16, #tpu.memory_space<vmem>>, vector<1x384x4xbf16>
    %107 = vector.shape_cast %106 : vector<1x384x4xbf16> to vector<384x4xbf16>
    %108 = vector.extract_strided_slice %105 {offsets = [0, 0], sizes = [128, 384], strides = [1, 1]} : vector<128x512xbf16> to vector<128x384xbf16>
    %cst_82 = arith.constant dense<0.000000e+00> : vector<128x4xf32>
    %109 = tpu.matmul %108, %107, %cst_82 {dimension_numbers = #tpu.dot_dimension_numbers<[1], [0], [0], [1], [0, 0, 1, 1], [], []>} : vector<128x384xbf16>, vector<384x4xbf16>, vector<128x4xf32> -> vector<128x4xf32>
    %110 = vector.extract_strided_slice %105 {offsets = [0, 128], sizes = [128, 384], strides = [1, 1]} : vector<128x512xbf16> to vector<128x384xbf16>
    %cst_83 = arith.constant dense<0.000000e+00> : vector<128x4xf32>
    %111 = tpu.matmul %110, %107, %cst_83 {dimension_numbers = #tpu.dot_dimension_numbers<[1], [0], [0], [1], [0, 0, 1, 1], [], []>} : vector<128x384xbf16>, vector<384x4xbf16>, vector<128x4xf32> -> vector<128x4xf32>
    %c0_84 = arith.constant 0 : index
    %c0_85 = arith.constant 0 : index
    %112 = vector.load %arg8[%c0_84, %c0_85] : memref<128x4xf32, #tpu.memory_space<vmem>>, vector<128x4xf32>
    %113 = arith.addf %112, %109 : vector<128x4xf32>
    %c0_86 = arith.constant 0 : index
    %c0_87 = arith.constant 0 : index
    %114 = vector.load %arg8[%c0_86, %c0_87] : memref<128x4xf32, #tpu.memory_space<vmem>>, vector<128x4xf32>
    tpu.vector_store %arg8[%c0_86, %c0_87], %113 {strides = array<i32>} : memref<128x4xf32, #tpu.memory_space<vmem>>, vector<128x4xf32>,
    %c0_88 = arith.constant 0 : index
    %c0_89 = arith.constant 0 : index
    %115 = vector.load %arg9[%c0_88, %c0_89] : memref<128x4xf32, #tpu.memory_space<vmem>>, vector<128x4xf32>
    %116 = arith.addf %115, %111 : vector<128x4xf32>
    %c0_90 = arith.constant 0 : index
    %c0_91 = arith.constant 0 : index
    %117 = vector.load %arg9[%c0_90, %c0_91] : memref<128x4xf32, #tpu.memory_space<vmem>>, vector<128x4xf32>
    tpu.vector_store %arg9[%c0_90, %c0_91], %116 {strides = array<i32>} : memref<128x4xf32, #tpu.memory_space<vmem>>, vector<128x4xf32>,
    %c0_92 = arith.constant 0 : index
    %c0_93 = arith.constant 0 : index
    %118 = vector.load %arg8[%c0_92, %c0_93] : memref<128x4xf32, #tpu.memory_space<vmem>>, vector<128x4xf32>
    %cst_94 = arith.constant 0.000000e+00 : f32
    %119 = vector.broadcast %cst_94 : f32 to vector<128x4xf32>
    %120 = arith.maximumf %118, %119 : vector<128x4xf32>
    %121 = vector.shape_cast %120 : vector<128x4xf32> to vector<8x16x4xf32>
    %c0_95 = arith.constant 0 : index
    %c0_96 = arith.constant 0 : index
    %122 = vector.load %arg9[%c0_95, %c0_96] : memref<128x4xf32, #tpu.memory_space<vmem>>, vector<128x4xf32>
    %cst_97 = arith.constant 0.000000e+00 : f32
    %123 = vector.broadcast %cst_97 : f32 to vector<128x4xf32>
    %124 = arith.maximumf %122, %123 : vector<128x4xf32>
    %125 = vector.shape_cast %124 : vector<128x4xf32> to vector<8x16x4xf32>
    %126 = tpu.concatenate %121, %125 in 2 : vector<8x16x4xf32>, vector<8x16x4xf32> -> vector<8x16x8xf32>
    %127 = arith.truncf %126 : vector<8x16x8xf32> to vector<8x16x8xbf16>
    %c0_98 = arith.constant 0 : index
    %c0_99 = arith.constant 0 : index
    %c0_100 = arith.constant 0 : index
    %c0_101 = arith.constant 0 : index
    %128 = vector.load %arg5[%c0_98, %c0_99, %c0_100, %c0_101] : memref<1x8x16x8xbf16, #tpu.memory_space<vmem>>, vector<1x8x16x8xbf16>
    %129 = vector.shape_cast %128 : vector<1x8x16x8xbf16> to vector<8x16x8xbf16>
    %130 = vector.shape_cast %127 : vector<8x16x8xbf16> to vector<1x8x16x8xbf16>
    tpu.vector_store %arg5[%c0_98, %c0_99, %c0_100, %c0_101], %130 {strides = array<i32>} : memref<1x8x16x8xbf16, #tpu.memory_space<vmem>>, vector<1x8x16x8xbf16>,
    return
  }
  func.func @transform_0(%arg0: i32, %arg1: i32) -> (i32, i32, i32, i32) {
    %c4_i32 = arith.constant 4 : i32
    %0 = arith.muli %arg0, %c4_i32 : i32
    %1 = arith.addi %0, %arg1 : i32
    %c0_i32 = arith.constant 0 : i32
    %c0_i32_0 = arith.constant 0 : i32
    %c0_i32_1 = arith.constant 0 : i32
    %c0_i32_2 = arith.constant 0 : i32
    return %1, %c0_i32, %c0_i32_0, %c0_i32_1 : i32, i32, i32, i32
  }
  func.func @transform_1(%arg0: i32, %arg1: i32) -> (i32, i32, i32, i32) {
    %c0_i32 = arith.constant 0 : i32
    %c0_i32_0 = arith.constant 0 : i32
    %c0_i32_1 = arith.constant 0 : i32
    %c0_i32_2 = arith.constant 0 : i32
    %c0_i32_3 = arith.constant 0 : i32
    return %c0_i32, %c0_i32_0, %c0_i32_1, %c0_i32_2 : i32, i32, i32, i32
  }
  func.func @transform_2(%arg0: i32, %arg1: i32) -> (i32, i32, i32) {
    %c0_i32 = arith.constant 0 : i32
    %c0_i32_0 = arith.constant 0 : i32
    %c0_i32_1 = arith.constant 0 : i32
    %c0_i32_2 = arith.constant 0 : i32
    return %c0_i32, %c0_i32_0, %c0_i32_1 : i32, i32, i32
  }
  func.func @transform_3(%arg0: i32, %arg1: i32) -> (i32, i32, i32, i32) {
    %c0_i32 = arith.constant 0 : i32
    %c0_i32_0 = arith.constant 0 : i32
    %c0_i32_1 = arith.constant 0 : i32
    return %arg0, %arg1, %c0_i32, %c0_i32_0 : i32, i32, i32, i32
  }
}

</mosaic_0001>

<llo_original>
// kernel: tpu_custom_call.1
$region0: #{tpu_custom_call.1}
  #allocation0 [shape = 'u32[]', space=smem, size = 0x4, offset = 0x4, fixed_abs, tag = 'smem constant byte address 0x4 - core index']
  #allocation1 [shape = 'u32[144,128]{1,0:T(1,128)}', space=vmem, size = 0x12000, scoped, tag = 'internal scratch']
  #allocation2 [shape = 'bf16[10,18,128]{2,1,0:T(8,128)(2,1)}', space=vmem, size = 0xf000, scoped, tag = 'scratch operand']
  #allocation3 [shape = 'bf16[10,18,128]{2,1,0:T(8,128)(2,1)}', space=vmem, size = 0xf000, scoped, tag = 'scratch operand']
  #allocation4 [shape = 'f32[128,4]{1,0:T(8,128)}', space=vmem, size = 0x10000, scoped, tag = 'scratch operand']
  #allocation5 [shape = 'f32[128,4]{1,0:T(8,128)}', space=vmem, size = 0x10000, scoped, tag = 'scratch operand']
  %s0 = inlined_call_operand.vmem [shape: bf16[8,6,18,128], index: 0, kind: input, shape index: {}]
  %s1 = inlined_call_operand.vmem [shape: bf16[2,2,512,128], index: 1, kind: input, shape index: {}]
  %s2 = inlined_call_operand.vmem [shape: bf16[3,384,4], index: 2, kind: input, shape index: {}]
  %s3 = inlined_call_operand.vmem [shape: bf16[2,32,16,8], index: 3, kind: output, shape index: {}]
  %s4 = sld [smem:[#allocation0]]
  $region53: #{tpu_custom_call.1} parent=0
    _
  %s6 = ssub.s32 1, %s4
  %s7 = scalar_select 0, %s6, %s4
  loop: start=0, step=1, limit=10
  $region2: #{tpu_custom_call.1} parent=0 // loop_pre_header
    _
  $region3: #{tpu_custom_call.1} parent=0 // loop_header
    %s9 = sphi 0, %s13
    %p10 = scmp.ge.s32.totalorder %s9, 10
    %s16 = sphi 0, %s28
    %s17 = sphi 0, %s24
    %s18 = sphi 0, %s16
    %s19 = sphi 0, %s17
    %s20 = sphi 0, %s18
    %s21 = sphi 0, %s19
    %s35 = sphi 0, %s37
    %s38 = sphi 0, %s35
    %s39 = sphi 0, %s38
    %s55 = sphi 0, %s39
    %s59 = sphi 0, %s59
    %s61 = sphi 0, %s59
    %s62 = sphi 0, %s61
    %s76 = sphi 0, %s62
    %s80 = sphi 0, %s80
    %s82 = sphi 0, %s80
    %s83 = sphi 0, %s82
    %s97 = sphi 0, %s83
    %s105 = sphi 0, %s107
    %s108 = sphi 0, %s105
    %s109 = sphi 0, %s108
    %s125 = sphi 0, %s109
  $region4: #{tpu_custom_call.1} parent=0 // loop_header_branch
    %12 = sbr.rel (%p10) target = $region8
  $region5: #{tpu_custom_call.1} parent=0 // loop_body
    %s14 = ssub.s32 %s9, 1
    %s15 = ssub.s32 %s9, 2
    %s22 = sadd.s32 1, %s17
    %p23 = scmp.ge.s32.totalorder %s22, 4
    %s24 = scalar_select %p23, 0, %s22
    %s25 = sadd.s32 1, %s16
    %s26 = scalar_select %p23, %s25, %s16
    %p27 = scmp.ge.s32.totalorder %s26, 2
    %s28 = scalar_select %p27, 0, %s26
    %s29 = smul.u32 %s16, 4
    %s30 = sadd.s32 %s29, %s17
    %s31 = smul.u32 %s28, 4
    %s32 = sadd.s32 %s31, %s24
    %s33 = ssub.s32 %s30, %s32
    %p34 = scmp.eq.s32.totalorder %s33, 0
    %s36 = sadd.s32 %s35, 1
    %s37 = scalar_select %p34, %s35, %s36
    %p40 = pneg %p34
    %p41 = scmp.eq.s32.totalorder %s9, 7
    %p42 = por %p40, %p41
    %p43 = scmp.ne.s32.totalorder %s35, %s38
    %p44 = scmp.eq.s32.totalorder %s9, 0
    %p45 = por %p43, %p44
    %p46 = scmp.ne.s32.totalorder %s35, %s38
    %p47 = scmp.eq.s32.totalorder %s14, 7
    %p48 = por %p46, %p47
    %p49 = scmp.ne.s32.totalorder %s38, %s39
    %p50 = scmp.eq.s32.totalorder %s14, 0
    %p51 = por %p49, %p50
    %p52 = scmp.ne.s32.totalorder %s38, %s39
    %p53 = scmp.eq.s32.totalorder %s15, 7
    %p54 = por %p52, %p53
    %p56 = scmp.ne.s32.totalorder %s39, %s55
    %p57 = scmp.eq.s32.totalorder %s15, 0
    %p58 = por %p56, %p57
    %s60 = sadd.s32 %s59, 1
    %p63 = scmp.eq.s32.totalorder %s9, 7
    %p64 = scmp.ne.s32.totalorder %s59, %s61
    %p65 = scmp.eq.s32.totalorder %s9, 0
    %p66 = por %p64, %p65
    %p67 = scmp.ne.s32.totalorder %s59, %s61
    %p68 = scmp.eq.s32.totalorder %s14, 7
    %p69 = por %p67, %p68
    %p70 = scmp.ne.s32.totalorder %s61, %s62
    %p71 = scmp.eq.s32.totalorder %s14, 0
    %p72 = por %p70, %p71
    %p73 = scmp.ne.s32.totalorder %s61, %s62
    %p74 = scmp.eq.s32.totalorder %s15, 7
    %p75 = por %p73, %p74
    %p77 = scmp.ne.s32.totalorder %s62, %s76
    %p78 = scmp.eq.s32.totalorder %s15, 0
    %p79 = por %p77, %p78
    %s81 = sadd.s32 %s80, 1
    %p84 = scmp.eq.s32.totalorder %s9, 7
    %p85 = scmp.ne.s32.totalorder %s80, %s82
    %p86 = scmp.eq.s32.totalorder %s9, 0
    %p87 = por %p85, %p86
    %p88 = scmp.ne.s32.totalorder %s80, %s82
    %p89 = scmp.eq.s32.totalorder %s14, 7
    %p90 = por %p88, %p89
    %p91 = scmp.ne.s32.totalorder %s82, %s83
    %p92 = scmp.eq.s32.totalorder %s14, 0
    %p93 = por %p91, %p92
    %p94 = scmp.ne.s32.totalorder %s82, %s83
    %p95 = scmp.eq.s32.totalorder %s15, 7
    %p96 = por %p94, %p95
    %p98 = scmp.ne.s32.totalorder %s83, %s97
    %p99 = scmp.eq.s32.totalorder %s15, 0
    %p100 = por %p98, %p99
    %s101 = ssub.s32 %s16, %s28
    %s102 = ssub.s32 %s17, %s24
    %s103 = sor.u32 %s101, %s102
    %p104 = scmp.eq.s32.totalorder %s103, 0
    %s106 = sadd.s32 %s105, 1
    %s107 = scalar_select %p104, %s105, %s106
    %p110 = pneg %p104
    %p111 = scmp.eq.s32.totalorder %s9, 7
    %p112 = por %p110, %p111
    %p113 = scmp.ne.s32.totalorder %s105, %s108
    %p114 = scmp.eq.s32.totalorder %s9, 0
    %p115 = por %p113, %p114
    %p116 = scmp.ne.s32.totalorder %s105, %s108
    %p117 = scmp.eq.s32.totalorder %s14, 7
    %p118 = por %p116, %p117
    %p119 = scmp.ne.s32.totalorder %s108, %s109
    %p120 = scmp.eq.s32.totalorder %s14, 0
    %p121 = por %p119, %p120
    %p122 = scmp.ne.s32.totalorder %s108, %s109
    %p123 = scmp.eq.s32.totalorder %s15, 7
    %p124 = por %p122, %p123
    %p126 = scmp.ne.s32.totalorder %s109, %s125
    %p127 = scmp.eq.s32.totalorder %s15, 0
    %p128 = por %p126, %p127
    %p129 = scmp.le.s32.totalorder 1, %s9
    %p130 = scmp.lt.s32.totalorder %s9, 9
    %p131 = pnand %p129, %p130
    %p132 = pneg %p131
    // Predicated region
    $region9: #{tpu_custom_call.1} parent=5 // pred_check
      _
    $region10: #{tpu_custom_call.1} parent=5 // pred_check_branch
      %134 = sbr.rel (%p131) target = $region12
    $region11: #{tpu_custom_call.1} parent=5 // pred_region
      %s135 = ssub.s32 %s9, 1
      // Predicated region
      $region13: #{tpu_custom_call.1} parent=11 // pred_check
        %p136 = pneg %p72
      $region14: #{tpu_custom_call.1} parent=11 // pred_check_branch
        %138 = sbr.rel (%p136) target = $region16
      $region15: #{tpu_custom_call.1} parent=11 // pred_region
        _
      $region16: #{tpu_custom_call.1} parent=11 // pred_fallthru
        _
      // Predicated region
      $region17: #{tpu_custom_call.1} parent=11 // pred_check
        %p139 = pneg %p93
      $region18: #{tpu_custom_call.1} parent=11 // pred_check_branch
        %141 = sbr.rel (%p139) target = $region20
      $region19: #{tpu_custom_call.1} parent=11 // pred_region
        _
      $region20: #{tpu_custom_call.1} parent=11 // pred_fallthru
        _
    $region12: #{tpu_custom_call.1} parent=5 // pred_fallthru
      _
    %p142 = scmp.lt.s32.totalorder %s9, 8
    // Predicated region
    $region21: #{tpu_custom_call.1} parent=5 // pred_check
      %p143 = pneg %p142
    $region22: #{tpu_custom_call.1} parent=5 // pred_check_branch
      %145 = sbr.rel (%p143) target = $region24
    $region23: #{tpu_custom_call.1} parent=5 // pred_region
      // Predicated region
      $region25: #{tpu_custom_call.1} parent=23 // pred_check
        %p146 = pneg %p45
      $region26: #{tpu_custom_call.1} parent=23 // pred_check_branch
        %148 = sbr.rel (%p146) target = $region28
      $region27: #{tpu_custom_call.1} parent=23 // pred_region
        %s149 = smul.u32 %s16, 4
        %s150 = sadd.s32 %s149, %s17
        %p151 = scmp.lt.s32.totalorder %s150, 7
        %s152 = scalar_select %p151, %s150, 7
        %s153 = smul.addr %s152, 18
        %s154 = smul.addr %s153, 4
        %s155 = scalar_lea.vmem %s0, %s154
        %s156 = smul.u32 %s16, 4
        %s157 = sadd.s32 %s156, %s17
      $region28: #{tpu_custom_call.1} parent=23 // pred_fallthru
        _
    $region24: #{tpu_custom_call.1} parent=5 // pred_fallthru
      _
    %p158 = scmp.le.s32.totalorder 1, %s9
    %p159 = scmp.lt.s32.totalorder %s9, 9
    %p160 = pnand %p158, %p159
    %p161 = pneg %p160
    // Predicated region
    $region29: #{tpu_custom_call.1} parent=5 // pred_check
      _
    $region30: #{tpu_custom_call.1} parent=5 // pred_check_branch
      %163 = sbr.rel (%p160) target = $region32
    $region31: #{tpu_custom_call.1} parent=5 // pred_region
      %s164 = ssub.s32 %s9, 1
      %s165 = smul.u32 %s18, 4
      %s166 = sadd.s32 %s165, %s19
      %p167 = scmp.lt.s32.totalorder %s166, 7
      %s168 = scalar_select %p167, %s166, 7
      %s169 = smul.addr %s168, 18
      %s170 = smul.addr %s169, 4
      %s171 = scalar_lea.vmem %s0, %s170
      %p172 = pneg %p51
      %p173 = pneg %p48
      %p174 = pneg %p72
      %p175 = pneg %p69
      %p176 = pneg %p93
      %p177 = pneg %p90
      %p178 = pneg %p121
      %p179 = pneg %p118
      %s180 = smul.u32 8, %s19
      %p181 = scmp.lt.s32.totalorder %s18, 1
      %s182 = scalar_select %p181, %s18, 1
      %p183 = scmp.lt.s32.totalorder %s180, 31
      %s184 = scalar_select %p183, %s180, 31
      %s185 = smul.addr %s184, 2
      %s186 = smul.addr %s182, 64
      %s187 = sadd.s32 %s185, %s186
      %s188 = smul.addr %s187, 4
      %s189 = scalar_lea.vmem %s3, %s188
      %s190 = smul.u32 %s18, 4
      %s191 = sadd.s32 %s190, %s19
      %p192 = scmp.lt.s32.totalorder %s191, 7
      %s193 = scalar_select %p192, %s191, 7
      %s194 = smul.addr %s193, 18
      %s195 = smul.addr %s194, 4
      %s196 = scalar_lea.vmem %s0, %s195
      %s197 = smul.u32 %s18, 4
      %s198 = sadd.s32 %s197, %s19
      %s199 = smul.u32 8, %s19
      %p200 = scmp.lt.s32.totalorder %s18, 1
      %s201 = scalar_select %p200, %s18, 1
      %p202 = scmp.lt.s32.totalorder %s199, 31
      %s203 = scalar_select %p202, %s199, 31
      %s204 = smul.addr %s203, 2
      %s205 = smul.addr %s201, 64
      %s206 = sadd.s32 %s204, %s205
      %s207 = smul.addr %s206, 4
      %s208 = scalar_lea.vmem %s3, %s207
      %s209 = smul.u32 8, %s19
      %v211 = vld [vmem:[%s196] sm:$0xf]
      %v212 = vld [vmem:[%s196 + $0x4] sm:$0xf]
      %v213 = vld [vmem:[%s196 + $0x8] sm:$0x1]
      %v214 = vld [vmem:[%s196 + $0xc] sm:$0xf]
      %v215 = vld [vmem:[%s196 + $0x10] sm:$0xf]
      %v216 = vld [vmem:[%s196 + $0x14] sm:$0x1]
      %v217 = vld [vmem:[%s196 + $0x18] sm:$0xf]
      %v218 = vld [vmem:[%s196 + $0x1c] sm:$0xf]
      %v219 = vld [vmem:[%s196 + $0x20] sm:$0x1]
      %v220 = vld [vmem:[%s196 + $0x24] sm:$0xf]
      %v221 = vld [vmem:[%s196 + $0x28] sm:$0xf]
      %v222 = vld [vmem:[%s196 + $0x2c] sm:$0x1]
      %v223 = vld [vmem:[%s196 + $0x30] sm:$0xf]
      %v224 = vld [vmem:[%s196 + $0x34] sm:$0xf]
      %v225 = vld [vmem:[%s196 + $0x38] sm:$0x1]
      %v226 = vld [vmem:[%s196 + $0x3c] sm:$0xf]
      %v227 = vld [vmem:[%s196 + $0x40] sm:$0xf]
      %v228 = vld [vmem:[%s196 + $0x44] sm:$0x1]
      %v239 = vunpack.c.l.b16 %v211
      %v240 = vunpack.c.l.b16 %v212
      %v241 = vunpack.c.l.b16 %v214
      %v242 = vunpack.c.l.b16 %v215
      %v243 = vunpack.c.l.b16 %v217
      %v244 = vunpack.c.l.b16 %v218
      %v245 = vunpack.c.l.b16 %v220
      %v246 = vunpack.c.l.b16 %v221
      %v247 = vunpack.c.l.b16 %v223
      %v248 = vunpack.c.l.b16 %v224
      %v249 = vpack.c.b16 %v240, %v239
      %v250 = vpack.c.b16 %v242, %v241
      %v251 = vpack.c.b16 %v244, %v243
      %v252 = vpack.c.b16 %v246, %v245
      %v253 = vpack.c.b16 %v248, %v247
      %v261 = vunpack.c.l.b16 %v226
      %v262 = vunpack.c.l.b16 %v227
      %v263 = vpack.c.b16 %v262, %v261
      %v270 = vunpack.c.l.b16 %v213
      %v271 = vunpack.c.l.b16 %v216
      %v272 = vunpack.c.l.b16 %v219
      %v273 = vunpack.c.l.b16 %v222
      %v274 = vunpack.c.l.b16 %v225
      %v275 = vpack.c.b16 %v270, %v270
      %v276 = vpack.c.b16 %v271, %v271
      %v277 = vpack.c.b16 %v272, %v272
      %v278 = vpack.c.b16 %v273, %v273
      %v279 = vpack.c.b16 %v274, %v274
      %vm280 = vsmask.f32 7424
      %v282 = vshrl.u32 %v249, 16
      %v284 = vshll.u32 %v249, 16
      %v286 = vrot.slane %v284, 1
      %v287 = vor.u32 %v282, %v286
      %v289 = vshll.u32 %v275, 16
      %v291 = vrot.slane %v289, 1
      %v292 = vsel %vm280, %v287, %v291
      %v294 = vshrl.u32 %v250, 16
      %v296 = vshll.u32 %v250, 16
      %v298 = vrot.slane %v296, 1
      %v299 = vor.u32 %v294, %v298
      %v301 = vshll.u32 %v276, 16
      %v303 = vrot.slane %v301, 1
      %v304 = vsel %vm280, %v299, %v303
      %v306 = vshrl.u32 %v251, 16
      %v308 = vshll.u32 %v251, 16
      %v310 = vrot.slane %v308, 1
      %v311 = vor.u32 %v306, %v310
      %v313 = vshll.u32 %v277, 16
      %v315 = vrot.slane %v313, 1
      %v316 = vsel %vm280, %v311, %v315
      %v318 = vshrl.u32 %v252, 16
      %v320 = vshll.u32 %v252, 16
      %v322 = vrot.slane %v320, 1
      %v323 = vor.u32 %v318, %v322
      %v325 = vshll.u32 %v278, 16
      %v327 = vrot.slane %v325, 1
      %v328 = vsel %vm280, %v323, %v327
      %v330 = vshrl.u32 %v253, 16
      %v332 = vshll.u32 %v253, 16
      %v334 = vrot.slane %v332, 1
      %v335 = vor.u32 %v330, %v334
      %v337 = vshll.u32 %v279, 16
      %v339 = vrot.slane %v337, 1
      %v340 = vsel %vm280, %v335, %v339
      %v347 = vunpack.c.l.b16 %v228
      %v348 = vpack.c.b16 %v347, %v347
      %v350 = vshrl.u32 %v263, 16
      %v352 = vshll.u32 %v263, 16
      %v354 = vrot.slane %v352, 1
      %v355 = vor.u32 %v350, %v354
      %v357 = vshll.u32 %v348, 16
      %v359 = vrot.slane %v357, 1
      %v360 = vsel %vm280, %v355, %v359
      %vm362 = vcmask 1046528
      %v363 = vrot.slane %v249, 1
      %v364 = vrot.slane %v275, 1
      %v365 = vsel %vm362, %v363, %v364
      %v366 = vrot.slane %v250, 1
      %v367 = vrot.slane %v276, 1
      %v368 = vsel %vm362, %v366, %v367
      %v369 = vrot.slane %v251, 1
      %v370 = vrot.slane %v277, 1
      %v371 = vsel %vm362, %v369, %v370
      %v372 = vrot.slane %v252, 1
      %v373 = vrot.slane %v278, 1
      %v374 = vsel %vm362, %v372, %v373
      %v375 = vrot.slane %v253, 1
      %v376 = vrot.slane %v279, 1
      %v377 = vsel %vm362, %v375, %v376
      %v383 = vrot.slane %v263, 1
      %v384 = vrot.slane %v348, 1
      %v385 = vsel %vm362, %v383, %v384
      %v387 = vld [vmem:[%s1] sm:$0xf]
      %v388 = vld [vmem:[%s1 + $0x4] sm:$0xf]
      %v389 = vld [vmem:[%s1 + $0x8] sm:$0xf]
      %v390 = vld [vmem:[%s1 + $0xc] sm:$0xf]
      %v391 = vld [vmem:[%s1 + $0x10] sm:$0xf]
      %v392 = vld [vmem:[%s1 + $0x14] sm:$0xf]
      %v393 = vld [vmem:[%s1 + $0x18] sm:$0xf]
      %v394 = vld [vmem:[%s1 + $0x1c] sm:$0xf]
      %v395 = vld [vmem:[%s1 + $0x20] sm:$0xf]
      %v396 = vld [vmem:[%s1 + $0x24] sm:$0xf]
      %v397 = vld [vmem:[%s1 + $0x28] sm:$0xf]
      %v398 = vld [vmem:[%s1 + $0x2c] sm:$0xf]
      %v399 = vld [vmem:[%s1 + $0x30] sm:$0xf]
      %v400 = vld [vmem:[%s1 + $0x34] sm:$0xf]
      %v401 = vld [vmem:[%s1 + $0x38] sm:$0xf]
      %v402 = vld [vmem:[%s1 + $0x3c] sm:$0xf]
      %v403 = vld [vmem:[%s1 + $0x40] sm:$0xf]
      %v404 = vld [vmem:[%s1 + $0x44] sm:$0xf]
      %v405 = vld [vmem:[%s1 + $0x48] sm:$0xf]
      %v406 = vld [vmem:[%s1 + $0x4c] sm:$0xf]
      %v407 = vld [vmem:[%s1 + $0x50] sm:$0xf]
      %v408 = vld [vmem:[%s1 + $0x54] sm:$0xf]
      %v409 = vld [vmem:[%s1 + $0x58] sm:$0xf]
      %v410 = vld [vmem:[%s1 + $0x5c] sm:$0xf]
      %v411 = vld [vmem:[%s1 + $0x60] sm:$0xf]
      %v412 = vld [vmem:[%s1 + $0x64] sm:$0xf]
      %v413 = vld [vmem:[%s1 + $0x68] sm:$0xf]
      %v414 = vld [vmem:[%s1 + $0x6c] sm:$0xf]
      %v415 = vld [vmem:[%s1 + $0x70] sm:$0xf]
      %v416 = vld [vmem:[%s1 + $0x74] sm:$0xf]
      %v417 = vld [vmem:[%s1 + $0x78] sm:$0xf]
      %v418 = vld [vmem:[%s1 + $0x7c] sm:$0xf]
      %v419 = vld [vmem:[%s1 + $0x80] sm:$0xf]
      %v420 = vld [vmem:[%s1 + $0x84] sm:$0xf]
      %v421 = vld [vmem:[%s1 + $0x88] sm:$0xf]
      %v422 = vld [vmem:[%s1 + $0x8c] sm:$0xf]
      %v423 = vld [vmem:[%s1 + $0x90] sm:$0xf]
      %v424 = vld [vmem:[%s1 + $0x94] sm:$0xf]
      %v425 = vld [vmem:[%s1 + $0x98] sm:$0xf]
      %v426 = vld [vmem:[%s1 + $0x9c] sm:$0xf]
      %v427 = vld [vmem:[%s1 + $0xa0] sm:$0xf]
      %v428 = vld [vmem:[%s1 + $0xa4] sm:$0xf]
      %v429 = vld [vmem:[%s1 + $0xa8] sm:$0xf]
      %v430 = vld [vmem:[%s1 + $0xac] sm:$0xf]
      %v431 = vld [vmem:[%s1 + $0xb0] sm:$0xf]
      %v432 = vld [vmem:[%s1 + $0xb4] sm:$0xf]
      %v433 = vld [vmem:[%s1 + $0xb8] sm:$0xf]
      %v434 = vld [vmem:[%s1 + $0xbc] sm:$0xf]
      %v435 = vld [vmem:[%s1 + $0xc0] sm:$0xf]
      %v436 = vld [vmem:[%s1 + $0xc4] sm:$0xf]
      %v437 = vld [vmem:[%s1 + $0xc8] sm:$0xf]
      %v438 = vld [vmem:[%s1 + $0xcc] sm:$0xf]
      %v439 = vld [vmem:[%s1 + $0xd0] sm:$0xf]
      %v440 = vld [vmem:[%s1 + $0xd4] sm:$0xf]
      %v441 = vld [vmem:[%s1 + $0xd8] sm:$0xf]
      %v442 = vld [vmem:[%s1 + $0xdc] sm:$0xf]
      %v443 = vld [vmem:[%s1 + $0xe0] sm:$0xf]
      %v444 = vld [vmem:[%s1 + $0xe4] sm:$0xf]
      %v445 = vld [vmem:[%s1 + $0xe8] sm:$0xf]
      %v446 = vld [vmem:[%s1 + $0xec] sm:$0xf]
      %v447 = vld [vmem:[%s1 + $0xf0] sm:$0xf]
      %v448 = vld [vmem:[%s1 + $0xf4] sm:$0xf]
      %v449 = vld [vmem:[%s1 + $0xf8] sm:$0xf]
      %v450 = vld [vmem:[%s1 + $0xfc] sm:$0xf]
      %v515 = vunpack.c.l.b16 %v387
      %v516 = vunpack.c.l.b16 %v388
      %v517 = vunpack.c.l.b16 %v389
      %v518 = vunpack.c.l.b16 %v390
      %v519 = vunpack.c.l.b16 %v391
      %v520 = vunpack.c.l.b16 %v392
      %v521 = vunpack.c.l.b16 %v393
      %v522 = vunpack.c.l.b16 %v394
      %v523 = vunpack.c.l.b16 %v395
      %v524 = vunpack.c.l.b16 %v396
      %v525 = vunpack.c.l.b16 %v397
      %v526 = vunpack.c.l.b16 %v398
      %v527 = vunpack.c.l.b16 %v399
      %v528 = vunpack.c.l.b16 %v400
      %v529 = vunpack.c.l.b16 %v401
      %v530 = vunpack.c.l.b16 %v402
      %v531 = vunpack.c.l.b16 %v403
      %v532 = vunpack.c.l.b16 %v404
      %v533 = vunpack.c.l.b16 %v405
      %v534 = vunpack.c.l.b16 %v406
      %v535 = vunpack.c.l.b16 %v407
      %v536 = vunpack.c.l.b16 %v408
      %v537 = vunpack.c.l.b16 %v409
      %v538 = vunpack.c.l.b16 %v410
      %v539 = vunpack.c.l.b16 %v411
      %v540 = vunpack.c.l.b16 %v412
      %v541 = vunpack.c.l.b16 %v413
      %v542 = vunpack.c.l.b16 %v414
      %v543 = vunpack.c.l.b16 %v415
      %v544 = vunpack.c.l.b16 %v416
      %v545 = vunpack.c.l.b16 %v417
      %v546 = vunpack.c.l.b16 %v418
      %v547 = vunpack.c.l.b16 %v419
      %v548 = vunpack.c.l.b16 %v420
      %v549 = vunpack.c.l.b16 %v421
      %v550 = vunpack.c.l.b16 %v422
      %v551 = vunpack.c.l.b16 %v423
      %v552 = vunpack.c.l.b16 %v424
      %v553 = vunpack.c.l.b16 %v425
      %v554 = vunpack.c.l.b16 %v426
      %v555 = vunpack.c.l.b16 %v427
      %v556 = vunpack.c.l.b16 %v428
      %v557 = vunpack.c.l.b16 %v429
      %v558 = vunpack.c.l.b16 %v430
      %v559 = vunpack.c.l.b16 %v431
      %v560 = vunpack.c.l.b16 %v432
      %v561 = vunpack.c.l.b16 %v433
      %v562 = vunpack.c.l.b16 %v434
      %v563 = vunpack.c.l.b16 %v435
      %v564 = vunpack.c.l.b16 %v436
      %v565 = vunpack.c.l.b16 %v437
      %v566 = vunpack.c.l.b16 %v438
      %v567 = vunpack.c.l.b16 %v439
      %v568 = vunpack.c.l.b16 %v440
      %v569 = vunpack.c.l.b16 %v441
      %v570 = vunpack.c.l.b16 %v442
      %v571 = vunpack.c.l.b16 %v443
      %v572 = vunpack.c.l.b16 %v444
      %v573 = vunpack.c.l.b16 %v445
      %v574 = vunpack.c.l.b16 %v446
      %v575 = vunpack.c.l.b16 %v447
      %v576 = vunpack.c.l.b16 %v448
      %v577 = vunpack.c.l.b16 %v449
      %v578 = vunpack.c.l.b16 %v450
      %v579 = vpack.c.b16 %v516, %v515
      %v580 = vpack.c.b16 %v518, %v517
      %v581 = vpack.c.b16 %v520, %v519
      %v582 = vpack.c.b16 %v522, %v521
      %v583 = vpack.c.b16 %v524, %v523
      %v584 = vpack.c.b16 %v526, %v525
      %v585 = vpack.c.b16 %v528, %v527
      %v586 = vpack.c.b16 %v530, %v529
      %v587 = vpack.c.b16 %v532, %v531
      %v588 = vpack.c.b16 %v534, %v533
      %v589 = vpack.c.b16 %v536, %v535
      %v590 = vpack.c.b16 %v538, %v537
      %v591 = vpack.c.b16 %v540, %v539
      %v592 = vpack.c.b16 %v542, %v541
      %v593 = vpack.c.b16 %v544, %v543
      %v594 = vpack.c.b16 %v546, %v545
      %v595 = vpack.c.b16 %v548, %v547
      %v596 = vpack.c.b16 %v550, %v549
      %v597 = vpack.c.b16 %v552, %v551
      %v598 = vpack.c.b16 %v554, %v553
      %v599 = vpack.c.b16 %v556, %v555
      %v600 = vpack.c.b16 %v558, %v557
      %v601 = vpack.c.b16 %v560, %v559
      %v602 = vpack.c.b16 %v562, %v561
      %v603 = vpack.c.b16 %v564, %v563
      %v604 = vpack.c.b16 %v566, %v565
      %v605 = vpack.c.b16 %v568, %v567
      %v606 = vpack.c.b16 %v570, %v569
      %v607 = vpack.c.b16 %v572, %v571
      %v608 = vpack.c.b16 %v574, %v573
      %v609 = vpack.c.b16 %v576, %v575
      %v610 = vpack.c.b16 %v578, %v577
      %643 = vmatprep.subr.bf16.mxu0 0
      %644 = vmatpush1.bf16.msra.mxu0 %v586
      %645 = vmatprep.subr.bf16.mxu0 0
      %646 = vmatpush1.bf16.msra.mxu0 %v585
      %647 = vmatprep.subr.bf16.mxu0 0
      %648 = vmatpush1.bf16.msra.mxu0 %v584
      %649 = vmatprep.subr.bf16.mxu0 0
      %650 = vmatpush1.bf16.msra.mxu0 %v583
      %651 = vmatprep.subr.bf16.mxu0 0
      %652 = vmatpush1.bf16.msra.mxu0 %v582
      %653 = vmatprep.subr.bf16.mxu0 0
      %654 = vmatpush1.bf16.msra.mxu0 %v581
      %655 = vmatprep.subr.bf16.mxu0 0
      %656 = vmatpush1.bf16.msra.mxu0 %v580
      %657 = vmatprep.subr.bf16.mxu0 0
      %658 = vmatpush1.bf16.msra.mxu0 %v579
      %659 = vmatprep.subr.bf16.mxu0 0
      %660 = vmatpush2.bf16.msra.mxu0 %v594
      %661 = vmatprep.subr.bf16.mxu0 0
      %662 = vmatpush2.bf16.msra.mxu0 %v593
      %663 = vmatprep.subr.bf16.mxu0 0
      %664 = vmatpush2.bf16.msra.mxu0 %v592
      %665 = vmatprep.subr.bf16.mxu0 0
      %666 = vmatpush2.bf16.msra.mxu0 %v591
      %667 = vmatprep.subr.bf16.mxu0 0
      %668 = vmatpush2.bf16.msra.mxu0 %v590
      %669 = vmatprep.subr.bf16.mxu0 0
      %670 = vmatpush2.bf16.msra.mxu0 %v589
      %671 = vmatprep.subr.bf16.mxu0 0
      %672 = vmatpush2.bf16.msra.mxu0 %v588
      %673 = vmatprep.subr.bf16.mxu0 0
      %674 = vmatpush2.bf16.msra.mxu0 %v587
      %675 = vmatprep.mubr.bf16.mxu0 %v250
      %676 = vmatmul.mubr.bf16.gmra.mxu0 %v249
      %v677 = vpop.f32.mrf.mxu0
      %v678 = vadd.f32 0.0, %v677
      %v679 = vpop.f32.mrf.mxu0
      %v680 = vpop.f32.mrf.mxu0
      %v681 = vadd.f32 0.0, %v680
      %v682 = vpop.f32.mrf.mxu0
      %683 = vmatprep.mubr.bf16.mxu0 %v251
      %684 = vmatmul.mubr.bf16.gmra.mxu0 %v250
      %v685 = vpop.f32.mrf.mxu0
      %v686 = vadd.f32 0.0, %v685
      %v687 = vpop.f32.mrf.mxu0
      %v688 = vpop.f32.mrf.mxu0
      %v689 = vadd.f32 0.0, %v688
      %v690 = vpop.f32.mrf.mxu0
      %691 = vmatprep.mubr.bf16.mxu0 %v252
      %692 = vmatmul.mubr.bf16.gmra.mxu0 %v251
      %v693 = vpop.f32.mrf.mxu0
      %v694 = vadd.f32 0.0, %v693
      %v695 = vpop.f32.mrf.mxu0
      %v696 = vpop.f32.mrf.mxu0
      %v697 = vadd.f32 0.0, %v696
      %v698 = vpop.f32.mrf.mxu0
      %699 = vmatprep.mubr.bf16.mxu0 %v253
      %700 = vmatmul.mubr.bf16.gmra.mxu0 %v252
      %v701 = vpop.f32.mrf.mxu0
      %v702 = vadd.f32 0.0, %v701
      %v703 = vpop.f32.mrf.mxu0
      %v704 = vpop.f32.mrf.mxu0
      %v705 = vadd.f32 0.0, %v704
      %v706 = vpop.f32.mrf.mxu0
      %707 = vmatprep.mubr.bf16.mxu0 %v263
      %708 = vmatmul.mubr.bf16.gmra.mxu0 %v253
      %v709 = vpop.f32.mrf.mxu0
      %v710 = vadd.f32 0.0, %v709
      %v711 = vpop.f32.mrf.mxu0
      %v712 = vpop.f32.mrf.mxu0
      %v713 = vadd.f32 0.0, %v712
      %v714 = vpop.f32.mrf.mxu0
      %715 = vdwg.mxu0
      %716 = vmatprep.subr.bf16.mxu0 0
      %717 = vmatpush1.bf16.msra.mxu0 %v602
      %718 = vmatprep.subr.bf16.mxu0 0
      %719 = vmatpush1.bf16.msra.mxu0 %v601
      %720 = vmatprep.subr.bf16.mxu0 0
      %721 = vmatpush1.bf16.msra.mxu0 %v600
      %722 = vmatprep.subr.bf16.mxu0 0
      %723 = vmatpush1.bf16.msra.mxu0 %v599
      %724 = vmatprep.subr.bf16.mxu0 0
      %725 = vmatpush1.bf16.msra.mxu0 %v598
      %726 = vmatprep.subr.bf16.mxu0 0
      %727 = vmatpush1.bf16.msra.mxu0 %v597
      %728 = vmatprep.subr.bf16.mxu0 0
      %729 = vmatpush1.bf16.msra.mxu0 %v596
      %730 = vmatprep.subr.bf16.mxu0 0
      %731 = vmatpush1.bf16.msra.mxu0 %v595
      %732 = vmatprep.subr.bf16.mxu0 0
      %733 = vmatpush2.bf16.msra.mxu0 %v610
      %734 = vmatprep.subr.bf16.mxu0 0
      %735 = vmatpush2.bf16.msra.mxu0 %v609
      %736 = vmatprep.subr.bf16.mxu0 0
      %737 = vmatpush2.bf16.msra.mxu0 %v608
      %738 = vmatprep.subr.bf16.mxu0 0
      %739 = vmatpush2.bf16.msra.mxu0 %v607
      %740 = vmatprep.subr.bf16.mxu0 0
      %741 = vmatpush2.bf16.msra.mxu0 %v606
      %742 = vmatprep.subr.bf16.mxu0 0
      %743 = vmatpush2.bf16.msra.mxu0 %v605
      %744 = vmatprep.subr.bf16.mxu0 0
      %745 = vmatpush2.bf16.msra.mxu0 %v604
      %746 = vmatprep.subr.bf16.mxu0 0
      %747 = vmatpush2.bf16.msra.mxu0 %v603
      %748 = vmatprep.mubr.bf16.mxu0 %v304
      %749 = vmatmul.mubr.bf16.gmra.mxu0 %v292
      %v750 = vpop.f32.mrf.mxu0
      %v751 = vadd.f32 %v678, %v750
      %v752 = vpop.f32.mrf.mxu0
      %v753 = vpop.f32.mrf.mxu0
      %v754 = vadd.f32 %v681, %v753
      %v755 = vpop.f32.mrf.mxu0
      %756 = vmatprep.mubr.bf16.mxu0 %v316
      %757 = vmatmul.mubr.bf16.gmra.mxu0 %v304
      %v758 = vpop.f32.mrf.mxu0
      %v759 = vadd.f32 %v686, %v758
      %v760 = vpop.f32.mrf.mxu0
      %v761 = vpop.f32.mrf.mxu0
      %v762 = vadd.f32 %v689, %v761
      %v763 = vpop.f32.mrf.mxu0
      %764 = vmatprep.mubr.bf16.mxu0 %v328
      %765 = vmatmul.mubr.bf16.gmra.mxu0 %v316
      %v766 = vpop.f32.mrf.mxu0
      %v767 = vadd.f32 %v694, %v766
      %v768 = vpop.f32.mrf.mxu0
      %v769 = vpop.f32.mrf.mxu0
      %v770 = vadd.f32 %v697, %v769
      %v771 = vpop.f32.mrf.mxu0
      %772 = vmatprep.mubr.bf16.mxu0 %v340
      %773 = vmatmul.mubr.bf16.gmra.mxu0 %v328
      %v774 = vpop.f32.mrf.mxu0
      %v775 = vadd.f32 %v702, %v774
      %v776 = vpop.f32.mrf.mxu0
      %v777 = vpop.f32.mrf.mxu0
      %v778 = vadd.f32 %v705, %v777
      %v779 = vpop.f32.mrf.mxu0
      %780 = vmatprep.mubr.bf16.mxu0 %v360
      %781 = vmatmul.mubr.bf16.gmra.mxu0 %v340
      %v782 = vpop.f32.mrf.mxu0
      %v783 = vadd.f32 %v710, %v782
      %v784 = vpop.f32.mrf.mxu0
      %v785 = vpop.f32.mrf.mxu0
      %v786 = vadd.f32 %v713, %v785
      %v787 = vpop.f32.mrf.mxu0
      %788 = vdwg.mxu0
      %v789 = vmax.f32 %v751, 0.0
      %v790 = vmax.f32 %v754, 0.0
      %v791 = vmax.f32 %v759, 0.0
      %v792 = vmax.f32 %v762, 0.0
      %v793 = vmax.f32 %v767, 0.0
      %v794 = vmax.f32 %v770, 0.0
      %v795 = vmax.f32 %v775, 0.0
      %v796 = vmax.f32 %v778, 0.0
      %v797 = vmax.f32 %v783, 0.0
      %v798 = vmax.f32 %v786, 0.0
      %v799 = vpack.c.bf16 %v790, %v789
      %v800 = vpack.c.bf16 %v792, %v791
      %v801 = vpack.c.bf16 %v794, %v793
      %v802 = vpack.c.bf16 %v796, %v795
      %v803 = vpack.c.bf16 %v798, %v797
      %s804 = scalar_lea.vmem %s1, 512
      %v805 = vld [vmem:[%s804] sm:$0xf]
      %v806 = vld [vmem:[%s804 + $0x4] sm:$0xf]
      %v807 = vld [vmem:[%s804 + $0x8] sm:$0xf]
      %v808 = vld [vmem:[%s804 + $0xc] sm:$0xf]
      %v809 = vld [vmem:[%s804 + $0x10] sm:$0xf]
      %v810 = vld [vmem:[%s804 + $0x14] sm:$0xf]
      %v811 = vld [vmem:[%s804 + $0x18] sm:$0xf]
      %v812 = vld [vmem:[%s804 + $0x1c] sm:$0xf]
      %v813 = vld [vmem:[%s804 + $0x20] sm:$0xf]
      %v814 = vld [vmem:[%s804 + $0x24] sm:$0xf]
      %v815 = vld [vmem:[%s804 + $0x28] sm:$0xf]
      %v816 = vld [vmem:[%s804 + $0x2c] sm:$0xf]
      %v817 = vld [vmem:[%s804 + $0x30] sm:$0xf]
      %v818 = vld [vmem:[%s804 + $0x34] sm:$0xf]
      %v819 = vld [vmem:[%s804 + $0x38] sm:$0xf]
      %v820 = vld [vmem:[%s804 + $0x3c] sm:$0xf]
      %v821 = vld [vmem:[%s804 + $0x40] sm:$0xf]
      %v822 = vld [vmem:[%s804 + $0x44] sm:$0xf]
      %v823 = vld [vmem:[%s804 + $0x48] sm:$0xf]
      %v824 = vld [vmem:[%s804 + $0x4c] sm:$0xf]
      %v825 = vld [vmem:[%s804 + $0x50] sm:$0xf]
      %v826 = vld [vmem:[%s804 + $0x54] sm:$0xf]
      %v827 = vld [vmem:[%s804 + $0x58] sm:$0xf]
      %v828 = vld [vmem:[%s804 + $0x5c] sm:$0xf]
      %v829 = vld [vmem:[%s804 + $0x60] sm:$0xf]
      %v830 = vld [vmem:[%s804 + $0x64] sm:$0xf]
      %v831 = vld [vmem:[%s804 + $0x68] sm:$0xf]
      %v832 = vld [vmem:[%s804 + $0x6c] sm:$0xf]
      %v833 = vld [vmem:[%s804 + $0x70] sm:$0xf]
      %v834 = vld [vmem:[%s804 + $0x74] sm:$0xf]
      %v835 = vld [vmem:[%s804 + $0x78] sm:$0xf]
      %v836 = vld [vmem:[%s804 + $0x7c] sm:$0xf]
      %v837 = vld [vmem:[%s804 + $0x80] sm:$0xf]
      %v838 = vld [vmem:[%s804 + $0x84] sm:$0xf]
      %v839 = vld [vmem:[%s804 + $0x88] sm:$0xf]
      %v840 = vld [vmem:[%s804 + $0x8c] sm:$0xf]
      %v841 = vld [vmem:[%s804 + $0x90] sm:$0xf]
      %v842 = vld [vmem:[%s804 + $0x94] sm:$0xf]
      %v843 = vld [vmem:[%s804 + $0x98] sm:$0xf]
      %v844 = vld [vmem:[%s804 + $0x9c] sm:$0xf]
      %v845 = vld [vmem:[%s804 + $0xa0] sm:$0xf]
      %v846 = vld [vmem:[%s804 + $0xa4] sm:$0xf]
      %v847 = vld [vmem:[%s804 + $0xa8] sm:$0xf]
      %v848 = vld [vmem:[%s804 + $0xac] sm:$0xf]
      %v849 = vld [vmem:[%s804 + $0xb0] sm:$0xf]
      %v850 = vld [vmem:[%s804 + $0xb4] sm:$0xf]
      %v851 = vld [vmem:[%s804 + $0xb8] sm:$0xf]
      %v852 = vld [vmem:[%s804 + $0xbc] sm:$0xf]
      %v853 = vld [vmem:[%s804 + $0xc0] sm:$0xf]
      %v854 = vld [vmem:[%s804 + $0xc4] sm:$0xf]
      %v855 = vld [vmem:[%s804 + $0xc8] sm:$0xf]
      %v856 = vld [vmem:[%s804 + $0xcc] sm:$0xf]
      %v857 = vld [vmem:[%s804 + $0xd0] sm:$0xf]
      %v858 = vld [vmem:[%s804 + $0xd4] sm:$0xf]
      %v859 = vld [vmem:[%s804 + $0xd8] sm:$0xf]
      %v860 = vld [vmem:[%s804 + $0xdc] sm:$0xf]
      %v861 = vld [vmem:[%s804 + $0xe0] sm:$0xf]
      %v862 = vld [vmem:[%s804 + $0xe4] sm:$0xf]
      %v863 = vld [vmem:[%s804 + $0xe8] sm:$0xf]
      %v864 = vld [vmem:[%s804 + $0xec] sm:$0xf]
      %v865 = vld [vmem:[%s804 + $0xf0] sm:$0xf]
      %v866 = vld [vmem:[%s804 + $0xf4] sm:$0xf]
      %v867 = vld [vmem:[%s804 + $0xf8] sm:$0xf]
      %v868 = vld [vmem:[%s804 + $0xfc] sm:$0xf]
      %v933 = vunpack.c.l.b16 %v805
      %v934 = vunpack.c.l.b16 %v806
      %v935 = vunpack.c.l.b16 %v807
      %v936 = vunpack.c.l.b16 %v808
      %v937 = vunpack.c.l.b16 %v809
      %v938 = vunpack.c.l.b16 %v810
      %v939 = vunpack.c.l.b16 %v811
      %v940 = vunpack.c.l.b16 %v812
      %v941 = vunpack.c.l.b16 %v813
      %v942 = vunpack.c.l.b16 %v814
      %v943 = vunpack.c.l.b16 %v815
      %v944 = vunpack.c.l.b16 %v816
      %v945 = vunpack.c.l.b16 %v817
      %v946 = vunpack.c.l.b16 %v818
      %v947 = vunpack.c.l.b16 %v819
      %v948 = vunpack.c.l.b16 %v820
      %v949 = vunpack.c.l.b16 %v821
      %v950 = vunpack.c.l.b16 %v822
      %v951 = vunpack.c.l.b16 %v823
      %v952 = vunpack.c.l.b16 %v824
      %v953 = vunpack.c.l.b16 %v825
      %v954 = vunpack.c.l.b16 %v826
      %v955 = vunpack.c.l.b16 %v827
      %v956 = vunpack.c.l.b16 %v828
      %v957 = vunpack.c.l.b16 %v829
      %v958 = vunpack.c.l.b16 %v830
      %v959 = vunpack.c.l.b16 %v831
      %v960 = vunpack.c.l.b16 %v832
      %v961 = vunpack.c.l.b16 %v833
      %v962 = vunpack.c.l.b16 %v834
      %v963 = vunpack.c.l.b16 %v835
      %v964 = vunpack.c.l.b16 %v836
      %v965 = vunpack.c.l.b16 %v837
      %v966 = vunpack.c.l.b16 %v838
      %v967 = vunpack.c.l.b16 %v839
      %v968 = vunpack.c.l.b16 %v840
      %v969 = vunpack.c.l.b16 %v841
      %v970 = vunpack.c.l.b16 %v842
      %v971 = vunpack.c.l.b16 %v843
      %v972 = vunpack.c.l.b16 %v844
      %v973 = vunpack.c.l.b16 %v845
      %v974 = vunpack.c.l.b16 %v846
      %v975 = vunpack.c.l.b16 %v847
      %v976 = vunpack.c.l.b16 %v848
      %v977 = vunpack.c.l.b16 %v849
      %v978 = vunpack.c.l.b16 %v850
      %v979 = vunpack.c.l.b16 %v851
      %v980 = vunpack.c.l.b16 %v852
      %v981 = vunpack.c.l.b16 %v853
      %v982 = vunpack.c.l.b16 %v854
      %v983 = vunpack.c.l.b16 %v855
      %v984 = vunpack.c.l.b16 %v856
      %v985 = vunpack.c.l.b16 %v857
      %v986 = vunpack.c.l.b16 %v858
      %v987 = vunpack.c.l.b16 %v859
      %v988 = vunpack.c.l.b16 %v860
      %v989 = vunpack.c.l.b16 %v861
      %v990 = vunpack.c.l.b16 %v862
      %v991 = vunpack.c.l.b16 %v863
      %v992 = vunpack.c.l.b16 %v864
      %v993 = vunpack.c.l.b16 %v865
      %v994 = vunpack.c.l.b16 %v866
      %v995 = vunpack.c.l.b16 %v867
      %v996 = vunpack.c.l.b16 %v868
      %v997 = vpack.c.b16 %v934, %v933
      %v998 = vpack.c.b16 %v936, %v935
      %v999 = vpack.c.b16 %v938, %v937
      %v1000 = vpack.c.b16 %v940, %v939
      %v1001 = vpack.c.b16 %v942, %v941
      %v1002 = vpack.c.b16 %v944, %v943
      %v1003 = vpack.c.b16 %v946, %v945
      %v1004 = vpack.c.b16 %v948, %v947
      %v1005 = vpack.c.b16 %v950, %v949
      %v1006 = vpack.c.b16 %v952, %v951
      %v1007 = vpack.c.b16 %v954, %v953
      %v1008 = vpack.c.b16 %v956, %v955
      %v1009 = vpack.c.b16 %v958, %v957
      %v1010 = vpack.c.b16 %v960, %v959
      %v1011 = vpack.c.b16 %v962, %v961
      %v1012 = vpack.c.b16 %v964, %v963
      %v1013 = vpack.c.b16 %v966, %v965
      %v1014 = vpack.c.b16 %v968, %v967
      %v1015 = vpack.c.b16 %v970, %v969
      %v1016 = vpack.c.b16 %v972, %v971
      %v1017 = vpack.c.b16 %v974, %v973
      %v1018 = vpack.c.b16 %v976, %v975
      %v1019 = vpack.c.b16 %v978, %v977
      %v1020 = vpack.c.b16 %v980, %v979
      %v1021 = vpack.c.b16 %v982, %v981
      %v1022 = vpack.c.b16 %v984, %v983
      %v1023 = vpack.c.b16 %v986, %v985
      %v1024 = vpack.c.b16 %v988, %v987
      %v1025 = vpack.c.b16 %v990, %v989
      %v1026 = vpack.c.b16 %v992, %v991
      %v1027 = vpack.c.b16 %v994, %v993
      %v1028 = vpack.c.b16 %v996, %v995
      %1061 = vmatprep.subr.bf16.mxu0 0
      %1062 = vmatpush1.bf16.msra.mxu0 %v1004
      %1063 = vmatprep.subr.bf16.mxu0 0
      %1064 = vmatpush1.bf16.msra.mxu0 %v1003
      %1065 = vmatprep.subr.bf16.mxu0 0
      %1066 = vmatpush1.bf16.msra.mxu0 %v1002
      %1067 = vmatprep.subr.bf16.mxu0 0
      %1068 = vmatpush1.bf16.msra.mxu0 %v1001
      %1069 = vmatprep.subr.bf16.mxu0 0
      %1070 = vmatpush1.bf16.msra.mxu0 %v1000
      %1071 = vmatprep.subr.bf16.mxu0 0
      %1072 = vmatpush1.bf16.msra.mxu0 %v999
      %1073 = vmatprep.subr.bf16.mxu0 0
      %1074 = vmatpush1.bf16.msra.mxu0 %v998
      %1075 = vmatprep.subr.bf16.mxu0 0
      %1076 = vmatpush1.bf16.msra.mxu0 %v997
      %1077 = vmatprep.subr.bf16.mxu0 0
      %1078 = vmatpush2.bf16.msra.mxu0 %v1012
      %1079 = vmatprep.subr.bf16.mxu0 0
      %1080 = vmatpush2.bf16.msra.mxu0 %v1011
      %1081 = vmatprep.subr.bf16.mxu0 0
      %1082 = vmatpush2.bf16.msra.mxu0 %v1010
      %1083 = vmatprep.subr.bf16.mxu0 0
      %1084 = vmatpush2.bf16.msra.mxu0 %v1009
      %1085 = vmatprep.subr.bf16.mxu0 0
      %1086 = vmatpush2.bf16.msra.mxu0 %v1008
      %1087 = vmatprep.subr.bf16.mxu0 0
      %1088 = vmatpush2.bf16.msra.mxu0 %v1007
      %1089 = vmatprep.subr.bf16.mxu0 0
      %1090 = vmatpush2.bf16.msra.mxu0 %v1006
      %1091 = vmatprep.subr.bf16.mxu0 0
      %1092 = vmatpush2.bf16.msra.mxu0 %v1005
      %1093 = vmatprep.mubr.bf16.mxu0 %v250
      %1094 = vmatmul.mubr.bf16.gmra.mxu0 %v249
      %v1095 = vpop.f32.mrf.mxu0
      %v1096 = vadd.f32 0.0, %v1095
      %v1097 = vpop.f32.mrf.mxu0
      %v1098 = vpop.f32.mrf.mxu0
      %v1099 = vadd.f32 0.0, %v1098
      %v1100 = vpop.f32.mrf.mxu0
      %1101 = vmatprep.mubr.bf16.mxu0 %v251
      %1102 = vmatmul.mubr.bf16.gmra.mxu0 %v250
      %v1103 = vpop.f32.mrf.mxu0
      %v1104 = vadd.f32 0.0, %v1103
      %v1105 = vpop.f32.mrf.mxu0
      %v1106 = vpop.f32.mrf.mxu0
      %v1107 = vadd.f32 0.0, %v1106
      %v1108 = vpop.f32.mrf.mxu0
      %1109 = vmatprep.mubr.bf16.mxu0 %v252
      %1110 = vmatmul.mubr.bf16.gmra.mxu0 %v251
      %v1111 = vpop.f32.mrf.mxu0
      %v1112 = vadd.f32 0.0, %v1111
      %v1113 = vpop.f32.mrf.mxu0
      %v1114 = vpop.f32.mrf.mxu0
      %v1115 = vadd.f32 0.0, %v1114
      %v1116 = vpop.f32.mrf.mxu0
      %1117 = vmatprep.mubr.bf16.mxu0 %v253
      %1118 = vmatmul.mubr.bf16.gmra.mxu0 %v252
      %v1119 = vpop.f32.mrf.mxu0
      %v1120 = vadd.f32 0.0, %v1119
      %v1121 = vpop.f32.mrf.mxu0
      %v1122 = vpop.f32.mrf.mxu0
      %v1123 = vadd.f32 0.0, %v1122
      %v1124 = vpop.f32.mrf.mxu0
      %1125 = vmatprep.mubr.bf16.mxu0 %v263
      %1126 = vmatmul.mubr.bf16.gmra.mxu0 %v253
      %v1127 = vpop.f32.mrf.mxu0
      %v1128 = vadd.f32 0.0, %v1127
      %v1129 = vpop.f32.mrf.mxu0
      %v1130 = vpop.f32.mrf.mxu0
      %v1131 = vadd.f32 0.0, %v1130
      %v1132 = vpop.f32.mrf.mxu0
      %1133 = vdwg.mxu0
      %1134 = vmatprep.subr.bf16.mxu0 0
      %1135 = vmatpush1.bf16.msra.mxu0 %v1020
      %1136 = vmatprep.subr.bf16.mxu0 0
      %1137 = vmatpush1.bf16.msra.mxu0 %v1019
      %1138 = vmatprep.subr.bf16.mxu0 0
      %1139 = vmatpush1.bf16.msra.mxu0 %v1018
      %1140 = vmatprep.subr.bf16.mxu0 0
      %1141 = vmatpush1.bf16.msra.mxu0 %v1017
      %1142 = vmatprep.subr.bf16.mxu0 0
      %1143 = vmatpush1.bf16.msra.mxu0 %v1016
      %1144 = vmatprep.subr.bf16.mxu0 0
      %1145 = vmatpush1.bf16.msra.mxu0 %v1015
      %1146 = vmatprep.subr.bf16.mxu0 0
      %1147 = vmatpush1.bf16.msra.mxu0 %v1014
      %1148 = vmatprep.subr.bf16.mxu0 0
      %1149 = vmatpush1.bf16.msra.mxu0 %v1013
      %1150 = vmatprep.subr.bf16.mxu0 0
      %1151 = vmatpush2.bf16.msra.mxu0 %v1028
      %1152 = vmatprep.subr.bf16.mxu0 0
      %1153 = vmatpush2.bf16.msra.mxu0 %v1027
      %1154 = vmatprep.subr.bf16.mxu0 0
      %1155 = vmatpush2.bf16.msra.mxu0 %v1026
      %1156 = vmatprep.subr.bf16.mxu0 0
      %1157 = vmatpush2.bf16.msra.mxu0 %v1025
      %1158 = vmatprep.subr.bf16.mxu0 0
      %1159 = vmatpush2.bf16.msra.mxu0 %v1024
      %1160 = vmatprep.subr.bf16.mxu0 0
      %1161 = vmatpush2.bf16.msra.mxu0 %v1023
      %1162 = vmatprep.subr.bf16.mxu0 0
      %1163 = vmatpush2.bf16.msra.mxu0 %v1022
      %1164 = vmatprep.subr.bf16.mxu0 0
      %1165 = vmatpush2.bf16.msra.mxu0 %v1021
      %1166 = vmatprep.mubr.bf16.mxu0 %v304
      %1167 = vmatmul.mubr.bf16.gmra.mxu0 %v292
      %v1168 = vpop.f32.mrf.mxu0
      %v1169 = vadd.f32 %v1096, %v1168
      %v1170 = vpop.f32.mrf.mxu0
      %v1171 = vpop.f32.mrf.mxu0
      %v1172 = vadd.f32 %v1099, %v1171
      %v1173 = vpop.f32.mrf.mxu0
      %1174 = vmatprep.mubr.bf16.mxu0 %v316
      %1175 = vmatmul.mubr.bf16.gmra.mxu0 %v304
      %v1176 = vpop.f32.mrf.mxu0
      %v1177 = vadd.f32 %v1104, %v1176
      %v1178 = vpop.f32.mrf.mxu0
      %v1179 = vpop.f32.mrf.mxu0
      %v1180 = vadd.f32 %v1107, %v1179
      %v1181 = vpop.f32.mrf.mxu0
      %1182 = vmatprep.mubr.bf16.mxu0 %v328
      %1183 = vmatmul.mubr.bf16.gmra.mxu0 %v316
      %v1184 = vpop.f32.mrf.mxu0
      %v1185 = vadd.f32 %v1112, %v1184
      %v1186 = vpop.f32.mrf.mxu0
      %v1187 = vpop.f32.mrf.mxu0
      %v1188 = vadd.f32 %v1115, %v1187
      %v1189 = vpop.f32.mrf.mxu0
      %1190 = vmatprep.mubr.bf16.mxu0 %v340
      %1191 = vmatmul.mubr.bf16.gmra.mxu0 %v328
      %v1192 = vpop.f32.mrf.mxu0
      %v1193 = vadd.f32 %v1120, %v1192
      %v1194 = vpop.f32.mrf.mxu0
      %v1195 = vpop.f32.mrf.mxu0
      %v1196 = vadd.f32 %v1123, %v1195
      %v1197 = vpop.f32.mrf.mxu0
      %1198 = vmatprep.mubr.bf16.mxu0 %v360
      %1199 = vmatmul.mubr.bf16.gmra.mxu0 %v340
      %v1200 = vpop.f32.mrf.mxu0
      %v1201 = vadd.f32 %v1128, %v1200
      %v1202 = vpop.f32.mrf.mxu0
      %v1203 = vpop.f32.mrf.mxu0
      %v1204 = vadd.f32 %v1131, %v1203
      %v1205 = vpop.f32.mrf.mxu0
      %1206 = vdwg.mxu0
      %v1207 = vmax.f32 %v1169, 0.0
      %v1208 = vmax.f32 %v1172, 0.0
      %v1209 = vmax.f32 %v1177, 0.0
      %v1210 = vmax.f32 %v1180, 0.0
      %v1211 = vmax.f32 %v1185, 0.0
      %v1212 = vmax.f32 %v1188, 0.0
      %v1213 = vmax.f32 %v1193, 0.0
      %v1214 = vmax.f32 %v1196, 0.0
      %v1215 = vmax.f32 %v1201, 0.0
      %v1216 = vmax.f32 %v1204, 0.0
      %v1217 = vpack.c.bf16 %v1208, %v1207
      %v1218 = vpack.c.bf16 %v1210, %v1209
      %v1219 = vpack.c.bf16 %v1212, %v1211
      %v1220 = vpack.c.bf16 %v1214, %v1213
      %v1221 = vpack.c.bf16 %v1216, %v1215
      %v1232 = vunpack.c.l.b16 %v1217
      %v1233 = vunpack.c.h.b16 %v1217
      %v1234 = vunpack.c.l.b16 %v799
      %v1235 = vunpack.c.h.b16 %v799
      %v1236 = vunpack.c.l.b16 %v1218
      %v1237 = vunpack.c.h.b16 %v1218
      %v1238 = vunpack.c.l.b16 %v800
      %v1239 = vunpack.c.h.b16 %v800
      %v1240 = vunpack.c.l.b16 %v1219
      %v1241 = vunpack.c.h.b16 %v1219
      %v1242 = vunpack.c.l.b16 %v801
      %v1243 = vunpack.c.h.b16 %v801
      %v1244 = vunpack.c.l.b16 %v1220
      %v1245 = vunpack.c.h.b16 %v1220
      %v1246 = vunpack.c.l.b16 %v802
      %v1247 = vunpack.c.h.b16 %v802
      %v1248 = vunpack.c.l.b16 %v1221
      %v1249 = vunpack.c.h.b16 %v1221
      %v1250 = vunpack.c.l.b16 %v803
      %v1251 = vunpack.c.h.b16 %v803
      %v1252 = vpack.c.b16 %v1232, %v1232
      %v1253 = vpack.c.b16 %v1233, %v1233
      %v1254 = vpack.c.b16 %v1234, %v1234
      %v1255 = vpack.c.b16 %v1235, %v1235
      %v1256 = vpack.c.b16 %v1236, %v1236
      %v1257 = vpack.c.b16 %v1237, %v1237
      %v1258 = vpack.c.b16 %v1238, %v1238
      %v1259 = vpack.c.b16 %v1239, %v1239
      %v1260 = vpack.c.b16 %v1240, %v1240
      %v1261 = vpack.c.b16 %v1241, %v1241
      %v1262 = vpack.c.b16 %v1242, %v1242
      %v1263 = vpack.c.b16 %v1243, %v1243
      %v1264 = vpack.c.b16 %v1244, %v1244
      %v1265 = vpack.c.b16 %v1245, %v1245
      %v1266 = vpack.c.b16 %v1246, %v1246
      %v1267 = vpack.c.b16 %v1247, %v1247
      %v1268 = vpack.c.b16 %v1248, %v1248
      %v1269 = vpack.c.b16 %v1249, %v1249
      %v1270 = vpack.c.b16 %v1250, %v1250
      %v1271 = vpack.c.b16 %v1251, %v1251
      %vm1272 = vsmask.f32 256
      %vm1273 = vsmask.f32 4368
      %vm1274 = vmor %vm1272, %vm1273
      %v1276 = vshrl.u32 %v1252, 16
      %v1278 = vrot.slane %v1276, 7
      %v1279 = vshll.u32 %v1252, 16
      %v1281 = vor.u32 %v1278, %v1279
      %v1282 = vrot.slane %v1278, 4
      %v1284 = vshrl.u32 %v1253, 16
      %v1286 = vrot.slane %v1284, 7
      %v1287 = vshll.u32 %v1253, 16
      %v1289 = vor.u32 %v1286, %v1287
      %v1290 = vsel %vm1274, %v1282, %v1289
      %v1291 = vrot.slane %v1286, 4
      %v1293 = vshrl.u32 %v1254, 16
      %v1295 = vrot.slane %v1293, 7
      %v1296 = vshll.u32 %v1254, 16
      %v1298 = vor.u32 %v1295, %v1296
      %v1299 = vrot.slane %v1295, 4
      %v1301 = vshrl.u32 %v1255, 16
      %v1303 = vrot.slane %v1301, 7
      %v1304 = vshll.u32 %v1255, 16
      %v1306 = vor.u32 %v1303, %v1304
      %v1307 = vsel %vm1274, %v1299, %v1306
      %v1308 = vrot.slane %v1303, 4
      %v1310 = vshrl.u32 %v1256, 16
      %v1312 = vrot.slane %v1310, 7
      %v1313 = vshll.u32 %v1256, 16
      %v1315 = vor.u32 %v1312, %v1313
      %v1316 = vrot.slane %v1312, 4
      %v1318 = vshrl.u32 %v1257, 16
      %v1320 = vrot.slane %v1318, 7
      %v1321 = vshll.u32 %v1257, 16
      %v1323 = vor.u32 %v1320, %v1321
      %v1324 = vsel %vm1274, %v1316, %v1323
      %v1325 = vrot.slane %v1320, 4
      %v1327 = vshrl.u32 %v1258, 16
      %v1329 = vrot.slane %v1327, 7
      %v1330 = vshll.u32 %v1258, 16
      %v1332 = vor.u32 %v1329, %v1330
      %v1333 = vrot.slane %v1329, 4
      %v1335 = vshrl.u32 %v1259, 16
      %v1337 = vrot.slane %v1335, 7
      %v1338 = vshll.u32 %v1259, 16
      %v1340 = vor.u32 %v1337, %v1338
      %v1341 = vsel %vm1274, %v1333, %v1340
      %v1342 = vrot.slane %v1337, 4
      %v1344 = vshrl.u32 %v1260, 16
      %v1346 = vrot.slane %v1344, 7
      %v1347 = vshll.u32 %v1260, 16
      %v1349 = vor.u32 %v1346, %v1347
      %v1350 = vrot.slane %v1346, 4
      %v1352 = vshrl.u32 %v1261, 16
      %v1354 = vrot.slane %v1352, 7
      %v1355 = vshll.u32 %v1261, 16
      %v1357 = vor.u32 %v1354, %v1355
      %v1358 = vsel %vm1274, %v1350, %v1357
      %v1359 = vrot.slane %v1354, 4
      %v1361 = vshrl.u32 %v1262, 16
      %v1363 = vrot.slane %v1361, 7
      %v1364 = vshll.u32 %v1262, 16
      %v1366 = vor.u32 %v1363, %v1364
      %v1367 = vrot.slane %v1363, 4
      %v1369 = vshrl.u32 %v1263, 16
      %v1371 = vrot.slane %v1369, 7
      %v1372 = vshll.u32 %v1263, 16
      %v1374 = vor.u32 %v1371, %v1372
      %v1375 = vsel %vm1274, %v1367, %v1374
      %v1376 = vrot.slane %v1371, 4
      %v1378 = vshrl.u32 %v1264, 16
      %v1380 = vrot.slane %v1378, 7
      %v1381 = vshll.u32 %v1264, 16
      %v1383 = vor.u32 %v1380, %v1381
      %v1384 = vrot.slane %v1380, 4
      %v1386 = vshrl.u32 %v1265, 16
      %v1388 = vrot.slane %v1386, 7
      %v1389 = vshll.u32 %v1265, 16
      %v1391 = vor.u32 %v1388, %v1389
      %v1392 = vsel %vm1274, %v1384, %v1391
      %v1393 = vrot.slane %v1388, 4
      %v1395 = vshrl.u32 %v1266, 16
      %v1397 = vrot.slane %v1395, 7
      %v1398 = vshll.u32 %v1266, 16
      %v1400 = vor.u32 %v1397, %v1398
      %v1401 = vrot.slane %v1397, 4
      %v1403 = vshrl.u32 %v1267, 16
      %v1405 = vrot.slane %v1403, 7
      %v1406 = vshll.u32 %v1267, 16
      %v1408 = vor.u32 %v1405, %v1406
      %v1409 = vsel %vm1274, %v1401, %v1408
      %v1410 = vrot.slane %v1405, 4
      %v1412 = vshrl.u32 %v1268, 16
      %v1414 = vrot.slane %v1412, 7
      %v1415 = vshll.u32 %v1268, 16
      %v1417 = vor.u32 %v1414, %v1415
      %v1418 = vrot.slane %v1414, 4
      %v1420 = vshrl.u32 %v1269, 16
      %v1422 = vrot.slane %v1420, 7
      %v1423 = vshll.u32 %v1269, 16
      %v1425 = vor.u32 %v1422, %v1423
      %v1426 = vsel %vm1274, %v1418, %v1425
      %v1427 = vrot.slane %v1422, 4
      %v1429 = vshrl.u32 %v1270, 16
      %v1431 = vrot.slane %v1429, 7
      %v1432 = vshll.u32 %v1270, 16
      %v1434 = vor.u32 %v1431, %v1432
      %v1435 = vrot.slane %v1431, 4
      %v1437 = vshrl.u32 %v1271, 16
      %v1439 = vrot.slane %v1437, 7
      %v1440 = vshll.u32 %v1271, 16
      %v1442 = vor.u32 %v1439, %v1440
      %v1443 = vsel %vm1274, %v1435, %v1442
      %v1444 = vrot.slane %v1439, 4
      %vm1475 = vcmask 1043456
      %vm1476 = vsmask.f32 7938
      %vm1477 = vmand %vm1475, %vm1476
      %v1478 = vld [vmem:[#allocation2] sm:$0xf]
      %v1479 = vsel %vm1477, %v1281, %v1478
      %1480 = vst [vmem:[#allocation2] sm:$0xf] %v1479
      %1481 = vst [vmem:[#allocation2 + $0x4] sm:$0xf] %v1290
      %vm1482 = vcmask 1040384
      %vm1483 = vmand %vm1482, %vm1272
      %v1484 = vld [vmem:[#allocation2 + $0x8] sm:$0x1]
      %v1485 = vsel %vm1483, %v1291, %v1484
      %1486 = vst [vmem:[#allocation2 + $0x8] sm:$0x1] %v1485
      %v1487 = vld [vmem:[#allocation2 + $0xc] sm:$0xf]
      %v1488 = vsel %vm1477, %v1298, %v1487
      %1489 = vst [vmem:[#allocation2 + $0xc] sm:$0xf] %v1488
      %1490 = vst [vmem:[#allocation2 + $0x10] sm:$0xf] %v1307
      %v1491 = vld [vmem:[#allocation2 + $0x14] sm:$0x1]
      %v1492 = vsel %vm1483, %v1308, %v1491
      %1493 = vst [vmem:[#allocation2 + $0x14] sm:$0x1] %v1492
      %v1494 = vld [vmem:[#allocation2 + $0x18] sm:$0xf]
      %v1495 = vsel %vm1477, %v1315, %v1494
      %1496 = vst [vmem:[#allocation2 + $0x18] sm:$0xf] %v1495
      %1497 = vst [vmem:[#allocation2 + $0x1c] sm:$0xf] %v1324
      %v1498 = vld [vmem:[#allocation2 + $0x20] sm:$0x1]
      %v1499 = vsel %vm1483, %v1325, %v1498
      %1500 = vst [vmem:[#allocation2 + $0x20] sm:$0x1] %v1499
      %v1501 = vld [vmem:[#allocation2 + $0x24] sm:$0xf]
      %v1502 = vsel %vm1477, %v1332, %v1501
      %1503 = vst [vmem:[#allocation2 + $0x24] sm:$0xf] %v1502
      %1504 = vst [vmem:[#allocation2 + $0x28] sm:$0xf] %v1341
      %v1505 = vld [vmem:[#allocation2 + $0x2c] sm:$0x1]
      %v1506 = vsel %vm1483, %v1342, %v1505
      %1507 = vst [vmem:[#allocation2 + $0x2c] sm:$0x1] %v1506
      %v1508 = vld [vmem:[#allocation2 + $0x30] sm:$0xf]
      %v1509 = vsel %vm1477, %v1349, %v1508
      %1510 = vst [vmem:[#allocation2 + $0x30] sm:$0xf] %v1509
      %1511 = vst [vmem:[#allocation2 + $0x34] sm:$0xf] %v1358
      %v1512 = vld [vmem:[#allocation2 + $0x38] sm:$0x1]
      %v1513 = vsel %vm1483, %v1359, %v1512
      %1514 = vst [vmem:[#allocation2 + $0x38] sm:$0x1] %v1513
      %v1515 = vld [vmem:[#allocation2 + $0x3c] sm:$0xf]
      %v1516 = vsel %vm1477, %v1366, %v1515
      %1517 = vst [vmem:[#allocation2 + $0x3c] sm:$0xf] %v1516
      %1518 = vst [vmem:[#allocation2 + $0x40] sm:$0xf] %v1375
      %v1519 = vld [vmem:[#allocation2 + $0x44] sm:$0x1]
      %v1520 = vsel %vm1483, %v1376, %v1519
      %1521 = vst [vmem:[#allocation2 + $0x44] sm:$0x1] %v1520
      %v1522 = vld [vmem:[#allocation2 + $0x48] sm:$0xf]
      %v1523 = vsel %vm1477, %v1383, %v1522
      %1524 = vst [vmem:[#allocation2 + $0x48] sm:$0xf] %v1523
      %1525 = vst [vmem:[#allocation2 + $0x4c] sm:$0xf] %v1392
      %v1526 = vld [vmem:[#allocation2 + $0x50] sm:$0x1]
      %v1527 = vsel %vm1483, %v1393, %v1526
      %1528 = vst [vmem:[#allocation2 + $0x50] sm:$0x1] %v1527
      %v1529 = vld [vmem:[#allocation2 + $0x54] sm:$0xf]
      %v1530 = vsel %vm1477, %v1400, %v1529
      %1531 = vst [vmem:[#allocation2 + $0x54] sm:$0xf] %v1530
      %1532 = vst [vmem:[#allocation2 + $0x58] sm:$0xf] %v1409
      %v1533 = vld [vmem:[#allocation2 + $0x5c] sm:$0x1]
      %v1534 = vsel %vm1483, %v1410, %v1533
      %1535 = vst [vmem:[#allocation2 + $0x5c] sm:$0x1] %v1534
      %v1536 = vld [vmem:[#allocation2 + $0x60] sm:$0xf]
      %v1537 = vsel %vm1477, %v1417, %v1536
      %1538 = vst [vmem:[#allocation2 + $0x60] sm:$0xf] %v1537
      %1539 = vst [vmem:[#allocation2 + $0x64] sm:$0xf] %v1426
      %v1540 = vld [vmem:[#allocation2 + $0x68] sm:$0x1]
      %v1541 = vsel %vm1483, %v1427, %v1540
      %1542 = vst [vmem:[#allocation2 + $0x68] sm:$0x1] %v1541
      %v1543 = vld [vmem:[#allocation2 + $0x6c] sm:$0xf]
      %v1544 = vsel %vm1477, %v1434, %v1543
      %1545 = vst [vmem:[#allocation2 + $0x6c] sm:$0xf] %v1544
      %1546 = vst [vmem:[#allocation2 + $0x70] sm:$0xf] %v1443
      %v1547 = vld [vmem:[#allocation2 + $0x74] sm:$0x1]
      %v1548 = vsel %vm1483, %v1444, %v1547
      %1549 = vst [vmem:[#allocation2 + $0x74] sm:$0x1] %v1548
      %s1550 = scalar_lea.vmem %s1, 256
      %v1551 = vld [vmem:[%s1550] sm:$0xf]
      %v1552 = vld [vmem:[%s1550 + $0x4] sm:$0xf]
      %v1553 = vld [vmem:[%s1550 + $0x8] sm:$0xf]
      %v1554 = vld [vmem:[%s1550 + $0xc] sm:$0xf]
      %v1555 = vld [vmem:[%s1550 + $0x10] sm:$0xf]
      %v1556 = vld [vmem:[%s1550 + $0x14] sm:$0xf]
      %v1557 = vld [vmem:[%s1550 + $0x18] sm:$0xf]
      %v1558 = vld [vmem:[%s1550 + $0x1c] sm:$0xf]
      %v1559 = vld [vmem:[%s1550 + $0x20] sm:$0xf]
      %v1560 = vld [vmem:[%s1550 + $0x24] sm:$0xf]
      %v1561 = vld [vmem:[%s1550 + $0x28] sm:$0xf]
      %v1562 = vld [vmem:[%s1550 + $0x2c] sm:$0xf]
      %v1563 = vld [vmem:[%s1550 + $0x30] sm:$0xf]
      %v1564 = vld [vmem:[%s1550 + $0x34] sm:$0xf]
      %v1565 = vld [vmem:[%s1550 + $0x38] sm:$0xf]
      %v1566 = vld [vmem:[%s1550 + $0x3c] sm:$0xf]
      %v1567 = vld [vmem:[%s1550 + $0x40] sm:$0xf]
      %v1568 = vld [vmem:[%s1550 + $0x44] sm:$0xf]
      %v1569 = vld [vmem:[%s1550 + $0x48] sm:$0xf]
      %v1570 = vld [vmem:[%s1550 + $0x4c] sm:$0xf]
      %v1571 = vld [vmem:[%s1550 + $0x50] sm:$0xf]
      %v1572 = vld [vmem:[%s1550 + $0x54] sm:$0xf]
      %v1573 = vld [vmem:[%s1550 + $0x58] sm:$0xf]
      %v1574 = vld [vmem:[%s1550 + $0x5c] sm:$0xf]
      %v1575 = vld [vmem:[%s1550 + $0x60] sm:$0xf]
      %v1576 = vld [vmem:[%s1550 + $0x64] sm:$0xf]
      %v1577 = vld [vmem:[%s1550 + $0x68] sm:$0xf]
      %v1578 = vld [vmem:[%s1550 + $0x6c] sm:$0xf]
      %v1579 = vld [vmem:[%s1550 + $0x70] sm:$0xf]
      %v1580 = vld [vmem:[%s1550 + $0x74] sm:$0xf]
      %v1581 = vld [vmem:[%s1550 + $0x78] sm:$0xf]
      %v1582 = vld [vmem:[%s1550 + $0x7c] sm:$0xf]
      %v1583 = vld [vmem:[%s1550 + $0x80] sm:$0xf]
      %v1584 = vld [vmem:[%s1550 + $0x84] sm:$0xf]
      %v1585 = vld [vmem:[%s1550 + $0x88] sm:$0xf]
      %v1586 = vld [vmem:[%s1550 + $0x8c] sm:$0xf]
      %v1587 = vld [vmem:[%s1550 + $0x90] sm:$0xf]
      %v1588 = vld [vmem:[%s1550 + $0x94] sm:$0xf]
      %v1589 = vld [vmem:[%s1550 + $0x98] sm:$0xf]
      %v1590 = vld [vmem:[%s1550 + $0x9c] sm:$0xf]
      %v1591 = vld [vmem:[%s1550 + $0xa0] sm:$0xf]
      %v1592 = vld [vmem:[%s1550 + $0xa4] sm:$0xf]
      %v1593 = vld [vmem:[%s1550 + $0xa8] sm:$0xf]
      %v1594 = vld [vmem:[%s1550 + $0xac] sm:$0xf]
      %v1595 = vld [vmem:[%s1550 + $0xb0] sm:$0xf]
      %v1596 = vld [vmem:[%s1550 + $0xb4] sm:$0xf]
      %v1597 = vld [vmem:[%s1550 + $0xb8] sm:$0xf]
      %v1598 = vld [vmem:[%s1550 + $0xbc] sm:$0xf]
      %v1599 = vld [vmem:[%s1550 + $0xc0] sm:$0xf]
      %v1600 = vld [vmem:[%s1550 + $0xc4] sm:$0xf]
      %v1601 = vld [vmem:[%s1550 + $0xc8] sm:$0xf]
      %v1602 = vld [vmem:[%s1550 + $0xcc] sm:$0xf]
      %v1603 = vld [vmem:[%s1550 + $0xd0] sm:$0xf]
      %v1604 = vld [vmem:[%s1550 + $0xd4] sm:$0xf]
      %v1605 = vld [vmem:[%s1550 + $0xd8] sm:$0xf]
      %v1606 = vld [vmem:[%s1550 + $0xdc] sm:$0xf]
      %v1607 = vld [vmem:[%s1550 + $0xe0] sm:$0xf]
      %v1608 = vld [vmem:[%s1550 + $0xe4] sm:$0xf]
      %v1609 = vld [vmem:[%s1550 + $0xe8] sm:$0xf]
      %v1610 = vld [vmem:[%s1550 + $0xec] sm:$0xf]
      %v1611 = vld [vmem:[%s1550 + $0xf0] sm:$0xf]
      %v1612 = vld [vmem:[%s1550 + $0xf4] sm:$0xf]
      %v1613 = vld [vmem:[%s1550 + $0xf8] sm:$0xf]
      %v1614 = vld [vmem:[%s1550 + $0xfc] sm:$0xf]
      %v1679 = vunpack.c.l.b16 %v1551
      %v1680 = vunpack.c.l.b16 %v1552
      %v1681 = vunpack.c.l.b16 %v1553
      %v1682 = vunpack.c.l.b16 %v1554
      %v1683 = vunpack.c.l.b16 %v1555
      %v1684 = vunpack.c.l.b16 %v1556
      %v1685 = vunpack.c.l.b16 %v1557
      %v1686 = vunpack.c.l.b16 %v1558
      %v1687 = vunpack.c.l.b16 %v1559
      %v1688 = vunpack.c.l.b16 %v1560
      %v1689 = vunpack.c.l.b16 %v1561
      %v1690 = vunpack.c.l.b16 %v1562
      %v1691 = vunpack.c.l.b16 %v1563
      %v1692 = vunpack.c.l.b16 %v1564
      %v1693 = vunpack.c.l.b16 %v1565
      %v1694 = vunpack.c.l.b16 %v1566
      %v1695 = vunpack.c.l.b16 %v1567
      %v1696 = vunpack.c.l.b16 %v1568
      %v1697 = vunpack.c.l.b16 %v1569
      %v1698 = vunpack.c.l.b16 %v1570
      %v1699 = vunpack.c.l.b16 %v1571
      %v1700 = vunpack.c.l.b16 %v1572
      %v1701 = vunpack.c.l.b16 %v1573
      %v1702 = vunpack.c.l.b16 %v1574
      %v1703 = vunpack.c.l.b16 %v1575
      %v1704 = vunpack.c.l.b16 %v1576
      %v1705 = vunpack.c.l.b16 %v1577
      %v1706 = vunpack.c.l.b16 %v1578
      %v1707 = vunpack.c.l.b16 %v1579
      %v1708 = vunpack.c.l.b16 %v1580
      %v1709 = vunpack.c.l.b16 %v1581
      %v1710 = vunpack.c.l.b16 %v1582
      %v1711 = vunpack.c.l.b16 %v1583
      %v1712 = vunpack.c.l.b16 %v1584
      %v1713 = vunpack.c.l.b16 %v1585
      %v1714 = vunpack.c.l.b16 %v1586
      %v1715 = vunpack.c.l.b16 %v1587
      %v1716 = vunpack.c.l.b16 %v1588
      %v1717 = vunpack.c.l.b16 %v1589
      %v1718 = vunpack.c.l.b16 %v1590
      %v1719 = vunpack.c.l.b16 %v1591
      %v1720 = vunpack.c.l.b16 %v1592
      %v1721 = vunpack.c.l.b16 %v1593
      %v1722 = vunpack.c.l.b16 %v1594
      %v1723 = vunpack.c.l.b16 %v1595
      %v1724 = vunpack.c.l.b16 %v1596
      %v1725 = vunpack.c.l.b16 %v1597
      %v1726 = vunpack.c.l.b16 %v1598
      %v1727 = vunpack.c.l.b16 %v1599
      %v1728 = vunpack.c.l.b16 %v1600
      %v1729 = vunpack.c.l.b16 %v1601
      %v1730 = vunpack.c.l.b16 %v1602
      %v1731 = vunpack.c.l.b16 %v1603
      %v1732 = vunpack.c.l.b16 %v1604
      %v1733 = vunpack.c.l.b16 %v1605
      %v1734 = vunpack.c.l.b16 %v1606
      %v1735 = vunpack.c.l.b16 %v1607
      %v1736 = vunpack.c.l.b16 %v1608
      %v1737 = vunpack.c.l.b16 %v1609
      %v1738 = vunpack.c.l.b16 %v1610
      %v1739 = vunpack.c.l.b16 %v1611
      %v1740 = vunpack.c.l.b16 %v1612
      %v1741 = vunpack.c.l.b16 %v1613
      %v1742 = vunpack.c.l.b16 %v1614
      %v1743 = vpack.c.b16 %v1680, %v1679
      %v1744 = vpack.c.b16 %v1682, %v1681
      %v1745 = vpack.c.b16 %v1684, %v1683
      %v1746 = vpack.c.b16 %v1686, %v1685
      %v1747 = vpack.c.b16 %v1688, %v1687
      %v1748 = vpack.c.b16 %v1690, %v1689
      %v1749 = vpack.c.b16 %v1692, %v1691
      %v1750 = vpack.c.b16 %v1694, %v1693
      %v1751 = vpack.c.b16 %v1696, %v1695
      %v1752 = vpack.c.b16 %v1698, %v1697
      %v1753 = vpack.c.b16 %v1700, %v1699
      %v1754 = vpack.c.b16 %v1702, %v1701
      %v1755 = vpack.c.b16 %v1704, %v1703
      %v1756 = vpack.c.b16 %v1706, %v1705
      %v1757 = vpack.c.b16 %v1708, %v1707
      %v1758 = vpack.c.b16 %v1710, %v1709
      %v1759 = vpack.c.b16 %v1712, %v1711
      %v1760 = vpack.c.b16 %v1714, %v1713
      %v1761 = vpack.c.b16 %v1716, %v1715
      %v1762 = vpack.c.b16 %v1718, %v1717
      %v1763 = vpack.c.b16 %v1720, %v1719
      %v1764 = vpack.c.b16 %v1722, %v1721
      %v1765 = vpack.c.b16 %v1724, %v1723
      %v1766 = vpack.c.b16 %v1726, %v1725
      %v1767 = vpack.c.b16 %v1728, %v1727
      %v1768 = vpack.c.b16 %v1730, %v1729
      %v1769 = vpack.c.b16 %v1732, %v1731
      %v1770 = vpack.c.b16 %v1734, %v1733
      %v1771 = vpack.c.b16 %v1736, %v1735
      %v1772 = vpack.c.b16 %v1738, %v1737
      %v1773 = vpack.c.b16 %v1740, %v1739
      %v1774 = vpack.c.b16 %v1742, %v1741
      %1807 = vmatprep.subr.bf16.mxu0 0
      %1808 = vmatpush1.bf16.msra.mxu0 %v1750
      %1809 = vmatprep.subr.bf16.mxu0 0
      %1810 = vmatpush1.bf16.msra.mxu0 %v1749
      %1811 = vmatprep.subr.bf16.mxu0 0
      %1812 = vmatpush1.bf16.msra.mxu0 %v1748
      %1813 = vmatprep.subr.bf16.mxu0 0
      %1814 = vmatpush1.bf16.msra.mxu0 %v1747
      %1815 = vmatprep.subr.bf16.mxu0 0
      %1816 = vmatpush1.bf16.msra.mxu0 %v1746
      %1817 = vmatprep.subr.bf16.mxu0 0
      %1818 = vmatpush1.bf16.msra.mxu0 %v1745
      %1819 = vmatprep.subr.bf16.mxu0 0
      %1820 = vmatpush1.bf16.msra.mxu0 %v1744
      %1821 = vmatprep.subr.bf16.mxu0 0
      %1822 = vmatpush1.bf16.msra.mxu0 %v1743
      %1823 = vmatprep.subr.bf16.mxu0 0
      %1824 = vmatpush2.bf16.msra.mxu0 %v1758
      %1825 = vmatprep.subr.bf16.mxu0 0
      %1826 = vmatpush2.bf16.msra.mxu0 %v1757
      %1827 = vmatprep.subr.bf16.mxu0 0
      %1828 = vmatpush2.bf16.msra.mxu0 %v1756
      %1829 = vmatprep.subr.bf16.mxu0 0
      %1830 = vmatpush2.bf16.msra.mxu0 %v1755
      %1831 = vmatprep.subr.bf16.mxu0 0
      %1832 = vmatpush2.bf16.msra.mxu0 %v1754
      %1833 = vmatprep.subr.bf16.mxu0 0
      %1834 = vmatpush2.bf16.msra.mxu0 %v1753
      %1835 = vmatprep.subr.bf16.mxu0 0
      %1836 = vmatpush2.bf16.msra.mxu0 %v1752
      %1837 = vmatprep.subr.bf16.mxu0 0
      %1838 = vmatpush2.bf16.msra.mxu0 %v1751
      %1839 = vmatprep.mubr.bf16.mxu0 %v304
      %1840 = vmatmul.mubr.bf16.gmra.mxu0 %v292
      %v1841 = vpop.f32.mrf.mxu0
      %v1842 = vadd.f32 0.0, %v1841
      %v1843 = vpop.f32.mrf.mxu0
      %v1844 = vpop.f32.mrf.mxu0
      %v1845 = vadd.f32 0.0, %v1844
      %v1846 = vpop.f32.mrf.mxu0
      %1847 = vmatprep.mubr.bf16.mxu0 %v316
      %1848 = vmatmul.mubr.bf16.gmra.mxu0 %v304
      %v1849 = vpop.f32.mrf.mxu0
      %v1850 = vadd.f32 0.0, %v1849
      %v1851 = vpop.f32.mrf.mxu0
      %v1852 = vpop.f32.mrf.mxu0
      %v1853 = vadd.f32 0.0, %v1852
      %v1854 = vpop.f32.mrf.mxu0
      %1855 = vmatprep.mubr.bf16.mxu0 %v328
      %1856 = vmatmul.mubr.bf16.gmra.mxu0 %v316
      %v1857 = vpop.f32.mrf.mxu0
      %v1858 = vadd.f32 0.0, %v1857
      %v1859 = vpop.f32.mrf.mxu0
      %v1860 = vpop.f32.mrf.mxu0
      %v1861 = vadd.f32 0.0, %v1860
      %v1862 = vpop.f32.mrf.mxu0
      %1863 = vmatprep.mubr.bf16.mxu0 %v340
      %1864 = vmatmul.mubr.bf16.gmra.mxu0 %v328
      %v1865 = vpop.f32.mrf.mxu0
      %v1866 = vadd.f32 0.0, %v1865
      %v1867 = vpop.f32.mrf.mxu0
      %v1868 = vpop.f32.mrf.mxu0
      %v1869 = vadd.f32 0.0, %v1868
      %v1870 = vpop.f32.mrf.mxu0
      %1871 = vmatprep.mubr.bf16.mxu0 %v360
      %1872 = vmatmul.mubr.bf16.gmra.mxu0 %v340
      %v1873 = vpop.f32.mrf.mxu0
      %v1874 = vadd.f32 0.0, %v1873
      %v1875 = vpop.f32.mrf.mxu0
      %v1876 = vpop.f32.mrf.mxu0
      %v1877 = vadd.f32 0.0, %v1876
      %v1878 = vpop.f32.mrf.mxu0
      %1879 = vdwg.mxu0
      %1880 = vmatprep.subr.bf16.mxu0 0
      %1881 = vmatpush1.bf16.msra.mxu0 %v1766
      %1882 = vmatprep.subr.bf16.mxu0 0
      %1883 = vmatpush1.bf16.msra.mxu0 %v1765
      %1884 = vmatprep.subr.bf16.mxu0 0
      %1885 = vmatpush1.bf16.msra.mxu0 %v1764
      %1886 = vmatprep.subr.bf16.mxu0 0
      %1887 = vmatpush1.bf16.msra.mxu0 %v1763
      %1888 = vmatprep.subr.bf16.mxu0 0
      %1889 = vmatpush1.bf16.msra.mxu0 %v1762
      %1890 = vmatprep.subr.bf16.mxu0 0
      %1891 = vmatpush1.bf16.msra.mxu0 %v1761
      %1892 = vmatprep.subr.bf16.mxu0 0
      %1893 = vmatpush1.bf16.msra.mxu0 %v1760
      %1894 = vmatprep.subr.bf16.mxu0 0
      %1895 = vmatpush1.bf16.msra.mxu0 %v1759
      %1896 = vmatprep.subr.bf16.mxu0 0
      %1897 = vmatpush2.bf16.msra.mxu0 %v1774
      %1898 = vmatprep.subr.bf16.mxu0 0
      %1899 = vmatpush2.bf16.msra.mxu0 %v1773
      %1900 = vmatprep.subr.bf16.mxu0 0
      %1901 = vmatpush2.bf16.msra.mxu0 %v1772
      %1902 = vmatprep.subr.bf16.mxu0 0
      %1903 = vmatpush2.bf16.msra.mxu0 %v1771
      %1904 = vmatprep.subr.bf16.mxu0 0
      %1905 = vmatpush2.bf16.msra.mxu0 %v1770
      %1906 = vmatprep.subr.bf16.mxu0 0
      %1907 = vmatpush2.bf16.msra.mxu0 %v1769
      %1908 = vmatprep.subr.bf16.mxu0 0
      %1909 = vmatpush2.bf16.msra.mxu0 %v1768
      %1910 = vmatprep.subr.bf16.mxu0 0
      %1911 = vmatpush2.bf16.msra.mxu0 %v1767
      %1912 = vmatprep.mubr.bf16.mxu0 %v368
      %1913 = vmatmul.mubr.bf16.gmra.mxu0 %v365
      %v1914 = vpop.f32.mrf.mxu0
      %v1915 = vadd.f32 %v1842, %v1914
      %v1916 = vpop.f32.mrf.mxu0
      %v1917 = vpop.f32.mrf.mxu0
      %v1918 = vadd.f32 %v1845, %v1917
      %v1919 = vpop.f32.mrf.mxu0
      %1920 = vmatprep.mubr.bf16.mxu0 %v371
      %1921 = vmatmul.mubr.bf16.gmra.mxu0 %v368
      %v1922 = vpop.f32.mrf.mxu0
      %v1923 = vadd.f32 %v1850, %v1922
      %v1924 = vpop.f32.mrf.mxu0
      %v1925 = vpop.f32.mrf.mxu0
      %v1926 = vadd.f32 %v1853, %v1925
      %v1927 = vpop.f32.mrf.mxu0
      %1928 = vmatprep.mubr.bf16.mxu0 %v374
      %1929 = vmatmul.mubr.bf16.gmra.mxu0 %v371
      %v1930 = vpop.f32.mrf.mxu0
      %v1931 = vadd.f32 %v1858, %v1930
      %v1932 = vpop.f32.mrf.mxu0
      %v1933 = vpop.f32.mrf.mxu0
      %v1934 = vadd.f32 %v1861, %v1933
      %v1935 = vpop.f32.mrf.mxu0
      %1936 = vmatprep.mubr.bf16.mxu0 %v377
      %1937 = vmatmul.mubr.bf16.gmra.mxu0 %v374
      %v1938 = vpop.f32.mrf.mxu0
      %v1939 = vadd.f32 %v1866, %v1938
      %v1940 = vpop.f32.mrf.mxu0
      %v1941 = vpop.f32.mrf.mxu0
      %v1942 = vadd.f32 %v1869, %v1941
      %v1943 = vpop.f32.mrf.mxu0
      %1944 = vmatprep.mubr.bf16.mxu0 %v385
      %1945 = vmatmul.mubr.bf16.gmra.mxu0 %v377
      %v1946 = vpop.f32.mrf.mxu0
      %v1947 = vadd.f32 %v1874, %v1946
      %v1948 = vpop.f32.mrf.mxu0
      %v1949 = vpop.f32.mrf.mxu0
      %v1950 = vadd.f32 %v1877, %v1949
      %v1951 = vpop.f32.mrf.mxu0
      %1952 = vdwg.mxu0
      %v1953 = vmax.f32 %v1915, 0.0
      %v1954 = vmax.f32 %v1918, 0.0
      %v1955 = vmax.f32 %v1923, 0.0
      %v1956 = vmax.f32 %v1926, 0.0
      %v1957 = vmax.f32 %v1931, 0.0
      %v1958 = vmax.f32 %v1934, 0.0
      %v1959 = vmax.f32 %v1939, 0.0
      %v1960 = vmax.f32 %v1942, 0.0
      %v1961 = vmax.f32 %v1947, 0.0
      %v1962 = vmax.f32 %v1950, 0.0
      %v1963 = vpack.c.bf16 %v1954, %v1953
      %v1964 = vpack.c.bf16 %v1956, %v1955
      %v1965 = vpack.c.bf16 %v1958, %v1957
      %v1966 = vpack.c.bf16 %v1960, %v1959
      %v1967 = vpack.c.bf16 %v1962, %v1961
      %s1968 = scalar_lea.vmem %s1, 768
      %v1969 = vld [vmem:[%s1968] sm:$0xf]
      %v1970 = vld [vmem:[%s1968 + $0x4] sm:$0xf]
      %v1971 = vld [vmem:[%s1968 + $0x8] sm:$0xf]
      %v1972 = vld [vmem:[%s1968 + $0xc] sm:$0xf]
      %v1973 = vld [vmem:[%s1968 + $0x10] sm:$0xf]
      %v1974 = vld [vmem:[%s1968 + $0x14] sm:$0xf]
      %v1975 = vld [vmem:[%s1968 + $0x18] sm:$0xf]
      %v1976 = vld [vmem:[%s1968 + $0x1c] sm:$0xf]
      %v1977 = vld [vmem:[%s1968 + $0x20] sm:$0xf]
      %v1978 = vld [vmem:[%s1968 + $0x24] sm:$0xf]
      %v1979 = vld [vmem:[%s1968 + $0x28] sm:$0xf]
      %v1980 = vld [vmem:[%s1968 + $0x2c] sm:$0xf]
      %v1981 = vld [vmem:[%s1968 + $0x30] sm:$0xf]
      %v1982 = vld [vmem:[%s1968 + $0x34] sm:$0xf]
      %v1983 = vld [vmem:[%s1968 + $0x38] sm:$0xf]
      %v1984 = vld [vmem:[%s1968 + $0x3c] sm:$0xf]
      %v1985 = vld [vmem:[%s1968 + $0x40] sm:$0xf]
      %v1986 = vld [vmem:[%s1968 + $0x44] sm:$0xf]
      %v1987 = vld [vmem:[%s1968 + $0x48] sm:$0xf]
      %v1988 = vld [vmem:[%s1968 + $0x4c] sm:$0xf]
      %v1989 = vld [vmem:[%s1968 + $0x50] sm:$0xf]
      %v1990 = vld [vmem:[%s1968 + $0x54] sm:$0xf]
      %v1991 = vld [vmem:[%s1968 + $0x58] sm:$0xf]
      %v1992 = vld [vmem:[%s1968 + $0x5c] sm:$0xf]
      %v1993 = vld [vmem:[%s1968 + $0x60] sm:$0xf]
      %v1994 = vld [vmem:[%s1968 + $0x64] sm:$0xf]
      %v1995 = vld [vmem:[%s1968 + $0x68] sm:$0xf]
      %v1996 = vld [vmem:[%s1968 + $0x6c] sm:$0xf]
      %v1997 = vld [vmem:[%s1968 + $0x70] sm:$0xf]
      %v1998 = vld [vmem:[%s1968 + $0x74] sm:$0xf]
      %v1999 = vld [vmem:[%s1968 + $0x78] sm:$0xf]
      %v2000 = vld [vmem:[%s1968 + $0x7c] sm:$0xf]
      %v2001 = vld [vmem:[%s1968 + $0x80] sm:$0xf]
      %v2002 = vld [vmem:[%s1968 + $0x84] sm:$0xf]
      %v2003 = vld [vmem:[%s1968 + $0x88] sm:$0xf]
      %v2004 = vld [vmem:[%s1968 + $0x8c] sm:$0xf]
      %v2005 = vld [vmem:[%s1968 + $0x90] sm:$0xf]
      %v2006 = vld [vmem:[%s1968 + $0x94] sm:$0xf]
      %v2007 = vld [vmem:[%s1968 + $0x98] sm:$0xf]
      %v2008 = vld [vmem:[%s1968 + $0x9c] sm:$0xf]
      %v2009 = vld [vmem:[%s1968 + $0xa0] sm:$0xf]
      %v2010 = vld [vmem:[%s1968 + $0xa4] sm:$0xf]
      %v2011 = vld [vmem:[%s1968 + $0xa8] sm:$0xf]
      %v2012 = vld [vmem:[%s1968 + $0xac] sm:$0xf]
      %v2013 = vld [vmem:[%s1968 + $0xb0] sm:$0xf]
      %v2014 = vld [vmem:[%s1968 + $0xb4] sm:$0xf]
      %v2015 = vld [vmem:[%s1968 + $0xb8] sm:$0xf]
      %v2016 = vld [vmem:[%s1968 + $0xbc] sm:$0xf]
      %v2017 = vld [vmem:[%s1968 + $0xc0] sm:$0xf]
      %v2018 = vld [vmem:[%s1968 + $0xc4] sm:$0xf]
      %v2019 = vld [vmem:[%s1968 + $0xc8] sm:$0xf]
      %v2020 = vld [vmem:[%s1968 + $0xcc] sm:$0xf]
      %v2021 = vld [vmem:[%s1968 + $0xd0] sm:$0xf]
      %v2022 = vld [vmem:[%s1968 + $0xd4] sm:$0xf]
      %v2023 = vld [vmem:[%s1968 + $0xd8] sm:$0xf]
      %v2024 = vld [vmem:[%s1968 + $0xdc] sm:$0xf]
      %v2025 = vld [vmem:[%s1968 + $0xe0] sm:$0xf]
      %v2026 = vld [vmem:[%s1968 + $0xe4] sm:$0xf]
      %v2027 = vld [vmem:[%s1968 + $0xe8] sm:$0xf]
      %v2028 = vld [vmem:[%s1968 + $0xec] sm:$0xf]
      %v2029 = vld [vmem:[%s1968 + $0xf0] sm:$0xf]
      %v2030 = vld [vmem:[%s1968 + $0xf4] sm:$0xf]
      %v2031 = vld [vmem:[%s1968 + $0xf8] sm:$0xf]
      %v2032 = vld [vmem:[%s1968 + $0xfc] sm:$0xf]
      %v2097 = vunpack.c.l.b16 %v1969
      %v2098 = vunpack.c.l.b16 %v1970
      %v2099 = vunpack.c.l.b16 %v1971
      %v2100 = vunpack.c.l.b16 %v1972
      %v2101 = vunpack.c.l.b16 %v1973
      %v2102 = vunpack.c.l.b16 %v1974
      %v2103 = vunpack.c.l.b16 %v1975
      %v2104 = vunpack.c.l.b16 %v1976
      %v2105 = vunpack.c.l.b16 %v1977
      %v2106 = vunpack.c.l.b16 %v1978
      %v2107 = vunpack.c.l.b16 %v1979
      %v2108 = vunpack.c.l.b16 %v1980
      %v2109 = vunpack.c.l.b16 %v1981
      %v2110 = vunpack.c.l.b16 %v1982
      %v2111 = vunpack.c.l.b16 %v1983
      %v2112 = vunpack.c.l.b16 %v1984
      %v2113 = vunpack.c.l.b16 %v1985
      %v2114 = vunpack.c.l.b16 %v1986
      %v2115 = vunpack.c.l.b16 %v1987
      %v2116 = vunpack.c.l.b16 %v1988
      %v2117 = vunpack.c.l.b16 %v1989
      %v2118 = vunpack.c.l.b16 %v1990
      %v2119 = vunpack.c.l.b16 %v1991
      %v2120 = vunpack.c.l.b16 %v1992
      %v2121 = vunpack.c.l.b16 %v1993
      %v2122 = vunpack.c.l.b16 %v1994
      %v2123 = vunpack.c.l.b16 %v1995
      %v2124 = vunpack.c.l.b16 %v1996
      %v2125 = vunpack.c.l.b16 %v1997
      %v2126 = vunpack.c.l.b16 %v1998
      %v2127 = vunpack.c.l.b16 %v1999
      %v2128 = vunpack.c.l.b16 %v2000
      %v2129 = vunpack.c.l.b16 %v2001
      %v2130 = vunpack.c.l.b16 %v2002
      %v2131 = vunpack.c.l.b16 %v2003
      %v2132 = vunpack.c.l.b16 %v2004
      %v2133 = vunpack.c.l.b16 %v2005
      %v2134 = vunpack.c.l.b16 %v2006
      %v2135 = vunpack.c.l.b16 %v2007
      %v2136 = vunpack.c.l.b16 %v2008
      %v2137 = vunpack.c.l.b16 %v2009
      %v2138 = vunpack.c.l.b16 %v2010
      %v2139 = vunpack.c.l.b16 %v2011
      %v2140 = vunpack.c.l.b16 %v2012
      %v2141 = vunpack.c.l.b16 %v2013
      %v2142 = vunpack.c.l.b16 %v2014
      %v2143 = vunpack.c.l.b16 %v2015
      %v2144 = vunpack.c.l.b16 %v2016
      %v2145 = vunpack.c.l.b16 %v2017
      %v2146 = vunpack.c.l.b16 %v2018
      %v2147 = vunpack.c.l.b16 %v2019
      %v2148 = vunpack.c.l.b16 %v2020
      %v2149 = vunpack.c.l.b16 %v2021
      %v2150 = vunpack.c.l.b16 %v2022
      %v2151 = vunpack.c.l.b16 %v2023
      %v2152 = vunpack.c.l.b16 %v2024
      %v2153 = vunpack.c.l.b16 %v2025
      %v2154 = vunpack.c.l.b16 %v2026
      %v2155 = vunpack.c.l.b16 %v2027
      %v2156 = vunpack.c.l.b16 %v2028
      %v2157 = vunpack.c.l.b16 %v2029
      %v2158 = vunpack.c.l.b16 %v2030
      %v2159 = vunpack.c.l.b16 %v2031
      %v2160 = vunpack.c.l.b16 %v2032
      %v2161 = vpack.c.b16 %v2098, %v2097
      %v2162 = vpack.c.b16 %v2100, %v2099
      %v2163 = vpack.c.b16 %v2102, %v2101
      %v2164 = vpack.c.b16 %v2104, %v2103
      %v2165 = vpack.c.b16 %v2106, %v2105
      %v2166 = vpack.c.b16 %v2108, %v2107
      %v2167 = vpack.c.b16 %v2110, %v2109
      %v2168 = vpack.c.b16 %v2112, %v2111
      %v2169 = vpack.c.b16 %v2114, %v2113
      %v2170 = vpack.c.b16 %v2116, %v2115
      %v2171 = vpack.c.b16 %v2118, %v2117
      %v2172 = vpack.c.b16 %v2120, %v2119
      %v2173 = vpack.c.b16 %v2122, %v2121
      %v2174 = vpack.c.b16 %v2124, %v2123
      %v2175 = vpack.c.b16 %v2126, %v2125
      %v2176 = vpack.c.b16 %v2128, %v2127
      %v2177 = vpack.c.b16 %v2130, %v2129
      %v2178 = vpack.c.b16 %v2132, %v2131
      %v2179 = vpack.c.b16 %v2134, %v2133
      %v2180 = vpack.c.b16 %v2136, %v2135
      %v2181 = vpack.c.b16 %v2138, %v2137
      %v2182 = vpack.c.b16 %v2140, %v2139
      %v2183 = vpack.c.b16 %v2142, %v2141
      %v2184 = vpack.c.b16 %v2144, %v2143
      %v2185 = vpack.c.b16 %v2146, %v2145
      %v2186 = vpack.c.b16 %v2148, %v2147
      %v2187 = vpack.c.b16 %v2150, %v2149
      %v2188 = vpack.c.b16 %v2152, %v2151
      %v2189 = vpack.c.b16 %v2154, %v2153
      %v2190 = vpack.c.b16 %v2156, %v2155
      %v2191 = vpack.c.b16 %v2158, %v2157
      %v2192 = vpack.c.b16 %v2160, %v2159
      %2225 = vmatprep.subr.bf16.mxu0 0
      %2226 = vmatpush1.bf16.msra.mxu0 %v2168
      %2227 = vmatprep.subr.bf16.mxu0 0
      %2228 = vmatpush1.bf16.msra.mxu0 %v2167
      %2229 = vmatprep.subr.bf16.mxu0 0
      %2230 = vmatpush1.bf16.msra.mxu0 %v2166
      %2231 = vmatprep.subr.bf16.mxu0 0
      %2232 = vmatpush1.bf16.msra.mxu0 %v2165
      %2233 = vmatprep.subr.bf16.mxu0 0
      %2234 = vmatpush1.bf16.msra.mxu0 %v2164
      %2235 = vmatprep.subr.bf16.mxu0 0
      %2236 = vmatpush1.bf16.msra.mxu0 %v2163
      %2237 = vmatprep.subr.bf16.mxu0 0
      %2238 = vmatpush1.bf16.msra.mxu0 %v2162
      %2239 = vmatprep.subr.bf16.mxu0 0
      %2240 = vmatpush1.bf16.msra.mxu0 %v2161
      %2241 = vmatprep.subr.bf16.mxu0 0
      %2242 = vmatpush2.bf16.msra.mxu0 %v2176
      %2243 = vmatprep.subr.bf16.mxu0 0
      %2244 = vmatpush2.bf16.msra.mxu0 %v2175
      %2245 = vmatprep.subr.bf16.mxu0 0
      %2246 = vmatpush2.bf16.msra.mxu0 %v2174
      %2247 = vmatprep.subr.bf16.mxu0 0
      %2248 = vmatpush2.bf16.msra.mxu0 %v2173
      %2249 = vmatprep.subr.bf16.mxu0 0
      %2250 = vmatpush2.bf16.msra.mxu0 %v2172
      %2251 = vmatprep.subr.bf16.mxu0 0
      %2252 = vmatpush2.bf16.msra.mxu0 %v2171
      %2253 = vmatprep.subr.bf16.mxu0 0
      %2254 = vmatpush2.bf16.msra.mxu0 %v2170
      %2255 = vmatprep.subr.bf16.mxu0 0
      %2256 = vmatpush2.bf16.msra.mxu0 %v2169
      %2257 = vmatprep.mubr.bf16.mxu0 %v304
      %2258 = vmatmul.mubr.bf16.gmra.mxu0 %v292
      %v2259 = vpop.f32.mrf.mxu0
      %v2260 = vadd.f32 0.0, %v2259
      %v2261 = vpop.f32.mrf.mxu0
      %v2262 = vpop.f32.mrf.mxu0
      %v2263 = vadd.f32 0.0, %v2262
      %v2264 = vpop.f32.mrf.mxu0
      %2265 = vmatprep.mubr.bf16.mxu0 %v316
      %2266 = vmatmul.mubr.bf16.gmra.mxu0 %v304
      %v2267 = vpop.f32.mrf.mxu0
      %v2268 = vadd.f32 0.0, %v2267
      %v2269 = vpop.f32.mrf.mxu0
      %v2270 = vpop.f32.mrf.mxu0
      %v2271 = vadd.f32 0.0, %v2270
      %v2272 = vpop.f32.mrf.mxu0
      %2273 = vmatprep.mubr.bf16.mxu0 %v328
      %2274 = vmatmul.mubr.bf16.gmra.mxu0 %v316
      %v2275 = vpop.f32.mrf.mxu0
      %v2276 = vadd.f32 0.0, %v2275
      %v2277 = vpop.f32.mrf.mxu0
      %v2278 = vpop.f32.mrf.mxu0
      %v2279 = vadd.f32 0.0, %v2278
      %v2280 = vpop.f32.mrf.mxu0
      %2281 = vmatprep.mubr.bf16.mxu0 %v340
      %2282 = vmatmul.mubr.bf16.gmra.mxu0 %v328
      %v2283 = vpop.f32.mrf.mxu0
      %v2284 = vadd.f32 0.0, %v2283
      %v2285 = vpop.f32.mrf.mxu0
      %v2286 = vpop.f32.mrf.mxu0
      %v2287 = vadd.f32 0.0, %v2286
      %v2288 = vpop.f32.mrf.mxu0
      %2289 = vmatprep.mubr.bf16.mxu0 %v360
      %2290 = vmatmul.mubr.bf16.gmra.mxu0 %v340
      %v2291 = vpop.f32.mrf.mxu0
      %v2292 = vadd.f32 0.0, %v2291
      %v2293 = vpop.f32.mrf.mxu0
      %v2294 = vpop.f32.mrf.mxu0
      %v2295 = vadd.f32 0.0, %v2294
      %v2296 = vpop.f32.mrf.mxu0
      %2297 = vdwg.mxu0
      %2298 = vmatprep.subr.bf16.mxu0 0
      %2299 = vmatpush1.bf16.msra.mxu0 %v2184
      %2300 = vmatprep.subr.bf16.mxu0 0
      %2301 = vmatpush1.bf16.msra.mxu0 %v2183
      %2302 = vmatprep.subr.bf16.mxu0 0
      %2303 = vmatpush1.bf16.msra.mxu0 %v2182
      %2304 = vmatprep.subr.bf16.mxu0 0
      %2305 = vmatpush1.bf16.msra.mxu0 %v2181
      %2306 = vmatprep.subr.bf16.mxu0 0
      %2307 = vmatpush1.bf16.msra.mxu0 %v2180
      %2308 = vmatprep.subr.bf16.mxu0 0
      %2309 = vmatpush1.bf16.msra.mxu0 %v2179
      %2310 = vmatprep.subr.bf16.mxu0 0
      %2311 = vmatpush1.bf16.msra.mxu0 %v2178
      %2312 = vmatprep.subr.bf16.mxu0 0
      %2313 = vmatpush1.bf16.msra.mxu0 %v2177
      %2314 = vmatprep.subr.bf16.mxu0 0
      %2315 = vmatpush2.bf16.msra.mxu0 %v2192
      %2316 = vmatprep.subr.bf16.mxu0 0
      %2317 = vmatpush2.bf16.msra.mxu0 %v2191
      %2318 = vmatprep.subr.bf16.mxu0 0
      %2319 = vmatpush2.bf16.msra.mxu0 %v2190
      %2320 = vmatprep.subr.bf16.mxu0 0
      %2321 = vmatpush2.bf16.msra.mxu0 %v2189
      %2322 = vmatprep.subr.bf16.mxu0 0
      %2323 = vmatpush2.bf16.msra.mxu0 %v2188
      %2324 = vmatprep.subr.bf16.mxu0 0
      %2325 = vmatpush2.bf16.msra.mxu0 %v2187
      %2326 = vmatprep.subr.bf16.mxu0 0
      %2327 = vmatpush2.bf16.msra.mxu0 %v2186
      %2328 = vmatprep.subr.bf16.mxu0 0
      %2329 = vmatpush2.bf16.msra.mxu0 %v2185
      %2330 = vmatprep.mubr.bf16.mxu0 %v368
      %2331 = vmatmul.mubr.bf16.gmra.mxu0 %v365
      %v2332 = vpop.f32.mrf.mxu0
      %v2333 = vadd.f32 %v2260, %v2332
      %v2334 = vpop.f32.mrf.mxu0
      %v2335 = vpop.f32.mrf.mxu0
      %v2336 = vadd.f32 %v2263, %v2335
      %v2337 = vpop.f32.mrf.mxu0
      %2338 = vmatprep.mubr.bf16.mxu0 %v371
      %2339 = vmatmul.mubr.bf16.gmra.mxu0 %v368
      %v2340 = vpop.f32.mrf.mxu0
      %v2341 = vadd.f32 %v2268, %v2340
      %v2342 = vpop.f32.mrf.mxu0
      %v2343 = vpop.f32.mrf.mxu0
      %v2344 = vadd.f32 %v2271, %v2343
      %v2345 = vpop.f32.mrf.mxu0
      %2346 = vmatprep.mubr.bf16.mxu0 %v374
      %2347 = vmatmul.mubr.bf16.gmra.mxu0 %v371
      %v2348 = vpop.f32.mrf.mxu0
      %v2349 = vadd.f32 %v2276, %v2348
      %v2350 = vpop.f32.mrf.mxu0
      %v2351 = vpop.f32.mrf.mxu0
      %v2352 = vadd.f32 %v2279, %v2351
      %v2353 = vpop.f32.mrf.mxu0
      %2354 = vmatprep.mubr.bf16.mxu0 %v377
      %2355 = vmatmul.mubr.bf16.gmra.mxu0 %v374
      %v2356 = vpop.f32.mrf.mxu0
      %v2357 = vadd.f32 %v2284, %v2356
      %v2358 = vpop.f32.mrf.mxu0
      %v2359 = vpop.f32.mrf.mxu0
      %v2360 = vadd.f32 %v2287, %v2359
      %v2361 = vpop.f32.mrf.mxu0
      %2362 = vmatprep.mubr.bf16.mxu0 %v385
      %2363 = vmatmul.mubr.bf16.gmra.mxu0 %v377
      %v2364 = vpop.f32.mrf.mxu0
      %v2365 = vadd.f32 %v2292, %v2364
      %v2366 = vpop.f32.mrf.mxu0
      %v2367 = vpop.f32.mrf.mxu0
      %v2368 = vadd.f32 %v2295, %v2367
      %v2369 = vpop.f32.mrf.mxu0
      %2370 = vdwg.mxu0
      %v2371 = vmax.f32 %v2333, 0.0
      %v2372 = vmax.f32 %v2336, 0.0
      %v2373 = vmax.f32 %v2341, 0.0
      %v2374 = vmax.f32 %v2344, 0.0
      %v2375 = vmax.f32 %v2349, 0.0
      %v2376 = vmax.f32 %v2352, 0.0
      %v2377 = vmax.f32 %v2357, 0.0
      %v2378 = vmax.f32 %v2360, 0.0
      %v2379 = vmax.f32 %v2365, 0.0
      %v2380 = vmax.f32 %v2368, 0.0
      %v2381 = vpack.c.bf16 %v2372, %v2371
      %v2382 = vpack.c.bf16 %v2374, %v2373
      %v2383 = vpack.c.bf16 %v2376, %v2375
      %v2384 = vpack.c.bf16 %v2378, %v2377
      %v2385 = vpack.c.bf16 %v2380, %v2379
      %v2396 = vunpack.c.l.b16 %v2381
      %v2397 = vunpack.c.h.b16 %v2381
      %v2398 = vunpack.c.l.b16 %v1963
      %v2399 = vunpack.c.h.b16 %v1963
      %v2400 = vunpack.c.l.b16 %v2382
      %v2401 = vunpack.c.h.b16 %v2382
      %v2402 = vunpack.c.l.b16 %v1964
      %v2403 = vunpack.c.h.b16 %v1964
      %v2404 = vunpack.c.l.b16 %v2383
      %v2405 = vunpack.c.h.b16 %v2383
      %v2406 = vunpack.c.l.b16 %v1965
      %v2407 = vunpack.c.h.b16 %v1965
      %v2408 = vunpack.c.l.b16 %v2384
      %v2409 = vunpack.c.h.b16 %v2384
      %v2410 = vunpack.c.l.b16 %v1966
      %v2411 = vunpack.c.h.b16 %v1966
      %v2412 = vunpack.c.l.b16 %v2385
      %v2413 = vunpack.c.h.b16 %v2385
      %v2414 = vunpack.c.l.b16 %v1967
      %v2415 = vunpack.c.h.b16 %v1967
      %v2416 = vpack.c.b16 %v2396, %v2396
      %v2417 = vpack.c.b16 %v2397, %v2397
      %v2418 = vpack.c.b16 %v2398, %v2398
      %v2419 = vpack.c.b16 %v2399, %v2399
      %v2420 = vpack.c.b16 %v2400, %v2400
      %v2421 = vpack.c.b16 %v2401, %v2401
      %v2422 = vpack.c.b16 %v2402, %v2402
      %v2423 = vpack.c.b16 %v2403, %v2403
      %v2424 = vpack.c.b16 %v2404, %v2404
      %v2425 = vpack.c.b16 %v2405, %v2405
      %v2426 = vpack.c.b16 %v2406, %v2406
      %v2427 = vpack.c.b16 %v2407, %v2407
      %v2428 = vpack.c.b16 %v2408, %v2408
      %v2429 = vpack.c.b16 %v2409, %v2409
      %v2430 = vpack.c.b16 %v2410, %v2410
      %v2431 = vpack.c.b16 %v2411, %v2411
      %v2432 = vpack.c.b16 %v2412, %v2412
      %v2433 = vpack.c.b16 %v2413, %v2413
      %v2434 = vpack.c.b16 %v2414, %v2414
      %v2435 = vpack.c.b16 %v2415, %v2415
      %v2437 = vshrl.u32 %v2416, 16
      %v2439 = vrot.slane %v2437, 7
      %v2440 = vshll.u32 %v2416, 16
      %v2442 = vor.u32 %v2439, %v2440
      %v2443 = vrot.slane %v2439, 4
      %v2445 = vshrl.u32 %v2417, 16
      %v2447 = vrot.slane %v2445, 7
      %v2448 = vshll.u32 %v2417, 16
      %v2450 = vor.u32 %v2447, %v2448
      %v2451 = vsel %vm1274, %v2443, %v2450
      %v2452 = vrot.slane %v2447, 4
      %v2454 = vshrl.u32 %v2418, 16
      %v2456 = vrot.slane %v2454, 7
      %v2457 = vshll.u32 %v2418, 16
      %v2459 = vor.u32 %v2456, %v2457
      %v2460 = vrot.slane %v2456, 4
      %v2462 = vshrl.u32 %v2419, 16
      %v2464 = vrot.slane %v2462, 7
      %v2465 = vshll.u32 %v2419, 16
      %v2467 = vor.u32 %v2464, %v2465
      %v2468 = vsel %vm1274, %v2460, %v2467
      %v2469 = vrot.slane %v2464, 4
      %v2471 = vshrl.u32 %v2420, 16
      %v2473 = vrot.slane %v2471, 7
      %v2474 = vshll.u32 %v2420, 16
      %v2476 = vor.u32 %v2473, %v2474
      %v2477 = vrot.slane %v2473, 4
      %v2479 = vshrl.u32 %v2421, 16
      %v2481 = vrot.slane %v2479, 7
      %v2482 = vshll.u32 %v2421, 16
      %v2484 = vor.u32 %v2481, %v2482
      %v2485 = vsel %vm1274, %v2477, %v2484
      %v2486 = vrot.slane %v2481, 4
      %v2488 = vshrl.u32 %v2422, 16
      %v2490 = vrot.slane %v2488, 7
      %v2491 = vshll.u32 %v2422, 16
      %v2493 = vor.u32 %v2490, %v2491
      %v2494 = vrot.slane %v2490, 4
      %v2496 = vshrl.u32 %v2423, 16
      %v2498 = vrot.slane %v2496, 7
      %v2499 = vshll.u32 %v2423, 16
      %v2501 = vor.u32 %v2498, %v2499
      %v2502 = vsel %vm1274, %v2494, %v2501
      %v2503 = vrot.slane %v2498, 4
      %v2505 = vshrl.u32 %v2424, 16
      %v2507 = vrot.slane %v2505, 7
      %v2508 = vshll.u32 %v2424, 16
      %v2510 = vor.u32 %v2507, %v2508
      %v2511 = vrot.slane %v2507, 4
      %v2513 = vshrl.u32 %v2425, 16
      %v2515 = vrot.slane %v2513, 7
      %v2516 = vshll.u32 %v2425, 16
      %v2518 = vor.u32 %v2515, %v2516
      %v2519 = vsel %vm1274, %v2511, %v2518
      %v2520 = vrot.slane %v2515, 4
      %v2522 = vshrl.u32 %v2426, 16
      %v2524 = vrot.slane %v2522, 7
      %v2525 = vshll.u32 %v2426, 16
      %v2527 = vor.u32 %v2524, %v2525
      %v2528 = vrot.slane %v2524, 4
      %v2530 = vshrl.u32 %v2427, 16
      %v2532 = vrot.slane %v2530, 7
      %v2533 = vshll.u32 %v2427, 16
      %v2535 = vor.u32 %v2532, %v2533
      %v2536 = vsel %vm1274, %v2528, %v2535
      %v2537 = vrot.slane %v2532, 4
      %v2539 = vshrl.u32 %v2428, 16
      %v2541 = vrot.slane %v2539, 7
      %v2542 = vshll.u32 %v2428, 16
      %v2544 = vor.u32 %v2541, %v2542
      %v2545 = vrot.slane %v2541, 4
      %v2547 = vshrl.u32 %v2429, 16
      %v2549 = vrot.slane %v2547, 7
      %v2550 = vshll.u32 %v2429, 16
      %v2552 = vor.u32 %v2549, %v2550
      %v2553 = vsel %vm1274, %v2545, %v2552
      %v2554 = vrot.slane %v2549, 4
      %v2556 = vshrl.u32 %v2430, 16
      %v2558 = vrot.slane %v2556, 7
      %v2559 = vshll.u32 %v2430, 16
      %v2561 = vor.u32 %v2558, %v2559
      %v2562 = vrot.slane %v2558, 4
      %v2564 = vshrl.u32 %v2431, 16
      %v2566 = vrot.slane %v2564, 7
      %v2567 = vshll.u32 %v2431, 16
      %v2569 = vor.u32 %v2566, %v2567
      %v2570 = vsel %vm1274, %v2562, %v2569
      %v2571 = vrot.slane %v2566, 4
      %v2573 = vshrl.u32 %v2432, 16
      %v2575 = vrot.slane %v2573, 7
      %v2576 = vshll.u32 %v2432, 16
      %v2578 = vor.u32 %v2575, %v2576
      %v2579 = vrot.slane %v2575, 4
      %v2581 = vshrl.u32 %v2433, 16
      %v2583 = vrot.slane %v2581, 7
      %v2584 = vshll.u32 %v2433, 16
      %v2586 = vor.u32 %v2583, %v2584
      %v2587 = vsel %vm1274, %v2579, %v2586
      %v2588 = vrot.slane %v2583, 4
      %v2590 = vshrl.u32 %v2434, 16
      %v2592 = vrot.slane %v2590, 7
      %v2593 = vshll.u32 %v2434, 16
      %v2595 = vor.u32 %v2592, %v2593
      %v2596 = vrot.slane %v2592, 4
      %v2598 = vshrl.u32 %v2435, 16
      %v2600 = vrot.slane %v2598, 7
      %v2601 = vshll.u32 %v2435, 16
      %v2603 = vor.u32 %v2600, %v2601
      %v2604 = vsel %vm1274, %v2596, %v2603
      %v2605 = vrot.slane %v2600, 4
      %v2636 = vld [vmem:[#allocation3] sm:$0xf]
      %v2637 = vsel %vm1477, %v2442, %v2636
      %2638 = vst [vmem:[#allocation3] sm:$0xf] %v2637
      %2639 = vst [vmem:[#allocation3 + $0x4] sm:$0xf] %v2451
      %v2640 = vld [vmem:[#allocation3 + $0x8] sm:$0x1]
      %v2641 = vsel %vm1483, %v2452, %v2640
      %2642 = vst [vmem:[#allocation3 + $0x8] sm:$0x1] %v2641
      %v2643 = vld [vmem:[#allocation3 + $0xc] sm:$0xf]
      %v2644 = vsel %vm1477, %v2459, %v2643
      %2645 = vst [vmem:[#allocation3 + $0xc] sm:$0xf] %v2644
      %2646 = vst [vmem:[#allocation3 + $0x10] sm:$0xf] %v2468
      %v2647 = vld [vmem:[#allocation3 + $0x14] sm:$0x1]
      %v2648 = vsel %vm1483, %v2469, %v2647
      %2649 = vst [vmem:[#allocation3 + $0x14] sm:$0x1] %v2648
      %v2650 = vld [vmem:[#allocation3 + $0x18] sm:$0xf]
      %v2651 = vsel %vm1477, %v2476, %v2650
      %2652 = vst [vmem:[#allocation3 + $0x18] sm:$0xf] %v2651
      %2653 = vst [vmem:[#allocation3 + $0x1c] sm:$0xf] %v2485
      %v2654 = vld [vmem:[#allocation3 + $0x20] sm:$0x1]
      %v2655 = vsel %vm1483, %v2486, %v2654
      %2656 = vst [vmem:[#allocation3 + $0x20] sm:$0x1] %v2655
      %v2657 = vld [vmem:[#allocation3 + $0x24] sm:$0xf]
      %v2658 = vsel %vm1477, %v2493, %v2657
      %2659 = vst [vmem:[#allocation3 + $0x24] sm:$0xf] %v2658
      %2660 = vst [vmem:[#allocation3 + $0x28] sm:$0xf] %v2502
      %v2661 = vld [vmem:[#allocation3 + $0x2c] sm:$0x1]
      %v2662 = vsel %vm1483, %v2503, %v2661
      %2663 = vst [vmem:[#allocation3 + $0x2c] sm:$0x1] %v2662
      %v2664 = vld [vmem:[#allocation3 + $0x30] sm:$0xf]
      %v2665 = vsel %vm1477, %v2510, %v2664
      %2666 = vst [vmem:[#allocation3 + $0x30] sm:$0xf] %v2665
      %2667 = vst [vmem:[#allocation3 + $0x34] sm:$0xf] %v2519
      %v2668 = vld [vmem:[#allocation3 + $0x38] sm:$0x1]
      %v2669 = vsel %vm1483, %v2520, %v2668
      %2670 = vst [vmem:[#allocation3 + $0x38] sm:$0x1] %v2669
      %v2671 = vld [vmem:[#allocation3 + $0x3c] sm:$0xf]
      %v2672 = vsel %vm1477, %v2527, %v2671
      %2673 = vst [vmem:[#allocation3 + $0x3c] sm:$0xf] %v2672
      %2674 = vst [vmem:[#allocation3 + $0x40] sm:$0xf] %v2536
      %v2675 = vld [vmem:[#allocation3 + $0x44] sm:$0x1]
      %v2676 = vsel %vm1483, %v2537, %v2675
      %2677 = vst [vmem:[#allocation3 + $0x44] sm:$0x1] %v2676
      %v2678 = vld [vmem:[#allocation3 + $0x48] sm:$0xf]
      %v2679 = vsel %vm1477, %v2544, %v2678
      %2680 = vst [vmem:[#allocation3 + $0x48] sm:$0xf] %v2679
      %2681 = vst [vmem:[#allocation3 + $0x4c] sm:$0xf] %v2553
      %v2682 = vld [vmem:[#allocation3 + $0x50] sm:$0x1]
      %v2683 = vsel %vm1483, %v2554, %v2682
      %2684 = vst [vmem:[#allocation3 + $0x50] sm:$0x1] %v2683
      %v2685 = vld [vmem:[#allocation3 + $0x54] sm:$0xf]
      %v2686 = vsel %vm1477, %v2561, %v2685
      %2687 = vst [vmem:[#allocation3 + $0x54] sm:$0xf] %v2686
      %2688 = vst [vmem:[#allocation3 + $0x58] sm:$0xf] %v2570
      %v2689 = vld [vmem:[#allocation3 + $0x5c] sm:$0x1]
      %v2690 = vsel %vm1483, %v2571, %v2689
      %2691 = vst [vmem:[#allocation3 + $0x5c] sm:$0x1] %v2690
      %v2692 = vld [vmem:[#allocation3 + $0x60] sm:$0xf]
      %v2693 = vsel %vm1477, %v2578, %v2692
      %2694 = vst [vmem:[#allocation3 + $0x60] sm:$0xf] %v2693
      %2695 = vst [vmem:[#allocation3 + $0x64] sm:$0xf] %v2587
      %v2696 = vld [vmem:[#allocation3 + $0x68] sm:$0x1]
      %v2697 = vsel %vm1483, %v2588, %v2696
      %2698 = vst [vmem:[#allocation3 + $0x68] sm:$0x1] %v2697
      %v2699 = vld [vmem:[#allocation3 + $0x6c] sm:$0xf]
      %v2700 = vsel %vm1477, %v2595, %v2699
      %2701 = vst [vmem:[#allocation3 + $0x6c] sm:$0xf] %v2700
      %2702 = vst [vmem:[#allocation3 + $0x70] sm:$0xf] %v2604
      %v2703 = vld [vmem:[#allocation3 + $0x74] sm:$0x1]
      %v2704 = vsel %vm1483, %v2605, %v2703
      %2705 = vst [vmem:[#allocation3 + $0x74] sm:$0x1] %v2704
      %v2706 = vld [vmem:[#allocation3] sm:$0x1]
      %v2707 = vsel %vm1483, 0, %v2706
      %2708 = vst [vmem:[#allocation3] sm:$0x1] %v2707
      %v2709 = vld [vmem:[#allocation3 + $0xc] sm:$0x1]
      %v2710 = vsel %vm1483, 0, %v2709
      %2711 = vst [vmem:[#allocation3 + $0xc] sm:$0x1] %v2710
      %v2712 = vld [vmem:[#allocation3 + $0x18] sm:$0x1]
      %v2713 = vsel %vm1483, 0, %v2712
      %2714 = vst [vmem:[#allocation3 + $0x18] sm:$0x1] %v2713
      %v2715 = vld [vmem:[#allocation3 + $0x24] sm:$0x1]
      %v2716 = vsel %vm1483, 0, %v2715
      %2717 = vst [vmem:[#allocation3 + $0x24] sm:$0x1] %v2716
      %v2718 = vld [vmem:[#allocation3 + $0x30] sm:$0x1]
      %v2719 = vsel %vm1483, 0, %v2718
      %2720 = vst [vmem:[#allocation3 + $0x30] sm:$0x1] %v2719
      %v2721 = vld [vmem:[#allocation3 + $0x3c] sm:$0x1]
      %v2722 = vsel %vm1483, 0, %v2721
      %2723 = vst [vmem:[#allocation3 + $0x3c] sm:$0x1] %v2722
      %v2724 = vld [vmem:[#allocation3 + $0x48] sm:$0x1]
      %v2725 = vsel %vm1483, 0, %v2724
      %2726 = vst [vmem:[#allocation3 + $0x48] sm:$0x1] %v2725
      %v2727 = vld [vmem:[#allocation3 + $0x54] sm:$0x1]
      %v2728 = vsel %vm1483, 0, %v2727
      %2729 = vst [vmem:[#allocation3 + $0x54] sm:$0x1] %v2728
      %v2730 = vld [vmem:[#allocation3 + $0x60] sm:$0x1]
      %v2731 = vsel %vm1483, 0, %v2730
      %2732 = vst [vmem:[#allocation3 + $0x60] sm:$0x1] %v2731
      %v2733 = vld [vmem:[#allocation3 + $0x6c] sm:$0x1]
      %v2734 = vsel %vm1483, 0, %v2733
      %2735 = vst [vmem:[#allocation3 + $0x6c] sm:$0x1] %v2734
      %vm2736 = vmand %vm1482, %vm1476
      %v2737 = vld [vmem:[#allocation2 + $0x8] sm:$0x1]
      %v2738 = vsel %vm2736, 0, %v2737
      %2739 = vst [vmem:[#allocation2 + $0x8] sm:$0x1] %v2738
      %v2740 = vld [vmem:[#allocation2 + $0x14] sm:$0x1]
      %v2741 = vsel %vm2736, 0, %v2740
      %2742 = vst [vmem:[#allocation2 + $0x14] sm:$0x1] %v2741
      %v2743 = vld [vmem:[#allocation2 + $0x20] sm:$0x1]
      %v2744 = vsel %vm2736, 0, %v2743
      %2745 = vst [vmem:[#allocation2 + $0x20] sm:$0x1] %v2744
      %v2746 = vld [vmem:[#allocation2 + $0x2c] sm:$0x1]
      %v2747 = vsel %vm2736, 0, %v2746
      %2748 = vst [vmem:[#allocation2 + $0x2c] sm:$0x1] %v2747
      %v2749 = vld [vmem:[#allocation2 + $0x38] sm:$0x1]
      %v2750 = vsel %vm2736, 0, %v2749
      %2751 = vst [vmem:[#allocation2 + $0x38] sm:$0x1] %v2750
      %v2752 = vld [vmem:[#allocation2 + $0x44] sm:$0x1]
      %v2753 = vsel %vm2736, 0, %v2752
      %2754 = vst [vmem:[#allocation2 + $0x44] sm:$0x1] %v2753
      %v2755 = vld [vmem:[#allocation2 + $0x50] sm:$0x1]
      %v2756 = vsel %vm2736, 0, %v2755
      %2757 = vst [vmem:[#allocation2 + $0x50] sm:$0x1] %v2756
      %v2758 = vld [vmem:[#allocation2 + $0x5c] sm:$0x1]
      %v2759 = vsel %vm2736, 0, %v2758
      %2760 = vst [vmem:[#allocation2 + $0x5c] sm:$0x1] %v2759
      %v2761 = vld [vmem:[#allocation2 + $0x68] sm:$0x1]
      %v2762 = vsel %vm2736, 0, %v2761
      %2763 = vst [vmem:[#allocation2 + $0x68] sm:$0x1] %v2762
      %v2764 = vld [vmem:[#allocation2 + $0x74] sm:$0x1]
      %v2765 = vsel %vm2736, 0, %v2764
      %2766 = vst [vmem:[#allocation2 + $0x74] sm:$0x1] %v2765
      %p2767 = scmp.eq.s32.totalorder %s19, 0
      // Predicated region
      $region33: #{tpu_custom_call.1} parent=31 // pred_check
        %p2768 = pneg %p2767
      $region34: #{tpu_custom_call.1} parent=31 // pred_check_branch
        %2770 = sbr.rel (%p2768) target = $region36
      $region35: #{tpu_custom_call.1} parent=31 // pred_region
        %2771 = vst [vmem:[#allocation2] sm:$0xf] 0
        %2772 = vst [vmem:[#allocation2 + $0x4] sm:$0xf] 0
        %2773 = vst [vmem:[#allocation2 + $0x8] sm:$0x1] 0
        %2774 = vst [vmem:[#allocation3] sm:$0xf] 0
        %2775 = vst [vmem:[#allocation3 + $0x4] sm:$0xf] 0
        %2776 = vst [vmem:[#allocation3 + $0x8] sm:$0x1] 0
      $region36: #{tpu_custom_call.1} parent=31 // pred_fallthru
        _
      %p2777 = scmp.eq.s32.totalorder %s19, 3
      // Predicated region
      $region37: #{tpu_custom_call.1} parent=31 // pred_check
        %p2778 = pneg %p2777
      $region38: #{tpu_custom_call.1} parent=31 // pred_check_branch
        %2780 = sbr.rel (%p2778) target = $region40
      $region39: #{tpu_custom_call.1} parent=31 // pred_region
        %s2781 = scalar_lea.vmem [#allocation2], 108
        %2782 = vst [vmem:[%s2781] sm:$0xf] 0
        %2783 = vst [vmem:[%s2781 + $0x4] sm:$0xf] 0
        %2784 = vst [vmem:[%s2781 + $0x8] sm:$0x1] 0
        %s2785 = scalar_lea.vmem [#allocation3], 108
        %2786 = vst [vmem:[%s2785] sm:$0xf] 0
        %2787 = vst [vmem:[%s2785 + $0x4] sm:$0xf] 0
        %2788 = vst [vmem:[%s2785 + $0x8] sm:$0x1] 0
      $region40: #{tpu_custom_call.1} parent=31 // pred_fallthru
        _
      %v2789 = vld [vmem:[#allocation2] sm:$0xf]
      %v2790 = vld [vmem:[#allocation2 + $0x4] sm:$0xf]
      %v2791 = vld [vmem:[#allocation2 + $0x8] sm:$0x1]
      %v2792 = vld [vmem:[#allocation2 + $0xc] sm:$0xf]
      %v2793 = vld [vmem:[#allocation2 + $0x10] sm:$0xf]
      %v2794 = vld [vmem:[#allocation2 + $0x14] sm:$0x1]
      %v2795 = vld [vmem:[#allocation2 + $0x18] sm:$0xf]
      %v2796 = vld [vmem:[#allocation2 + $0x1c] sm:$0xf]
      %v2797 = vld [vmem:[#allocation2 + $0x20] sm:$0x1]
      %v2798 = vld [vmem:[#allocation2 + $0x24] sm:$0xf]
      %v2799 = vld [vmem:[#allocation2 + $0x28] sm:$0xf]
      %v2800 = vld [vmem:[#allocation2 + $0x2c] sm:$0x1]
      %v2801 = vld [vmem:[#allocation2 + $0x30] sm:$0xf]
      %v2802 = vld [vmem:[#allocation2 + $0x34] sm:$0xf]
      %v2803 = vld [vmem:[#allocation2 + $0x38] sm:$0x1]
      %v2804 = vld [vmem:[#allocation2 + $0x3c] sm:$0xf]
      %v2805 = vld [vmem:[#allocation2 + $0x40] sm:$0xf]
      %v2806 = vld [vmem:[#allocation2 + $0x44] sm:$0x1]
      %v2807 = vld [vmem:[#allocation2 + $0x48] sm:$0xf]
      %v2808 = vld [vmem:[#allocation2 + $0x4c] sm:$0xf]
      %v2809 = vld [vmem:[#allocation2 + $0x50] sm:$0x1]
      %v2810 = vld [vmem:[#allocation2 + $0x54] sm:$0xf]
      %v2811 = vld [vmem:[#allocation2 + $0x58] sm:$0xf]
      %v2812 = vld [vmem:[#allocation2 + $0x5c] sm:$0x1]
      %v2813 = vld [vmem:[#allocation3] sm:$0xf]
      %v2814 = vld [vmem:[#allocation3 + $0x4] sm:$0xf]
      %v2815 = vld [vmem:[#allocation3 + $0x8] sm:$0x1]
      %v2816 = vld [vmem:[#allocation3 + $0xc] sm:$0xf]
      %v2817 = vld [vmem:[#allocation3 + $0x10] sm:$0xf]
      %v2818 = vld [vmem:[#allocation3 + $0x14] sm:$0x1]
      %v2819 = vld [vmem:[#allocation3 + $0x18] sm:$0xf]
      %v2820 = vld [vmem:[#allocation3 + $0x1c] sm:$0xf]
      %v2821 = vld [vmem:[#allocation3 + $0x20] sm:$0x1]
      %v2822 = vld [vmem:[#allocation3 + $0x24] sm:$0xf]
      %v2823 = vld [vmem:[#allocation3 + $0x28] sm:$0xf]
      %v2824 = vld [vmem:[#allocation3 + $0x2c] sm:$0x1]
      %v2825 = vld [vmem:[#allocation3 + $0x30] sm:$0xf]
      %v2826 = vld [vmem:[#allocation3 + $0x34] sm:$0xf]
      %v2827 = vld [vmem:[#allocation3 + $0x38] sm:$0x1]
      %v2828 = vld [vmem:[#allocation3 + $0x3c] sm:$0xf]
      %v2829 = vld [vmem:[#allocation3 + $0x40] sm:$0xf]
      %v2830 = vld [vmem:[#allocation3 + $0x44] sm:$0x1]
      %v2831 = vld [vmem:[#allocation3 + $0x48] sm:$0xf]
      %v2832 = vld [vmem:[#allocation3 + $0x4c] sm:$0xf]
      %v2833 = vld [vmem:[#allocation3 + $0x50] sm:$0x1]
      %v2834 = vld [vmem:[#allocation3 + $0x54] sm:$0xf]
      %v2835 = vld [vmem:[#allocation3 + $0x58] sm:$0xf]
      %v2836 = vld [vmem:[#allocation3 + $0x5c] sm:$0x1]
      %v2853 = vunpack.c.l.b16 %v2813
      %v2854 = vunpack.c.l.b16 %v2814
      %v2855 = vunpack.c.l.b16 %v2816
      %v2856 = vunpack.c.l.b16 %v2817
      %v2857 = vunpack.c.l.b16 %v2819
      %v2858 = vunpack.c.l.b16 %v2820
      %v2859 = vunpack.c.l.b16 %v2822
      %v2860 = vunpack.c.l.b16 %v2823
      %v2861 = vunpack.c.l.b16 %v2825
      %v2862 = vunpack.c.l.b16 %v2826
      %v2863 = vunpack.c.l.b16 %v2828
      %v2864 = vunpack.c.l.b16 %v2829
      %v2865 = vunpack.c.l.b16 %v2831
      %v2866 = vunpack.c.l.b16 %v2832
      %v2867 = vunpack.c.l.b16 %v2834
      %v2868 = vunpack.c.l.b16 %v2835
      %v2869 = vpack.c.b16 %v2854, %v2853
      %v2870 = vpack.c.b16 %v2856, %v2855
      %v2871 = vpack.c.b16 %v2858, %v2857
      %v2872 = vpack.c.b16 %v2860, %v2859
      %v2873 = vpack.c.b16 %v2862, %v2861
      %v2874 = vpack.c.b16 %v2864, %v2863
      %v2875 = vpack.c.b16 %v2866, %v2865
      %v2876 = vpack.c.b16 %v2868, %v2867
      %v2909 = vunpack.c.l.b16 %v2789
      %v2910 = vunpack.c.l.b16 %v2790
      %v2911 = vunpack.c.l.b16 %v2791
      %v2912 = vunpack.c.l.b16 %v2792
      %v2913 = vunpack.c.l.b16 %v2793
      %v2914 = vunpack.c.l.b16 %v2794
      %v2915 = vunpack.c.l.b16 %v2795
      %v2916 = vunpack.c.l.b16 %v2796
      %v2917 = vunpack.c.l.b16 %v2797
      %v2918 = vunpack.c.l.b16 %v2798
      %v2919 = vunpack.c.l.b16 %v2799
      %v2920 = vunpack.c.l.b16 %v2800
      %v2921 = vunpack.c.l.b16 %v2801
      %v2922 = vunpack.c.l.b16 %v2802
      %v2923 = vunpack.c.l.b16 %v2803
      %v2924 = vunpack.c.l.b16 %v2804
      %v2925 = vunpack.c.l.b16 %v2805
      %v2926 = vunpack.c.l.b16 %v2806
      %v2927 = vunpack.c.l.b16 %v2807
      %v2928 = vunpack.c.l.b16 %v2808
      %v2929 = vunpack.c.l.b16 %v2809
      %v2930 = vunpack.c.l.b16 %v2810
      %v2931 = vunpack.c.l.b16 %v2811
      %v2932 = vunpack.c.l.b16 %v2812
      %v2933 = vpack.c.b16 %v2910, %v2909
      %v2934 = vpack.c.b16 %v2911, %v2911
      %v2935 = vpack.c.b16 %v2913, %v2912
      %v2936 = vpack.c.b16 %v2914, %v2914
      %v2937 = vpack.c.b16 %v2916, %v2915
      %v2938 = vpack.c.b16 %v2917, %v2917
      %v2939 = vpack.c.b16 %v2919, %v2918
      %v2940 = vpack.c.b16 %v2920, %v2920
      %v2941 = vpack.c.b16 %v2922, %v2921
      %v2942 = vpack.c.b16 %v2923, %v2923
      %v2943 = vpack.c.b16 %v2925, %v2924
      %v2944 = vpack.c.b16 %v2926, %v2926
      %v2945 = vpack.c.b16 %v2928, %v2927
      %v2946 = vpack.c.b16 %v2929, %v2929
      %v2947 = vpack.c.b16 %v2931, %v2930
      %v2948 = vpack.c.b16 %v2932, %v2932
      %v2950 = vshrl.u32 %v2933, 16
      %v2952 = vshll.u32 %v2933, 16
      %v2954 = vrot.slane %v2952, 1
      %v2955 = vor.u32 %v2950, %v2954
      %v2957 = vshll.u32 %v2934, 16
      %v2959 = vrot.slane %v2957, 1
      %v2960 = vsel %vm280, %v2955, %v2959
      %v2962 = vshrl.u32 %v2935, 16
      %v2964 = vshll.u32 %v2935, 16
      %v2966 = vrot.slane %v2964, 1
      %v2967 = vor.u32 %v2962, %v2966
      %v2969 = vshll.u32 %v2936, 16
      %v2971 = vrot.slane %v2969, 1
      %v2972 = vsel %vm280, %v2967, %v2971
      %v2974 = vshrl.u32 %v2937, 16
      %v2976 = vshll.u32 %v2937, 16
      %v2978 = vrot.slane %v2976, 1
      %v2979 = vor.u32 %v2974, %v2978
      %v2981 = vshll.u32 %v2938, 16
      %v2983 = vrot.slane %v2981, 1
      %v2984 = vsel %vm280, %v2979, %v2983
      %v2986 = vshrl.u32 %v2939, 16
      %v2988 = vshll.u32 %v2939, 16
      %v2990 = vrot.slane %v2988, 1
      %v2991 = vor.u32 %v2986, %v2990
      %v2993 = vshll.u32 %v2940, 16
      %v2995 = vrot.slane %v2993, 1
      %v2996 = vsel %vm280, %v2991, %v2995
      %v2998 = vshrl.u32 %v2941, 16
      %v3000 = vshll.u32 %v2941, 16
      %v3002 = vrot.slane %v3000, 1
      %v3003 = vor.u32 %v2998, %v3002
      %v3005 = vshll.u32 %v2942, 16
      %v3007 = vrot.slane %v3005, 1
      %v3008 = vsel %vm280, %v3003, %v3007
      %v3010 = vshrl.u32 %v2943, 16
      %v3012 = vshll.u32 %v2943, 16
      %v3014 = vrot.slane %v3012, 1
      %v3015 = vor.u32 %v3010, %v3014
      %v3017 = vshll.u32 %v2944, 16
      %v3019 = vrot.slane %v3017, 1
      %v3020 = vsel %vm280, %v3015, %v3019
      %v3022 = vshrl.u32 %v2945, 16
      %v3024 = vshll.u32 %v2945, 16
      %v3026 = vrot.slane %v3024, 1
      %v3027 = vor.u32 %v3022, %v3026
      %v3029 = vshll.u32 %v2946, 16
      %v3031 = vrot.slane %v3029, 1
      %v3032 = vsel %vm280, %v3027, %v3031
      %v3034 = vshrl.u32 %v2947, 16
      %v3036 = vshll.u32 %v2947, 16
      %v3038 = vrot.slane %v3036, 1
      %v3039 = vor.u32 %v3034, %v3038
      %v3041 = vshll.u32 %v2948, 16
      %v3043 = vrot.slane %v3041, 1
      %v3044 = vsel %vm280, %v3039, %v3043
      %v3061 = vunpack.c.l.b16 %v2815
      %v3062 = vunpack.c.l.b16 %v2818
      %v3063 = vunpack.c.l.b16 %v2821
      %v3064 = vunpack.c.l.b16 %v2824
      %v3065 = vunpack.c.l.b16 %v2827
      %v3066 = vunpack.c.l.b16 %v2830
      %v3067 = vunpack.c.l.b16 %v2833
      %v3068 = vunpack.c.l.b16 %v2836
      %v3069 = vpack.c.b16 %v3061, %v3061
      %v3070 = vpack.c.b16 %v3062, %v3062
      %v3071 = vpack.c.b16 %v3063, %v3063
      %v3072 = vpack.c.b16 %v3064, %v3064
      %v3073 = vpack.c.b16 %v3065, %v3065
      %v3074 = vpack.c.b16 %v3066, %v3066
      %v3075 = vpack.c.b16 %v3067, %v3067
      %v3076 = vpack.c.b16 %v3068, %v3068
      %v3078 = vshrl.u32 %v2869, 16
      %v3080 = vshll.u32 %v2869, 16
      %v3082 = vrot.slane %v3080, 1
      %v3083 = vor.u32 %v3078, %v3082
      %v3085 = vshll.u32 %v3069, 16
      %v3087 = vrot.slane %v3085, 1
      %v3088 = vsel %vm280, %v3083, %v3087
      %v3090 = vshrl.u32 %v2870, 16
      %v3092 = vshll.u32 %v2870, 16
      %v3094 = vrot.slane %v3092, 1
      %v3095 = vor.u32 %v3090, %v3094
      %v3097 = vshll.u32 %v3070, 16
      %v3099 = vrot.slane %v3097, 1
      %v3100 = vsel %vm280, %v3095, %v3099
      %v3102 = vshrl.u32 %v2871, 16
      %v3104 = vshll.u32 %v2871, 16
      %v3106 = vrot.slane %v3104, 1
      %v3107 = vor.u32 %v3102, %v3106
      %v3109 = vshll.u32 %v3071, 16
      %v3111 = vrot.slane %v3109, 1
      %v3112 = vsel %vm280, %v3107, %v3111
      %v3114 = vshrl.u32 %v2872, 16
      %v3116 = vshll.u32 %v2872, 16
      %v3118 = vrot.slane %v3116, 1
      %v3119 = vor.u32 %v3114, %v3118
      %v3121 = vshll.u32 %v3072, 16
      %v3123 = vrot.slane %v3121, 1
      %v3124 = vsel %vm280, %v3119, %v3123
      %v3126 = vshrl.u32 %v2873, 16
      %v3128 = vshll.u32 %v2873, 16
      %v3130 = vrot.slane %v3128, 1
      %v3131 = vor.u32 %v3126, %v3130
      %v3133 = vshll.u32 %v3073, 16
      %v3135 = vrot.slane %v3133, 1
      %v3136 = vsel %vm280, %v3131, %v3135
      %v3138 = vshrl.u32 %v2874, 16
      %v3140 = vshll.u32 %v2874, 16
      %v3142 = vrot.slane %v3140, 1
      %v3143 = vor.u32 %v3138, %v3142
      %v3145 = vshll.u32 %v3074, 16
      %v3147 = vrot.slane %v3145, 1
      %v3148 = vsel %vm280, %v3143, %v3147
      %v3150 = vshrl.u32 %v2875, 16
      %v3152 = vshll.u32 %v2875, 16
      %v3154 = vrot.slane %v3152, 1
      %v3155 = vor.u32 %v3150, %v3154
      %v3157 = vshll.u32 %v3075, 16
      %v3159 = vrot.slane %v3157, 1
      %v3160 = vsel %vm280, %v3155, %v3159
      %v3162 = vshrl.u32 %v2876, 16
      %v3164 = vshll.u32 %v2876, 16
      %v3166 = vrot.slane %v3164, 1
      %v3167 = vor.u32 %v3162, %v3166
      %v3169 = vshll.u32 %v3076, 16
      %v3171 = vrot.slane %v3169, 1
      %v3172 = vsel %vm280, %v3167, %v3171
      %v3181 = vrot.slane %v2933, 1
      %v3182 = vrot.slane %v2934, 1
      %v3183 = vsel %vm362, %v3181, %v3182
      %v3184 = vrot.slane %v2935, 1
      %v3185 = vrot.slane %v2936, 1
      %v3186 = vsel %vm362, %v3184, %v3185
      %v3187 = vrot.slane %v2937, 1
      %v3188 = vrot.slane %v2938, 1
      %v3189 = vsel %vm362, %v3187, %v3188
      %v3190 = vrot.slane %v2939, 1
      %v3191 = vrot.slane %v2940, 1
      %v3192 = vsel %vm362, %v3190, %v3191
      %v3193 = vrot.slane %v2941, 1
      %v3194 = vrot.slane %v2942, 1
      %v3195 = vsel %vm362, %v3193, %v3194
      %v3196 = vrot.slane %v2943, 1
      %v3197 = vrot.slane %v2944, 1
      %v3198 = vsel %vm362, %v3196, %v3197
      %v3199 = vrot.slane %v2945, 1
      %v3200 = vrot.slane %v2946, 1
      %v3201 = vsel %vm362, %v3199, %v3200
      %v3202 = vrot.slane %v2947, 1
      %v3203 = vrot.slane %v2948, 1
      %v3204 = vsel %vm362, %v3202, %v3203
      %v3213 = vld [vmem:[%s2] sm:$0xf]
      %v3214 = vld [vmem:[%s2 + $0x4] sm:$0xf]
      %v3215 = vld [vmem:[%s2 + $0x8] sm:$0xf]
      %v3216 = vld [vmem:[%s2 + $0xc] sm:$0xf]
      %v3217 = vld [vmem:[%s2 + $0x10] sm:$0xf]
      %v3218 = vld [vmem:[%s2 + $0x14] sm:$0xf]
      %v3219 = vld [vmem:[%s2 + $0x18] sm:$0xf]
      %v3220 = vld [vmem:[%s2 + $0x1c] sm:$0xf]
      %v3221 = vld [vmem:[%s2 + $0x20] sm:$0xf]
      %v3222 = vld [vmem:[%s2 + $0x24] sm:$0xf]
      %v3223 = vld [vmem:[%s2 + $0x28] sm:$0xf]
      %v3224 = vld [vmem:[%s2 + $0x2c] sm:$0xf]
      %v3225 = vld [vmem:[%s2 + $0x30] sm:$0xf]
      %v3226 = vld [vmem:[%s2 + $0x34] sm:$0xf]
      %v3227 = vld [vmem:[%s2 + $0x38] sm:$0xf]
      %v3228 = vld [vmem:[%s2 + $0x3c] sm:$0xf]
      %v3229 = vld [vmem:[%s2 + $0x40] sm:$0xf]
      %v3230 = vld [vmem:[%s2 + $0x44] sm:$0xf]
      %v3231 = vld [vmem:[%s2 + $0x48] sm:$0xf]
      %v3232 = vld [vmem:[%s2 + $0x4c] sm:$0xf]
      %v3233 = vld [vmem:[%s2 + $0x50] sm:$0xf]
      %v3234 = vld [vmem:[%s2 + $0x54] sm:$0xf]
      %v3235 = vld [vmem:[%s2 + $0x58] sm:$0xf]
      %v3236 = vld [vmem:[%s2 + $0x5c] sm:$0xf]
      %v3237 = vld [vmem:[%s2 + $0x60] sm:$0xf]
      %v3238 = vld [vmem:[%s2 + $0x64] sm:$0xf]
      %v3239 = vld [vmem:[%s2 + $0x68] sm:$0xf]
      %v3240 = vld [vmem:[%s2 + $0x6c] sm:$0xf]
      %v3241 = vld [vmem:[%s2 + $0x70] sm:$0xf]
      %v3242 = vld [vmem:[%s2 + $0x74] sm:$0xf]
      %v3243 = vld [vmem:[%s2 + $0x78] sm:$0xf]
      %v3244 = vld [vmem:[%s2 + $0x7c] sm:$0xf]
      %v3245 = vld [vmem:[%s2 + $0x80] sm:$0xf]
      %v3246 = vld [vmem:[%s2 + $0x84] sm:$0xf]
      %v3247 = vld [vmem:[%s2 + $0x88] sm:$0xf]
      %v3248 = vld [vmem:[%s2 + $0x8c] sm:$0xf]
      %v3249 = vld [vmem:[%s2 + $0x90] sm:$0xf]
      %v3250 = vld [vmem:[%s2 + $0x94] sm:$0xf]
      %v3251 = vld [vmem:[%s2 + $0x98] sm:$0xf]
      %v3252 = vld [vmem:[%s2 + $0x9c] sm:$0xf]
      %v3253 = vld [vmem:[%s2 + $0xa0] sm:$0xf]
      %v3254 = vld [vmem:[%s2 + $0xa4] sm:$0xf]
      %v3255 = vld [vmem:[%s2 + $0xa8] sm:$0xf]
      %v3256 = vld [vmem:[%s2 + $0xac] sm:$0xf]
      %v3257 = vld [vmem:[%s2 + $0xb0] sm:$0xf]
      %v3258 = vld [vmem:[%s2 + $0xb4] sm:$0xf]
      %v3259 = vld [vmem:[%s2 + $0xb8] sm:$0xf]
      %v3260 = vld [vmem:[%s2 + $0xbc] sm:$0xf]
      %v3309 = vunpack.c.l.b16 %v3213
      %v3310 = vunpack.c.l.b16 %v3214
      %v3311 = vunpack.c.l.b16 %v3215
      %v3312 = vunpack.c.l.b16 %v3216
      %v3313 = vunpack.c.l.b16 %v3217
      %v3314 = vunpack.c.l.b16 %v3218
      %v3315 = vunpack.c.l.b16 %v3219
      %v3316 = vunpack.c.l.b16 %v3220
      %v3317 = vunpack.c.l.b16 %v3221
      %v3318 = vunpack.c.l.b16 %v3222
      %v3319 = vunpack.c.l.b16 %v3223
      %v3320 = vunpack.c.l.b16 %v3224
      %v3321 = vunpack.c.l.b16 %v3225
      %v3322 = vunpack.c.l.b16 %v3226
      %v3323 = vunpack.c.l.b16 %v3227
      %v3324 = vunpack.c.l.b16 %v3228
      %v3325 = vunpack.c.l.b16 %v3229
      %v3326 = vunpack.c.l.b16 %v3230
      %v3327 = vunpack.c.l.b16 %v3231
      %v3328 = vunpack.c.l.b16 %v3232
      %v3329 = vunpack.c.l.b16 %v3233
      %v3330 = vunpack.c.l.b16 %v3234
      %v3331 = vunpack.c.l.b16 %v3235
      %v3332 = vunpack.c.l.b16 %v3236
      %v3333 = vunpack.c.l.b16 %v3237
      %v3334 = vunpack.c.l.b16 %v3238
      %v3335 = vunpack.c.l.b16 %v3239
      %v3336 = vunpack.c.l.b16 %v3240
      %v3337 = vunpack.c.l.b16 %v3241
      %v3338 = vunpack.c.l.b16 %v3242
      %v3339 = vunpack.c.l.b16 %v3243
      %v3340 = vunpack.c.l.b16 %v3244
      %v3341 = vunpack.c.l.b16 %v3245
      %v3342 = vunpack.c.l.b16 %v3246
      %v3343 = vunpack.c.l.b16 %v3247
      %v3344 = vunpack.c.l.b16 %v3248
      %v3345 = vunpack.c.l.b16 %v3249
      %v3346 = vunpack.c.l.b16 %v3250
      %v3347 = vunpack.c.l.b16 %v3251
      %v3348 = vunpack.c.l.b16 %v3252
      %v3349 = vunpack.c.l.b16 %v3253
      %v3350 = vunpack.c.l.b16 %v3254
      %v3351 = vunpack.c.l.b16 %v3255
      %v3352 = vunpack.c.l.b16 %v3256
      %v3353 = vunpack.c.l.b16 %v3257
      %v3354 = vunpack.c.l.b16 %v3258
      %v3355 = vunpack.c.l.b16 %v3259
      %v3356 = vunpack.c.l.b16 %v3260
      %v3357 = vpack.c.b16 %v3310, %v3309
      %v3358 = vpack.c.b16 %v3312, %v3311
      %v3359 = vpack.c.b16 %v3314, %v3313
      %v3360 = vpack.c.b16 %v3316, %v3315
      %v3361 = vpack.c.b16 %v3318, %v3317
      %v3362 = vpack.c.b16 %v3320, %v3319
      %v3363 = vpack.c.b16 %v3322, %v3321
      %v3364 = vpack.c.b16 %v3324, %v3323
      %v3365 = vpack.c.b16 %v3326, %v3325
      %v3366 = vpack.c.b16 %v3328, %v3327
      %v3367 = vpack.c.b16 %v3330, %v3329
      %v3368 = vpack.c.b16 %v3332, %v3331
      %v3369 = vpack.c.b16 %v3334, %v3333
      %v3370 = vpack.c.b16 %v3336, %v3335
      %v3371 = vpack.c.b16 %v3338, %v3337
      %v3372 = vpack.c.b16 %v3340, %v3339
      %v3373 = vpack.c.b16 %v3342, %v3341
      %v3374 = vpack.c.b16 %v3344, %v3343
      %v3375 = vpack.c.b16 %v3346, %v3345
      %v3376 = vpack.c.b16 %v3348, %v3347
      %v3377 = vpack.c.b16 %v3350, %v3349
      %v3378 = vpack.c.b16 %v3352, %v3351
      %v3379 = vpack.c.b16 %v3354, %v3353
      %v3380 = vpack.c.b16 %v3356, %v3355
      %3405 = vmatprep.subr.bf16.mxu0 0
      %3406 = vmatpush1.bf16.msra.mxu0 %v3364
      %3407 = vmatprep.subr.bf16.mxu0 0
      %3408 = vmatpush1.bf16.msra.mxu0 %v3363
      %3409 = vmatprep.subr.bf16.mxu0 0
      %3410 = vmatpush1.bf16.msra.mxu0 %v3362
      %3411 = vmatprep.subr.bf16.mxu0 0
      %3412 = vmatpush1.bf16.msra.mxu0 %v3361
      %3413 = vmatprep.subr.bf16.mxu0 0
      %3414 = vmatpush1.bf16.msra.mxu0 %v3360
      %3415 = vmatprep.subr.bf16.mxu0 0
      %3416 = vmatpush1.bf16.msra.mxu0 %v3359
      %3417 = vmatprep.subr.bf16.mxu0 0
      %3418 = vmatpush1.bf16.msra.mxu0 %v3358
      %3419 = vmatprep.subr.bf16.mxu0 0
      %3420 = vmatpush1.bf16.msra.mxu0 %v3357
      %3421 = vmatprep.subr.bf16.mxu0 0
      %3422 = vmatpush2.bf16.msra.mxu0 %v3372
      %3423 = vmatprep.subr.bf16.mxu0 0
      %3424 = vmatpush2.bf16.msra.mxu0 %v3371
      %3425 = vmatprep.subr.bf16.mxu0 0
      %3426 = vmatpush2.bf16.msra.mxu0 %v3370
      %3427 = vmatprep.subr.bf16.mxu0 0
      %3428 = vmatpush2.bf16.msra.mxu0 %v3369
      %3429 = vmatprep.subr.bf16.mxu0 0
      %3430 = vmatpush2.bf16.msra.mxu0 %v3368
      %3431 = vmatprep.subr.bf16.mxu0 0
      %3432 = vmatpush2.bf16.msra.mxu0 %v3367
      %3433 = vmatprep.subr.bf16.mxu0 0
      %3434 = vmatpush2.bf16.msra.mxu0 %v3366
      %3435 = vmatprep.subr.bf16.mxu0 0
      %3436 = vmatpush2.bf16.msra.mxu0 %v3365
      %3437 = vmatprep.mubr.bf16.mxu0 %v2960
      %3438 = vmatmul.mubr.bf16.gmra.mxu0 %v2869
      %v3439 = vpop.f32.mrf.mxu0
      %v3440 = vadd.f32 0.0, %v3439
      %v3441 = vpop.f32.mrf.mxu0
      %v3442 = vpop.f32.mrf.mxu0
      %v3443 = vadd.f32 0.0, %v3442
      %v3444 = vpop.f32.mrf.mxu0
      %3445 = vmatprep.mubr.bf16.mxu0 %v2972
      %3446 = vmatmul.mubr.bf16.gmra.mxu0 %v2870
      %v3447 = vpop.f32.mrf.mxu0
      %v3448 = vadd.f32 0.0, %v3447
      %v3449 = vpop.f32.mrf.mxu0
      %v3450 = vpop.f32.mrf.mxu0
      %v3451 = vadd.f32 0.0, %v3450
      %v3452 = vpop.f32.mrf.mxu0
      %3453 = vmatprep.mubr.bf16.mxu0 %v2984
      %3454 = vmatmul.mubr.bf16.gmra.mxu0 %v2871
      %v3455 = vpop.f32.mrf.mxu0
      %v3456 = vadd.f32 0.0, %v3455
      %v3457 = vpop.f32.mrf.mxu0
      %v3458 = vpop.f32.mrf.mxu0
      %v3459 = vadd.f32 0.0, %v3458
      %v3460 = vpop.f32.mrf.mxu0
      %3461 = vmatprep.mubr.bf16.mxu0 %v2996
      %3462 = vmatmul.mubr.bf16.gmra.mxu0 %v2872
      %v3463 = vpop.f32.mrf.mxu0
      %v3464 = vadd.f32 0.0, %v3463
      %v3465 = vpop.f32.mrf.mxu0
      %v3466 = vpop.f32.mrf.mxu0
      %v3467 = vadd.f32 0.0, %v3466
      %v3468 = vpop.f32.mrf.mxu0
      %3469 = vmatprep.mubr.bf16.mxu0 %v3008
      %3470 = vmatmul.mubr.bf16.gmra.mxu0 %v2873
      %v3471 = vpop.f32.mrf.mxu0
      %v3472 = vadd.f32 0.0, %v3471
      %v3473 = vpop.f32.mrf.mxu0
      %v3474 = vpop.f32.mrf.mxu0
      %v3475 = vadd.f32 0.0, %v3474
      %v3476 = vpop.f32.mrf.mxu0
      %3477 = vmatprep.mubr.bf16.mxu0 %v3020
      %3478 = vmatmul.mubr.bf16.gmra.mxu0 %v2874
      %v3479 = vpop.f32.mrf.mxu0
      %v3480 = vadd.f32 0.0, %v3479
      %v3481 = vpop.f32.mrf.mxu0
      %v3482 = vpop.f32.mrf.mxu0
      %v3483 = vadd.f32 0.0, %v3482
      %v3484 = vpop.f32.mrf.mxu0
      %3485 = vmatprep.mubr.bf16.mxu0 %v3032
      %3486 = vmatmul.mubr.bf16.gmra.mxu0 %v2875
      %v3487 = vpop.f32.mrf.mxu0
      %v3488 = vadd.f32 0.0, %v3487
      %v3489 = vpop.f32.mrf.mxu0
      %v3490 = vpop.f32.mrf.mxu0
      %v3491 = vadd.f32 0.0, %v3490
      %v3492 = vpop.f32.mrf.mxu0
      %3493 = vmatprep.mubr.bf16.mxu0 %v3044
      %3494 = vmatmul.mubr.bf16.gmra.mxu0 %v2876
      %v3495 = vpop.f32.mrf.mxu0
      %v3496 = vadd.f32 0.0, %v3495
      %v3497 = vpop.f32.mrf.mxu0
      %v3498 = vpop.f32.mrf.mxu0
      %v3499 = vadd.f32 0.0, %v3498
      %v3500 = vpop.f32.mrf.mxu0
      %3501 = vdwg.mxu0
      %3502 = vmatprep.subr.bf16.mxu0 0
      %3503 = vmatpush1.bf16.msra.mxu0 %v3380
      %3504 = vmatprep.subr.bf16.mxu0 0
      %3505 = vmatpush1.bf16.msra.mxu0 %v3379
      %3506 = vmatprep.subr.bf16.mxu0 0
      %3507 = vmatpush1.bf16.msra.mxu0 %v3378
      %3508 = vmatprep.subr.bf16.mxu0 0
      %3509 = vmatpush1.bf16.msra.mxu0 %v3377
      %3510 = vmatprep.subr.bf16.mxu0 0
      %3511 = vmatpush1.bf16.msra.mxu0 %v3376
      %3512 = vmatprep.subr.bf16.mxu0 0
      %3513 = vmatpush1.bf16.msra.mxu0 %v3375
      %3514 = vmatprep.subr.bf16.mxu0 0
      %3515 = vmatpush1.bf16.msra.mxu0 %v3374
      %3516 = vmatprep.subr.bf16.mxu0 0
      %3517 = vmatpush1.bf16.msra.mxu0 %v3373
      %3518 = vmatprep.subr.bf16.mxu0 0
      %3519 = vmatpush2.bf16.msra.mxu0 0
      %3520 = vmatprep.subr.bf16.mxu0 0
      %3521 = vmatpush2.bf16.msra.mxu0 0
      %3522 = vmatprep.subr.bf16.mxu0 0
      %3523 = vmatpush2.bf16.msra.mxu0 0
      %3524 = vmatprep.subr.bf16.mxu0 0
      %3525 = vmatpush2.bf16.msra.mxu0 0
      %3526 = vmatprep.subr.bf16.mxu0 0
      %3527 = vmatpush2.bf16.msra.mxu0 0
      %3528 = vmatprep.subr.bf16.mxu0 0
      %3529 = vmatpush2.bf16.msra.mxu0 0
      %3530 = vmatprep.subr.bf16.mxu0 0
      %3531 = vmatpush2.bf16.msra.mxu0 0
      %3532 = vmatprep.subr.bf16.mxu0 0
      %3533 = vmatpush2.bf16.msra.mxu0 0
      %3534 = vmatprep.mubr.bf16.mxu0 0
      %3535 = vmatmul.mubr.bf16.gmra.mxu0 %v3088
      %v3536 = vpop.f32.mrf.mxu0
      %v3537 = vadd.f32 %v3440, %v3536
      %v3538 = vpop.f32.mrf.mxu0
      %v3539 = vpop.f32.mrf.mxu0
      %v3540 = vadd.f32 %v3443, %v3539
      %v3541 = vpop.f32.mrf.mxu0
      %3542 = vmatprep.mubr.bf16.mxu0 0
      %3543 = vmatmul.mubr.bf16.gmra.mxu0 %v3100
      %v3544 = vpop.f32.mrf.mxu0
      %v3545 = vadd.f32 %v3448, %v3544
      %v3546 = vpop.f32.mrf.mxu0
      %v3547 = vpop.f32.mrf.mxu0
      %v3548 = vadd.f32 %v3451, %v3547
      %v3549 = vpop.f32.mrf.mxu0
      %3550 = vmatprep.mubr.bf16.mxu0 0
      %3551 = vmatmul.mubr.bf16.gmra.mxu0 %v3112
      %v3552 = vpop.f32.mrf.mxu0
      %v3553 = vadd.f32 %v3456, %v3552
      %v3554 = vpop.f32.mrf.mxu0
      %v3555 = vpop.f32.mrf.mxu0
      %v3556 = vadd.f32 %v3459, %v3555
      %v3557 = vpop.f32.mrf.mxu0
      %3558 = vmatprep.mubr.bf16.mxu0 0
      %3559 = vmatmul.mubr.bf16.gmra.mxu0 %v3124
      %v3560 = vpop.f32.mrf.mxu0
      %v3561 = vadd.f32 %v3464, %v3560
      %v3562 = vpop.f32.mrf.mxu0
      %v3563 = vpop.f32.mrf.mxu0
      %v3564 = vadd.f32 %v3467, %v3563
      %v3565 = vpop.f32.mrf.mxu0
      %3566 = vmatprep.mubr.bf16.mxu0 0
      %3567 = vmatmul.mubr.bf16.gmra.mxu0 %v3136
      %v3568 = vpop.f32.mrf.mxu0
      %v3569 = vadd.f32 %v3472, %v3568
      %v3570 = vpop.f32.mrf.mxu0
      %v3571 = vpop.f32.mrf.mxu0
      %v3572 = vadd.f32 %v3475, %v3571
      %v3573 = vpop.f32.mrf.mxu0
      %3574 = vmatprep.mubr.bf16.mxu0 0
      %3575 = vmatmul.mubr.bf16.gmra.mxu0 %v3148
      %v3576 = vpop.f32.mrf.mxu0
      %v3577 = vadd.f32 %v3480, %v3576
      %v3578 = vpop.f32.mrf.mxu0
      %v3579 = vpop.f32.mrf.mxu0
      %v3580 = vadd.f32 %v3483, %v3579
      %v3581 = vpop.f32.mrf.mxu0
      %3582 = vmatprep.mubr.bf16.mxu0 0
      %3583 = vmatmul.mubr.bf16.gmra.mxu0 %v3160
      %v3584 = vpop.f32.mrf.mxu0
      %v3585 = vadd.f32 %v3488, %v3584
      %v3586 = vpop.f32.mrf.mxu0
      %v3587 = vpop.f32.mrf.mxu0
      %v3588 = vadd.f32 %v3491, %v3587
      %v3589 = vpop.f32.mrf.mxu0
      %3590 = vmatprep.mubr.bf16.mxu0 0
      %3591 = vmatmul.mubr.bf16.gmra.mxu0 %v3172
      %v3592 = vpop.f32.mrf.mxu0
      %v3593 = vadd.f32 %v3496, %v3592
      %v3594 = vpop.f32.mrf.mxu0
      %v3595 = vpop.f32.mrf.mxu0
      %v3596 = vadd.f32 %v3499, %v3595
      %v3597 = vpop.f32.mrf.mxu0
      %3598 = vdwg.mxu0
      %3599 = vmatprep.subr.bf16.mxu0 0
      %3600 = vmatpush1.bf16.msra.mxu0 %v3364
      %3601 = vmatprep.subr.bf16.mxu0 0
      %3602 = vmatpush1.bf16.msra.mxu0 %v3363
      %3603 = vmatprep.subr.bf16.mxu0 0
      %3604 = vmatpush1.bf16.msra.mxu0 %v3362
      %3605 = vmatprep.subr.bf16.mxu0 0
      %3606 = vmatpush1.bf16.msra.mxu0 %v3361
      %3607 = vmatprep.subr.bf16.mxu0 0
      %3608 = vmatpush1.bf16.msra.mxu0 %v3360
      %3609 = vmatprep.subr.bf16.mxu0 0
      %3610 = vmatpush1.bf16.msra.mxu0 %v3359
      %3611 = vmatprep.subr.bf16.mxu0 0
      %3612 = vmatpush1.bf16.msra.mxu0 %v3358
      %3613 = vmatprep.subr.bf16.mxu0 0
      %3614 = vmatpush1.bf16.msra.mxu0 %v3357
      %3615 = vmatprep.subr.bf16.mxu0 0
      %3616 = vmatpush2.bf16.msra.mxu0 %v3372
      %3617 = vmatprep.subr.bf16.mxu0 0
      %3618 = vmatpush2.bf16.msra.mxu0 %v3371
      %3619 = vmatprep.subr.bf16.mxu0 0
      %3620 = vmatpush2.bf16.msra.mxu0 %v3370
      %3621 = vmatprep.subr.bf16.mxu0 0
      %3622 = vmatpush2.bf16.msra.mxu0 %v3369
      %3623 = vmatprep.subr.bf16.mxu0 0
      %3624 = vmatpush2.bf16.msra.mxu0 %v3368
      %3625 = vmatprep.subr.bf16.mxu0 0
      %3626 = vmatpush2.bf16.msra.mxu0 %v3367
      %3627 = vmatprep.subr.bf16.mxu0 0
      %3628 = vmatpush2.bf16.msra.mxu0 %v3366
      %3629 = vmatprep.subr.bf16.mxu0 0
      %3630 = vmatpush2.bf16.msra.mxu0 %v3365
      %3631 = vmatprep.mubr.bf16.mxu0 %v3088
      %3632 = vmatmul.mubr.bf16.gmra.mxu0 %v2960
      %v3633 = vpop.f32.mrf.mxu0
      %v3634 = vadd.f32 0.0, %v3633
      %v3635 = vpop.f32.mrf.mxu0
      %v3636 = vpop.f32.mrf.mxu0
      %v3637 = vadd.f32 0.0, %v3636
      %v3638 = vpop.f32.mrf.mxu0
      %3639 = vmatprep.mubr.bf16.mxu0 %v3100
      %3640 = vmatmul.mubr.bf16.gmra.mxu0 %v2972
      %v3641 = vpop.f32.mrf.mxu0
      %v3642 = vadd.f32 0.0, %v3641
      %v3643 = vpop.f32.mrf.mxu0
      %v3644 = vpop.f32.mrf.mxu0
      %v3645 = vadd.f32 0.0, %v3644
      %v3646 = vpop.f32.mrf.mxu0
      %3647 = vmatprep.mubr.bf16.mxu0 %v3112
      %3648 = vmatmul.mubr.bf16.gmra.mxu0 %v2984
      %v3649 = vpop.f32.mrf.mxu0
      %v3650 = vadd.f32 0.0, %v3649
      %v3651 = vpop.f32.mrf.mxu0
      %v3652 = vpop.f32.mrf.mxu0
      %v3653 = vadd.f32 0.0, %v3652
      %v3654 = vpop.f32.mrf.mxu0
      %3655 = vmatprep.mubr.bf16.mxu0 %v3124
      %3656 = vmatmul.mubr.bf16.gmra.mxu0 %v2996
      %v3657 = vpop.f32.mrf.mxu0
      %v3658 = vadd.f32 0.0, %v3657
      %v3659 = vpop.f32.mrf.mxu0
      %v3660 = vpop.f32.mrf.mxu0
      %v3661 = vadd.f32 0.0, %v3660
      %v3662 = vpop.f32.mrf.mxu0
      %3663 = vmatprep.mubr.bf16.mxu0 %v3136
      %3664 = vmatmul.mubr.bf16.gmra.mxu0 %v3008
      %v3665 = vpop.f32.mrf.mxu0
      %v3666 = vadd.f32 0.0, %v3665
      %v3667 = vpop.f32.mrf.mxu0
      %v3668 = vpop.f32.mrf.mxu0
      %v3669 = vadd.f32 0.0, %v3668
      %v3670 = vpop.f32.mrf.mxu0
      %3671 = vmatprep.mubr.bf16.mxu0 %v3148
      %3672 = vmatmul.mubr.bf16.gmra.mxu0 %v3020
      %v3673 = vpop.f32.mrf.mxu0
      %v3674 = vadd.f32 0.0, %v3673
      %v3675 = vpop.f32.mrf.mxu0
      %v3676 = vpop.f32.mrf.mxu0
      %v3677 = vadd.f32 0.0, %v3676
      %v3678 = vpop.f32.mrf.mxu0
      %3679 = vmatprep.mubr.bf16.mxu0 %v3160
      %3680 = vmatmul.mubr.bf16.gmra.mxu0 %v3032
      %v3681 = vpop.f32.mrf.mxu0
      %v3682 = vadd.f32 0.0, %v3681
      %v3683 = vpop.f32.mrf.mxu0
      %v3684 = vpop.f32.mrf.mxu0
      %v3685 = vadd.f32 0.0, %v3684
      %v3686 = vpop.f32.mrf.mxu0
      %3687 = vmatprep.mubr.bf16.mxu0 %v3172
      %3688 = vmatmul.mubr.bf16.gmra.mxu0 %v3044
      %v3689 = vpop.f32.mrf.mxu0
      %v3690 = vadd.f32 0.0, %v3689
      %v3691 = vpop.f32.mrf.mxu0
      %v3692 = vpop.f32.mrf.mxu0
      %v3693 = vadd.f32 0.0, %v3692
      %v3694 = vpop.f32.mrf.mxu0
      %3695 = vdwg.mxu0
      %3696 = vmatprep.subr.bf16.mxu0 0
      %3697 = vmatpush1.bf16.msra.mxu0 %v3380
      %3698 = vmatprep.subr.bf16.mxu0 0
      %3699 = vmatpush1.bf16.msra.mxu0 %v3379
      %3700 = vmatprep.subr.bf16.mxu0 0
      %3701 = vmatpush1.bf16.msra.mxu0 %v3378
      %3702 = vmatprep.subr.bf16.mxu0 0
      %3703 = vmatpush1.bf16.msra.mxu0 %v3377
      %3704 = vmatprep.subr.bf16.mxu0 0
      %3705 = vmatpush1.bf16.msra.mxu0 %v3376
      %3706 = vmatprep.subr.bf16.mxu0 0
      %3707 = vmatpush1.bf16.msra.mxu0 %v3375
      %3708 = vmatprep.subr.bf16.mxu0 0
      %3709 = vmatpush1.bf16.msra.mxu0 %v3374
      %3710 = vmatprep.subr.bf16.mxu0 0
      %3711 = vmatpush1.bf16.msra.mxu0 %v3373
      %3712 = vmatprep.subr.bf16.mxu0 0
      %3713 = vmatpush2.bf16.msra.mxu0 0
      %3714 = vmatprep.subr.bf16.mxu0 0
      %3715 = vmatpush2.bf16.msra.mxu0 0
      %3716 = vmatprep.subr.bf16.mxu0 0
      %3717 = vmatpush2.bf16.msra.mxu0 0
      %3718 = vmatprep.subr.bf16.mxu0 0
      %3719 = vmatpush2.bf16.msra.mxu0 0
      %3720 = vmatprep.subr.bf16.mxu0 0
      %3721 = vmatpush2.bf16.msra.mxu0 0
      %3722 = vmatprep.subr.bf16.mxu0 0
      %3723 = vmatpush2.bf16.msra.mxu0 0
      %3724 = vmatprep.subr.bf16.mxu0 0
      %3725 = vmatpush2.bf16.msra.mxu0 0
      %3726 = vmatprep.subr.bf16.mxu0 0
      %3727 = vmatpush2.bf16.msra.mxu0 0
      %3728 = vmatprep.mubr.bf16.mxu0 0
      %3729 = vmatmul.mubr.bf16.gmra.mxu0 %v3183
      %v3730 = vpop.f32.mrf.mxu0
      %v3731 = vadd.f32 %v3634, %v3730
      %v3732 = vpop.f32.mrf.mxu0
      %v3733 = vpop.f32.mrf.mxu0
      %v3734 = vadd.f32 %v3637, %v3733
      %v3735 = vpop.f32.mrf.mxu0
      %3736 = vmatprep.mubr.bf16.mxu0 0
      %3737 = vmatmul.mubr.bf16.gmra.mxu0 %v3186
      %v3738 = vpop.f32.mrf.mxu0
      %v3739 = vadd.f32 %v3642, %v3738
      %v3740 = vpop.f32.mrf.mxu0
      %v3741 = vpop.f32.mrf.mxu0
      %v3742 = vadd.f32 %v3645, %v3741
      %v3743 = vpop.f32.mrf.mxu0
      %3744 = vmatprep.mubr.bf16.mxu0 0
      %3745 = vmatmul.mubr.bf16.gmra.mxu0 %v3189
      %v3746 = vpop.f32.mrf.mxu0
      %v3747 = vadd.f32 %v3650, %v3746
      %v3748 = vpop.f32.mrf.mxu0
      %v3749 = vpop.f32.mrf.mxu0
      %v3750 = vadd.f32 %v3653, %v3749
      %v3751 = vpop.f32.mrf.mxu0
      %3752 = vmatprep.mubr.bf16.mxu0 0
      %3753 = vmatmul.mubr.bf16.gmra.mxu0 %v3192
      %v3754 = vpop.f32.mrf.mxu0
      %v3755 = vadd.f32 %v3658, %v3754
      %v3756 = vpop.f32.mrf.mxu0
      %v3757 = vpop.f32.mrf.mxu0
      %v3758 = vadd.f32 %v3661, %v3757
      %v3759 = vpop.f32.mrf.mxu0
      %3760 = vmatprep.mubr.bf16.mxu0 0
      %3761 = vmatmul.mubr.bf16.gmra.mxu0 %v3195
      %v3762 = vpop.f32.mrf.mxu0
      %v3763 = vadd.f32 %v3666, %v3762
      %v3764 = vpop.f32.mrf.mxu0
      %v3765 = vpop.f32.mrf.mxu0
      %v3766 = vadd.f32 %v3669, %v3765
      %v3767 = vpop.f32.mrf.mxu0
      %3768 = vmatprep.mubr.bf16.mxu0 0
      %3769 = vmatmul.mubr.bf16.gmra.mxu0 %v3198
      %v3770 = vpop.f32.mrf.mxu0
      %v3771 = vadd.f32 %v3674, %v3770
      %v3772 = vpop.f32.mrf.mxu0
      %v3773 = vpop.f32.mrf.mxu0
      %v3774 = vadd.f32 %v3677, %v3773
      %v3775 = vpop.f32.mrf.mxu0
      %3776 = vmatprep.mubr.bf16.mxu0 0
      %3777 = vmatmul.mubr.bf16.gmra.mxu0 %v3201
      %v3778 = vpop.f32.mrf.mxu0
      %v3779 = vadd.f32 %v3682, %v3778
      %v3780 = vpop.f32.mrf.mxu0
      %v3781 = vpop.f32.mrf.mxu0
      %v3782 = vadd.f32 %v3685, %v3781
      %v3783 = vpop.f32.mrf.mxu0
      %3784 = vmatprep.mubr.bf16.mxu0 0
      %3785 = vmatmul.mubr.bf16.gmra.mxu0 %v3204
      %v3786 = vpop.f32.mrf.mxu0
      %v3787 = vadd.f32 %v3690, %v3786
      %v3788 = vpop.f32.mrf.mxu0
      %v3789 = vpop.f32.mrf.mxu0
      %v3790 = vadd.f32 %v3693, %v3789
      %v3791 = vpop.f32.mrf.mxu0
      %3792 = vdwg.mxu0
      %vm3793 = vcmask 31744
      %3794 = vst.msk [vmem:[#allocation4] sm:$0xff] %vm3793, %v3537
      %3795 = vst.msk [vmem:[#allocation4 + $0x8] sm:$0xff] %vm3793, %v3540
      %3796 = vst.msk [vmem:[#allocation4 + $0x10] sm:$0xff] %vm3793, %v3545
      %3797 = vst.msk [vmem:[#allocation4 + $0x18] sm:$0xff] %vm3793, %v3548
      %3798 = vst.msk [vmem:[#allocation4 + $0x20] sm:$0xff] %vm3793, %v3553
      %3799 = vst.msk [vmem:[#allocation4 + $0x28] sm:$0xff] %vm3793, %v3556
      %3800 = vst.msk [vmem:[#allocation4 + $0x30] sm:$0xff] %vm3793, %v3561
      %3801 = vst.msk [vmem:[#allocation4 + $0x38] sm:$0xff] %vm3793, %v3564
      %3802 = vst.msk [vmem:[#allocation4 + $0x40] sm:$0xff] %vm3793, %v3569
      %3803 = vst.msk [vmem:[#allocation4 + $0x48] sm:$0xff] %vm3793, %v3572
      %3804 = vst.msk [vmem:[#allocation4 + $0x50] sm:$0xff] %vm3793, %v3577
      %3805 = vst.msk [vmem:[#allocation4 + $0x58] sm:$0xff] %vm3793, %v3580
      %3806 = vst.msk [vmem:[#allocation4 + $0x60] sm:$0xff] %vm3793, %v3585
      %3807 = vst.msk [vmem:[#allocation4 + $0x68] sm:$0xff] %vm3793, %v3588
      %3808 = vst.msk [vmem:[#allocation4 + $0x70] sm:$0xff] %vm3793, %v3593
      %3809 = vst.msk [vmem:[#allocation4 + $0x78] sm:$0xff] %vm3793, %v3596
      %3810 = vst.msk [vmem:[#allocation5] sm:$0xff] %vm3793, %v3731
      %3811 = vst.msk [vmem:[#allocation5 + $0x8] sm:$0xff] %vm3793, %v3734
      %3812 = vst.msk [vmem:[#allocation5 + $0x10] sm:$0xff] %vm3793, %v3739
      %3813 = vst.msk [vmem:[#allocation5 + $0x18] sm:$0xff] %vm3793, %v3742
      %3814 = vst.msk [vmem:[#allocation5 + $0x20] sm:$0xff] %vm3793, %v3747
      %3815 = vst.msk [vmem:[#allocation5 + $0x28] sm:$0xff] %vm3793, %v3750
      %3816 = vst.msk [vmem:[#allocation5 + $0x30] sm:$0xff] %vm3793, %v3755
      %3817 = vst.msk [vmem:[#allocation5 + $0x38] sm:$0xff] %vm3793, %v3758
      %3818 = vst.msk [vmem:[#allocation5 + $0x40] sm:$0xff] %vm3793, %v3763
      %3819 = vst.msk [vmem:[#allocation5 + $0x48] sm:$0xff] %vm3793, %v3766
      %3820 = vst.msk [vmem:[#allocation5 + $0x50] sm:$0xff] %vm3793, %v3771
      %3821 = vst.msk [vmem:[#allocation5 + $0x58] sm:$0xff] %vm3793, %v3774
      %3822 = vst.msk [vmem:[#allocation5 + $0x60] sm:$0xff] %vm3793, %v3779
      %3823 = vst.msk [vmem:[#allocation5 + $0x68] sm:$0xff] %vm3793, %v3782
      %3824 = vst.msk [vmem:[#allocation5 + $0x70] sm:$0xff] %vm3793, %v3787
      %3825 = vst.msk [vmem:[#allocation5 + $0x78] sm:$0xff] %vm3793, %v3790
      %s3826 = scalar_lea.vmem [#allocation2], 12
      %v3827 = vld [vmem:[%s3826] sm:$0xf]
      %v3828 = vld [vmem:[%s3826 + $0x4] sm:$0xf]
      %v3829 = vld [vmem:[%s3826 + $0x8] sm:$0x1]
      %v3830 = vld [vmem:[%s3826 + $0xc] sm:$0xf]
      %v3831 = vld [vmem:[%s3826 + $0x10] sm:$0xf]
      %v3832 = vld [vmem:[%s3826 + $0x14] sm:$0x1]
      %v3833 = vld [vmem:[%s3826 + $0x18] sm:$0xf]
      %v3834 = vld [vmem:[%s3826 + $0x1c] sm:$0xf]
      %v3835 = vld [vmem:[%s3826 + $0x20] sm:$0x1]
      %v3836 = vld [vmem:[%s3826 + $0x24] sm:$0xf]
      %v3837 = vld [vmem:[%s3826 + $0x28] sm:$0xf]
      %v3838 = vld [vmem:[%s3826 + $0x2c] sm:$0x1]
      %v3839 = vld [vmem:[%s3826 + $0x30] sm:$0xf]
      %v3840 = vld [vmem:[%s3826 + $0x34] sm:$0xf]
      %v3841 = vld [vmem:[%s3826 + $0x38] sm:$0x1]
      %v3842 = vld [vmem:[%s3826 + $0x3c] sm:$0xf]
      %v3843 = vld [vmem:[%s3826 + $0x40] sm:$0xf]
      %v3844 = vld [vmem:[%s3826 + $0x44] sm:$0x1]
      %v3845 = vld [vmem:[%s3826 + $0x48] sm:$0xf]
      %v3846 = vld [vmem:[%s3826 + $0x4c] sm:$0xf]
      %v3847 = vld [vmem:[%s3826 + $0x50] sm:$0x1]
      %v3848 = vld [vmem:[%s3826 + $0x54] sm:$0xf]
      %v3849 = vld [vmem:[%s3826 + $0x58] sm:$0xf]
      %v3850 = vld [vmem:[%s3826 + $0x5c] sm:$0x1]
      %s3851 = scalar_lea.vmem [#allocation3], 12
      %v3852 = vld [vmem:[%s3851] sm:$0xf]
      %v3853 = vld [vmem:[%s3851 + $0x4] sm:$0xf]
      %v3854 = vld [vmem:[%s3851 + $0x8] sm:$0x1]
      %v3855 = vld [vmem:[%s3851 + $0xc] sm:$0xf]
      %v3856 = vld [vmem:[%s3851 + $0x10] sm:$0xf]
      %v3857 = vld [vmem:[%s3851 + $0x14] sm:$0x1]
      %v3858 = vld [vmem:[%s3851 + $0x18] sm:$0xf]
      %v3859 = vld [vmem:[%s3851 + $0x1c] sm:$0xf]
      %v3860 = vld [vmem:[%s3851 + $0x20] sm:$0x1]
      %v3861 = vld [vmem:[%s3851 + $0x24] sm:$0xf]
      %v3862 = vld [vmem:[%s3851 + $0x28] sm:$0xf]
      %v3863 = vld [vmem:[%s3851 + $0x2c] sm:$0x1]
      %v3864 = vld [vmem:[%s3851 + $0x30] sm:$0xf]
      %v3865 = vld [vmem:[%s3851 + $0x34] sm:$0xf]
      %v3866 = vld [vmem:[%s3851 + $0x38] sm:$0x1]
      %v3867 = vld [vmem:[%s3851 + $0x3c] sm:$0xf]
      %v3868 = vld [vmem:[%s3851 + $0x40] sm:$0xf]
      %v3869 = vld [vmem:[%s3851 + $0x44] sm:$0x1]
      %v3870 = vld [vmem:[%s3851 + $0x48] sm:$0xf]
      %v3871 = vld [vmem:[%s3851 + $0x4c] sm:$0xf]
      %v3872 = vld [vmem:[%s3851 + $0x50] sm:$0x1]
      %v3873 = vld [vmem:[%s3851 + $0x54] sm:$0xf]
      %v3874 = vld [vmem:[%s3851 + $0x58] sm:$0xf]
      %v3875 = vld [vmem:[%s3851 + $0x5c] sm:$0x1]
      %v3892 = vunpack.c.l.b16 %v3852
      %v3893 = vunpack.c.l.b16 %v3853
      %v3894 = vunpack.c.l.b16 %v3855
      %v3895 = vunpack.c.l.b16 %v3856
      %v3896 = vunpack.c.l.b16 %v3858
      %v3897 = vunpack.c.l.b16 %v3859
      %v3898 = vunpack.c.l.b16 %v3861
      %v3899 = vunpack.c.l.b16 %v3862
      %v3900 = vunpack.c.l.b16 %v3864
      %v3901 = vunpack.c.l.b16 %v3865
      %v3902 = vunpack.c.l.b16 %v3867
      %v3903 = vunpack.c.l.b16 %v3868
      %v3904 = vunpack.c.l.b16 %v3870
      %v3905 = vunpack.c.l.b16 %v3871
      %v3906 = vunpack.c.l.b16 %v3873
      %v3907 = vunpack.c.l.b16 %v3874
      %v3908 = vpack.c.b16 %v3893, %v3892
      %v3909 = vpack.c.b16 %v3895, %v3894
      %v3910 = vpack.c.b16 %v3897, %v3896
      %v3911 = vpack.c.b16 %v3899, %v3898
      %v3912 = vpack.c.b16 %v3901, %v3900
      %v3913 = vpack.c.b16 %v3903, %v3902
      %v3914 = vpack.c.b16 %v3905, %v3904
      %v3915 = vpack.c.b16 %v3907, %v3906
      %v3948 = vunpack.c.l.b16 %v3827
      %v3949 = vunpack.c.l.b16 %v3828
      %v3950 = vunpack.c.l.b16 %v3829
      %v3951 = vunpack.c.l.b16 %v3830
      %v3952 = vunpack.c.l.b16 %v3831
      %v3953 = vunpack.c.l.b16 %v3832
      %v3954 = vunpack.c.l.b16 %v3833
      %v3955 = vunpack.c.l.b16 %v3834
      %v3956 = vunpack.c.l.b16 %v3835
      %v3957 = vunpack.c.l.b16 %v3836
      %v3958 = vunpack.c.l.b16 %v3837
      %v3959 = vunpack.c.l.b16 %v3838
      %v3960 = vunpack.c.l.b16 %v3839
      %v3961 = vunpack.c.l.b16 %v3840
      %v3962 = vunpack.c.l.b16 %v3841
      %v3963 = vunpack.c.l.b16 %v3842
      %v3964 = vunpack.c.l.b16 %v3843
      %v3965 = vunpack.c.l.b16 %v3844
      %v3966 = vunpack.c.l.b16 %v3845
      %v3967 = vunpack.c.l.b16 %v3846
      %v3968 = vunpack.c.l.b16 %v3847
      %v3969 = vunpack.c.l.b16 %v3848
      %v3970 = vunpack.c.l.b16 %v3849
      %v3971 = vunpack.c.l.b16 %v3850
      %v3972 = vpack.c.b16 %v3949, %v3948
      %v3973 = vpack.c.b16 %v3950, %v3950
      %v3974 = vpack.c.b16 %v3952, %v3951
      %v3975 = vpack.c.b16 %v3953, %v3953
      %v3976 = vpack.c.b16 %v3955, %v3954
      %v3977 = vpack.c.b16 %v3956, %v3956
      %v3978 = vpack.c.b16 %v3958, %v3957
      %v3979 = vpack.c.b16 %v3959, %v3959
      %v3980 = vpack.c.b16 %v3961, %v3960
      %v3981 = vpack.c.b16 %v3962, %v3962
      %v3982 = vpack.c.b16 %v3964, %v3963
      %v3983 = vpack.c.b16 %v3965, %v3965
      %v3984 = vpack.c.b16 %v3967, %v3966
      %v3985 = vpack.c.b16 %v3968, %v3968
      %v3986 = vpack.c.b16 %v3970, %v3969
      %v3987 = vpack.c.b16 %v3971, %v3971
      %v3989 = vshrl.u32 %v3972, 16
      %v3991 = vshll.u32 %v3972, 16
      %v3993 = vrot.slane %v3991, 1
      %v3994 = vor.u32 %v3989, %v3993
      %v3996 = vshll.u32 %v3973, 16
      %v3998 = vrot.slane %v3996, 1
      %v3999 = vsel %vm280, %v3994, %v3998
      %v4001 = vshrl.u32 %v3974, 16
      %v4003 = vshll.u32 %v3974, 16
      %v4005 = vrot.slane %v4003, 1
      %v4006 = vor.u32 %v4001, %v4005
      %v4008 = vshll.u32 %v3975, 16
      %v4010 = vrot.slane %v4008, 1
      %v4011 = vsel %vm280, %v4006, %v4010
      %v4013 = vshrl.u32 %v3976, 16
      %v4015 = vshll.u32 %v3976, 16
      %v4017 = vrot.slane %v4015, 1
      %v4018 = vor.u32 %v4013, %v4017
      %v4020 = vshll.u32 %v3977, 16
      %v4022 = vrot.slane %v4020, 1
      %v4023 = vsel %vm280, %v4018, %v4022
      %v4025 = vshrl.u32 %v3978, 16
      %v4027 = vshll.u32 %v3978, 16
      %v4029 = vrot.slane %v4027, 1
      %v4030 = vor.u32 %v4025, %v4029
      %v4032 = vshll.u32 %v3979, 16
      %v4034 = vrot.slane %v4032, 1
      %v4035 = vsel %vm280, %v4030, %v4034
      %v4037 = vshrl.u32 %v3980, 16
      %v4039 = vshll.u32 %v3980, 16
      %v4041 = vrot.slane %v4039, 1
      %v4042 = vor.u32 %v4037, %v4041
      %v4044 = vshll.u32 %v3981, 16
      %v4046 = vrot.slane %v4044, 1
      %v4047 = vsel %vm280, %v4042, %v4046
      %v4049 = vshrl.u32 %v3982, 16
      %v4051 = vshll.u32 %v3982, 16
      %v4053 = vrot.slane %v4051, 1
      %v4054 = vor.u32 %v4049, %v4053
      %v4056 = vshll.u32 %v3983, 16
      %v4058 = vrot.slane %v4056, 1
      %v4059 = vsel %vm280, %v4054, %v4058
      %v4061 = vshrl.u32 %v3984, 16
      %v4063 = vshll.u32 %v3984, 16
      %v4065 = vrot.slane %v4063, 1
      %v4066 = vor.u32 %v4061, %v4065
      %v4068 = vshll.u32 %v3985, 16
      %v4070 = vrot.slane %v4068, 1
      %v4071 = vsel %vm280, %v4066, %v4070
      %v4073 = vshrl.u32 %v3986, 16
      %v4075 = vshll.u32 %v3986, 16
      %v4077 = vrot.slane %v4075, 1
      %v4078 = vor.u32 %v4073, %v4077
      %v4080 = vshll.u32 %v3987, 16
      %v4082 = vrot.slane %v4080, 1
      %v4083 = vsel %vm280, %v4078, %v4082
      %v4100 = vunpack.c.l.b16 %v3854
      %v4101 = vunpack.c.l.b16 %v3857
      %v4102 = vunpack.c.l.b16 %v3860
      %v4103 = vunpack.c.l.b16 %v3863
      %v4104 = vunpack.c.l.b16 %v3866
      %v4105 = vunpack.c.l.b16 %v3869
      %v4106 = vunpack.c.l.b16 %v3872
      %v4107 = vunpack.c.l.b16 %v3875
      %v4108 = vpack.c.b16 %v4100, %v4100
      %v4109 = vpack.c.b16 %v4101, %v4101
      %v4110 = vpack.c.b16 %v4102, %v4102
      %v4111 = vpack.c.b16 %v4103, %v4103
      %v4112 = vpack.c.b16 %v4104, %v4104
      %v4113 = vpack.c.b16 %v4105, %v4105
      %v4114 = vpack.c.b16 %v4106, %v4106
      %v4115 = vpack.c.b16 %v4107, %v4107
      %v4117 = vshrl.u32 %v3908, 16
      %v4119 = vshll.u32 %v3908, 16
      %v4121 = vrot.slane %v4119, 1
      %v4122 = vor.u32 %v4117, %v4121
      %v4124 = vshll.u32 %v4108, 16
      %v4126 = vrot.slane %v4124, 1
      %v4127 = vsel %vm280, %v4122, %v4126
      %v4129 = vshrl.u32 %v3909, 16
      %v4131 = vshll.u32 %v3909, 16
      %v4133 = vrot.slane %v4131, 1
      %v4134 = vor.u32 %v4129, %v4133
      %v4136 = vshll.u32 %v4109, 16
      %v4138 = vrot.slane %v4136, 1
      %v4139 = vsel %vm280, %v4134, %v4138
      %v4141 = vshrl.u32 %v3910, 16
      %v4143 = vshll.u32 %v3910, 16
      %v4145 = vrot.slane %v4143, 1
      %v4146 = vor.u32 %v4141, %v4145
      %v4148 = vshll.u32 %v4110, 16
      %v4150 = vrot.slane %v4148, 1
      %v4151 = vsel %vm280, %v4146, %v4150
      %v4153 = vshrl.u32 %v3911, 16
      %v4155 = vshll.u32 %v3911, 16
      %v4157 = vrot.slane %v4155, 1
      %v4158 = vor.u32 %v4153, %v4157
      %v4160 = vshll.u32 %v4111, 16
      %v4162 = vrot.slane %v4160, 1
      %v4163 = vsel %vm280, %v4158, %v4162
      %v4165 = vshrl.u32 %v3912, 16
      %v4167 = vshll.u32 %v3912, 16
      %v4169 = vrot.slane %v4167, 1
      %v4170 = vor.u32 %v4165, %v4169
      %v4172 = vshll.u32 %v4112, 16
      %v4174 = vrot.slane %v4172, 1
      %v4175 = vsel %vm280, %v4170, %v4174
      %v4177 = vshrl.u32 %v3913, 16
      %v4179 = vshll.u32 %v3913, 16
      %v4181 = vrot.slane %v4179, 1
      %v4182 = vor.u32 %v4177, %v4181
      %v4184 = vshll.u32 %v4113, 16
      %v4186 = vrot.slane %v4184, 1
      %v4187 = vsel %vm280, %v4182, %v4186
      %v4189 = vshrl.u32 %v3914, 16
      %v4191 = vshll.u32 %v3914, 16
      %v4193 = vrot.slane %v4191, 1
      %v4194 = vor.u32 %v4189, %v4193
      %v4196 = vshll.u32 %v4114, 16
      %v4198 = vrot.slane %v4196, 1
      %v4199 = vsel %vm280, %v4194, %v4198
      %v4201 = vshrl.u32 %v3915, 16
      %v4203 = vshll.u32 %v3915, 16
      %v4205 = vrot.slane %v4203, 1
      %v4206 = vor.u32 %v4201, %v4205
      %v4208 = vshll.u32 %v4115, 16
      %v4210 = vrot.slane %v4208, 1
      %v4211 = vsel %vm280, %v4206, %v4210
      %v4220 = vrot.slane %v3972, 1
      %v4221 = vrot.slane %v3973, 1
      %v4222 = vsel %vm362, %v4220, %v4221
      %v4223 = vrot.slane %v3974, 1
      %v4224 = vrot.slane %v3975, 1
      %v4225 = vsel %vm362, %v4223, %v4224
      %v4226 = vrot.slane %v3976, 1
      %v4227 = vrot.slane %v3977, 1
      %v4228 = vsel %vm362, %v4226, %v4227
      %v4229 = vrot.slane %v3978, 1
      %v4230 = vrot.slane %v3979, 1
      %v4231 = vsel %vm362, %v4229, %v4230
      %v4232 = vrot.slane %v3980, 1
      %v4233 = vrot.slane %v3981, 1
      %v4234 = vsel %vm362, %v4232, %v4233
      %v4235 = vrot.slane %v3982, 1
      %v4236 = vrot.slane %v3983, 1
      %v4237 = vsel %vm362, %v4235, %v4236
      %v4238 = vrot.slane %v3984, 1
      %v4239 = vrot.slane %v3985, 1
      %v4240 = vsel %vm362, %v4238, %v4239
      %v4241 = vrot.slane %v3986, 1
      %v4242 = vrot.slane %v3987, 1
      %v4243 = vsel %vm362, %v4241, %v4242
      %s4252 = scalar_lea.vmem %s2, 192
      %v4253 = vld [vmem:[%s4252] sm:$0xf]
      %v4254 = vld [vmem:[%s4252 + $0x4] sm:$0xf]
      %v4255 = vld [vmem:[%s4252 + $0x8] sm:$0xf]
      %v4256 = vld [vmem:[%s4252 + $0xc] sm:$0xf]
      %v4257 = vld [vmem:[%s4252 + $0x10] sm:$0xf]
      %v4258 = vld [vmem:[%s4252 + $0x14] sm:$0xf]
      %v4259 = vld [vmem:[%s4252 + $0x18] sm:$0xf]
      %v4260 = vld [vmem:[%s4252 + $0x1c] sm:$0xf]
      %v4261 = vld [vmem:[%s4252 + $0x20] sm:$0xf]
      %v4262 = vld [vmem:[%s4252 + $0x24] sm:$0xf]
      %v4263 = vld [vmem:[%s4252 + $0x28] sm:$0xf]
      %v4264 = vld [vmem:[%s4252 + $0x2c] sm:$0xf]
      %v4265 = vld [vmem:[%s4252 + $0x30] sm:$0xf]
      %v4266 = vld [vmem:[%s4252 + $0x34] sm:$0xf]
      %v4267 = vld [vmem:[%s4252 + $0x38] sm:$0xf]
      %v4268 = vld [vmem:[%s4252 + $0x3c] sm:$0xf]
      %v4269 = vld [vmem:[%s4252 + $0x40] sm:$0xf]
      %v4270 = vld [vmem:[%s4252 + $0x44] sm:$0xf]
      %v4271 = vld [vmem:[%s4252 + $0x48] sm:$0xf]
      %v4272 = vld [vmem:[%s4252 + $0x4c] sm:$0xf]
      %v4273 = vld [vmem:[%s4252 + $0x50] sm:$0xf]
      %v4274 = vld [vmem:[%s4252 + $0x54] sm:$0xf]
      %v4275 = vld [vmem:[%s4252 + $0x58] sm:$0xf]
      %v4276 = vld [vmem:[%s4252 + $0x5c] sm:$0xf]
      %v4277 = vld [vmem:[%s4252 + $0x60] sm:$0xf]
      %v4278 = vld [vmem:[%s4252 + $0x64] sm:$0xf]
      %v4279 = vld [vmem:[%s4252 + $0x68] sm:$0xf]
      %v4280 = vld [vmem:[%s4252 + $0x6c] sm:$0xf]
      %v4281 = vld [vmem:[%s4252 + $0x70] sm:$0xf]
      %v4282 = vld [vmem:[%s4252 + $0x74] sm:$0xf]
      %v4283 = vld [vmem:[%s4252 + $0x78] sm:$0xf]
      %v4284 = vld [vmem:[%s4252 + $0x7c] sm:$0xf]
      %v4285 = vld [vmem:[%s4252 + $0x80] sm:$0xf]
      %v4286 = vld [vmem:[%s4252 + $0x84] sm:$0xf]
      %v4287 = vld [vmem:[%s4252 + $0x88] sm:$0xf]
      %v4288 = vld [vmem:[%s4252 + $0x8c] sm:$0xf]
      %v4289 = vld [vmem:[%s4252 + $0x90] sm:$0xf]
      %v4290 = vld [vmem:[%s4252 + $0x94] sm:$0xf]
      %v4291 = vld [vmem:[%s4252 + $0x98] sm:$0xf]
      %v4292 = vld [vmem:[%s4252 + $0x9c] sm:$0xf]
      %v4293 = vld [vmem:[%s4252 + $0xa0] sm:$0xf]
      %v4294 = vld [vmem:[%s4252 + $0xa4] sm:$0xf]
      %v4295 = vld [vmem:[%s4252 + $0xa8] sm:$0xf]
      %v4296 = vld [vmem:[%s4252 + $0xac] sm:$0xf]
      %v4297 = vld [vmem:[%s4252 + $0xb0] sm:$0xf]
      %v4298 = vld [vmem:[%s4252 + $0xb4] sm:$0xf]
      %v4299 = vld [vmem:[%s4252 + $0xb8] sm:$0xf]
      %v4300 = vld [vmem:[%s4252 + $0xbc] sm:$0xf]
      %v4349 = vunpack.c.l.b16 %v4253
      %v4350 = vunpack.c.l.b16 %v4254
      %v4351 = vunpack.c.l.b16 %v4255
      %v4352 = vunpack.c.l.b16 %v4256
      %v4353 = vunpack.c.l.b16 %v4257
      %v4354 = vunpack.c.l.b16 %v4258
      %v4355 = vunpack.c.l.b16 %v4259
      %v4356 = vunpack.c.l.b16 %v4260
      %v4357 = vunpack.c.l.b16 %v4261
      %v4358 = vunpack.c.l.b16 %v4262
      %v4359 = vunpack.c.l.b16 %v4263
      %v4360 = vunpack.c.l.b16 %v4264
      %v4361 = vunpack.c.l.b16 %v4265
      %v4362 = vunpack.c.l.b16 %v4266
      %v4363 = vunpack.c.l.b16 %v4267
      %v4364 = vunpack.c.l.b16 %v4268
      %v4365 = vunpack.c.l.b16 %v4269
      %v4366 = vunpack.c.l.b16 %v4270
      %v4367 = vunpack.c.l.b16 %v4271
      %v4368 = vunpack.c.l.b16 %v4272
      %v4369 = vunpack.c.l.b16 %v4273
      %v4370 = vunpack.c.l.b16 %v4274
      %v4371 = vunpack.c.l.b16 %v4275
      %v4372 = vunpack.c.l.b16 %v4276
      %v4373 = vunpack.c.l.b16 %v4277
      %v4374 = vunpack.c.l.b16 %v4278
      %v4375 = vunpack.c.l.b16 %v4279
      %v4376 = vunpack.c.l.b16 %v4280
      %v4377 = vunpack.c.l.b16 %v4281
      %v4378 = vunpack.c.l.b16 %v4282
      %v4379 = vunpack.c.l.b16 %v4283
      %v4380 = vunpack.c.l.b16 %v4284
      %v4381 = vunpack.c.l.b16 %v4285
      %v4382 = vunpack.c.l.b16 %v4286
      %v4383 = vunpack.c.l.b16 %v4287
      %v4384 = vunpack.c.l.b16 %v4288
      %v4385 = vunpack.c.l.b16 %v4289
      %v4386 = vunpack.c.l.b16 %v4290
      %v4387 = vunpack.c.l.b16 %v4291
      %v4388 = vunpack.c.l.b16 %v4292
      %v4389 = vunpack.c.l.b16 %v4293
      %v4390 = vunpack.c.l.b16 %v4294
      %v4391 = vunpack.c.l.b16 %v4295
      %v4392 = vunpack.c.l.b16 %v4296
      %v4393 = vunpack.c.l.b16 %v4297
      %v4394 = vunpack.c.l.b16 %v4298
      %v4395 = vunpack.c.l.b16 %v4299
      %v4396 = vunpack.c.l.b16 %v4300
      %v4397 = vpack.c.b16 %v4350, %v4349
      %v4398 = vpack.c.b16 %v4352, %v4351
      %v4399 = vpack.c.b16 %v4354, %v4353
      %v4400 = vpack.c.b16 %v4356, %v4355
      %v4401 = vpack.c.b16 %v4358, %v4357
      %v4402 = vpack.c.b16 %v4360, %v4359
      %v4403 = vpack.c.b16 %v4362, %v4361
      %v4404 = vpack.c.b16 %v4364, %v4363
      %v4405 = vpack.c.b16 %v4366, %v4365
      %v4406 = vpack.c.b16 %v4368, %v4367
      %v4407 = vpack.c.b16 %v4370, %v4369
      %v4408 = vpack.c.b16 %v4372, %v4371
      %v4409 = vpack.c.b16 %v4374, %v4373
      %v4410 = vpack.c.b16 %v4376, %v4375
      %v4411 = vpack.c.b16 %v4378, %v4377
      %v4412 = vpack.c.b16 %v4380, %v4379
      %v4413 = vpack.c.b16 %v4382, %v4381
      %v4414 = vpack.c.b16 %v4384, %v4383
      %v4415 = vpack.c.b16 %v4386, %v4385
      %v4416 = vpack.c.b16 %v4388, %v4387
      %v4417 = vpack.c.b16 %v4390, %v4389
      %v4418 = vpack.c.b16 %v4392, %v4391
      %v4419 = vpack.c.b16 %v4394, %v4393
      %v4420 = vpack.c.b16 %v4396, %v4395
      %4445 = vmatprep.subr.bf16.mxu0 0
      %4446 = vmatpush1.bf16.msra.mxu0 %v4404
      %4447 = vmatprep.subr.bf16.mxu0 0
      %4448 = vmatpush1.bf16.msra.mxu0 %v4403
      %4449 = vmatprep.subr.bf16.mxu0 0
      %4450 = vmatpush1.bf16.msra.mxu0 %v4402
      %4451 = vmatprep.subr.bf16.mxu0 0
      %4452 = vmatpush1.bf16.msra.mxu0 %v4401
      %4453 = vmatprep.subr.bf16.mxu0 0
      %4454 = vmatpush1.bf16.msra.mxu0 %v4400
      %4455 = vmatprep.subr.bf16.mxu0 0
      %4456 = vmatpush1.bf16.msra.mxu0 %v4399
      %4457 = vmatprep.subr.bf16.mxu0 0
      %4458 = vmatpush1.bf16.msra.mxu0 %v4398
      %4459 = vmatprep.subr.bf16.mxu0 0
      %4460 = vmatpush1.bf16.msra.mxu0 %v4397
      %4461 = vmatprep.subr.bf16.mxu0 0
      %4462 = vmatpush2.bf16.msra.mxu0 %v4412
      %4463 = vmatprep.subr.bf16.mxu0 0
      %4464 = vmatpush2.bf16.msra.mxu0 %v4411
      %4465 = vmatprep.subr.bf16.mxu0 0
      %4466 = vmatpush2.bf16.msra.mxu0 %v4410
      %4467 = vmatprep.subr.bf16.mxu0 0
      %4468 = vmatpush2.bf16.msra.mxu0 %v4409
      %4469 = vmatprep.subr.bf16.mxu0 0
      %4470 = vmatpush2.bf16.msra.mxu0 %v4408
      %4471 = vmatprep.subr.bf16.mxu0 0
      %4472 = vmatpush2.bf16.msra.mxu0 %v4407
      %4473 = vmatprep.subr.bf16.mxu0 0
      %4474 = vmatpush2.bf16.msra.mxu0 %v4406
      %4475 = vmatprep.subr.bf16.mxu0 0
      %4476 = vmatpush2.bf16.msra.mxu0 %v4405
      %4477 = vmatprep.mubr.bf16.mxu0 %v3999
      %4478 = vmatmul.mubr.bf16.gmra.mxu0 %v3908
      %v4479 = vpop.f32.mrf.mxu0
      %v4480 = vadd.f32 0.0, %v4479
      %v4481 = vpop.f32.mrf.mxu0
      %v4482 = vpop.f32.mrf.mxu0
      %v4483 = vadd.f32 0.0, %v4482
      %v4484 = vpop.f32.mrf.mxu0
      %4485 = vmatprep.mubr.bf16.mxu0 %v4011
      %4486 = vmatmul.mubr.bf16.gmra.mxu0 %v3909
      %v4487 = vpop.f32.mrf.mxu0
      %v4488 = vadd.f32 0.0, %v4487
      %v4489 = vpop.f32.mrf.mxu0
      %v4490 = vpop.f32.mrf.mxu0
      %v4491 = vadd.f32 0.0, %v4490
      %v4492 = vpop.f32.mrf.mxu0
      %4493 = vmatprep.mubr.bf16.mxu0 %v4023
      %4494 = vmatmul.mubr.bf16.gmra.mxu0 %v3910
      %v4495 = vpop.f32.mrf.mxu0
      %v4496 = vadd.f32 0.0, %v4495
      %v4497 = vpop.f32.mrf.mxu0
      %v4498 = vpop.f32.mrf.mxu0
      %v4499 = vadd.f32 0.0, %v4498
      %v4500 = vpop.f32.mrf.mxu0
      %4501 = vmatprep.mubr.bf16.mxu0 %v4035
      %4502 = vmatmul.mubr.bf16.gmra.mxu0 %v3911
      %v4503 = vpop.f32.mrf.mxu0
      %v4504 = vadd.f32 0.0, %v4503
      %v4505 = vpop.f32.mrf.mxu0
      %v4506 = vpop.f32.mrf.mxu0
      %v4507 = vadd.f32 0.0, %v4506
      %v4508 = vpop.f32.mrf.mxu0
      %4509 = vmatprep.mubr.bf16.mxu0 %v4047
      %4510 = vmatmul.mubr.bf16.gmra.mxu0 %v3912
      %v4511 = vpop.f32.mrf.mxu0
      %v4512 = vadd.f32 0.0, %v4511
      %v4513 = vpop.f32.mrf.mxu0
      %v4514 = vpop.f32.mrf.mxu0
      %v4515 = vadd.f32 0.0, %v4514
      %v4516 = vpop.f32.mrf.mxu0
      %4517 = vmatprep.mubr.bf16.mxu0 %v4059
      %4518 = vmatmul.mubr.bf16.gmra.mxu0 %v3913
      %v4519 = vpop.f32.mrf.mxu0
      %v4520 = vadd.f32 0.0, %v4519
      %v4521 = vpop.f32.mrf.mxu0
      %v4522 = vpop.f32.mrf.mxu0
      %v4523 = vadd.f32 0.0, %v4522
      %v4524 = vpop.f32.mrf.mxu0
      %4525 = vmatprep.mubr.bf16.mxu0 %v4071
      %4526 = vmatmul.mubr.bf16.gmra.mxu0 %v3914
      %v4527 = vpop.f32.mrf.mxu0
      %v4528 = vadd.f32 0.0, %v4527
      %v4529 = vpop.f32.mrf.mxu0
      %v4530 = vpop.f32.mrf.mxu0
      %v4531 = vadd.f32 0.0, %v4530
      %v4532 = vpop.f32.mrf.mxu0
      %4533 = vmatprep.mubr.bf16.mxu0 %v4083
      %4534 = vmatmul.mubr.bf16.gmra.mxu0 %v3915
      %v4535 = vpop.f32.mrf.mxu0
      %v4536 = vadd.f32 0.0, %v4535
      %v4537 = vpop.f32.mrf.mxu0
      %v4538 = vpop.f32.mrf.mxu0
      %v4539 = vadd.f32 0.0, %v4538
      %v4540 = vpop.f32.mrf.mxu0
      %4541 = vdwg.mxu0
      %4542 = vmatprep.subr.bf16.mxu0 0
      %4543 = vmatpush1.bf16.msra.mxu0 %v4420
      %4544 = vmatprep.subr.bf16.mxu0 0
      %4545 = vmatpush1.bf16.msra.mxu0 %v4419
      %4546 = vmatprep.subr.bf16.mxu0 0
      %4547 = vmatpush1.bf16.msra.mxu0 %v4418
      %4548 = vmatprep.subr.bf16.mxu0 0
      %4549 = vmatpush1.bf16.msra.mxu0 %v4417
      %4550 = vmatprep.subr.bf16.mxu0 0
      %4551 = vmatpush1.bf16.msra.mxu0 %v4416
      %4552 = vmatprep.subr.bf16.mxu0 0
      %4553 = vmatpush1.bf16.msra.mxu0 %v4415
      %4554 = vmatprep.subr.bf16.mxu0 0
      %4555 = vmatpush1.bf16.msra.mxu0 %v4414
      %4556 = vmatprep.subr.bf16.mxu0 0
      %4557 = vmatpush1.bf16.msra.mxu0 %v4413
      %4558 = vmatprep.subr.bf16.mxu0 0
      %4559 = vmatpush2.bf16.msra.mxu0 0
      %4560 = vmatprep.subr.bf16.mxu0 0
      %4561 = vmatpush2.bf16.msra.mxu0 0
      %4562 = vmatprep.subr.bf16.mxu0 0
      %4563 = vmatpush2.bf16.msra.mxu0 0
      %4564 = vmatprep.subr.bf16.mxu0 0
      %4565 = vmatpush2.bf16.msra.mxu0 0
      %4566 = vmatprep.subr.bf16.mxu0 0
      %4567 = vmatpush2.bf16.msra.mxu0 0
      %4568 = vmatprep.subr.bf16.mxu0 0
      %4569 = vmatpush2.bf16.msra.mxu0 0
      %4570 = vmatprep.subr.bf16.mxu0 0
      %4571 = vmatpush2.bf16.msra.mxu0 0
      %4572 = vmatprep.subr.bf16.mxu0 0
      %4573 = vmatpush2.bf16.msra.mxu0 0
      %4574 = vmatprep.mubr.bf16.mxu0 0
      %4575 = vmatmul.mubr.bf16.gmra.mxu0 %v4127
      %v4576 = vpop.f32.mrf.mxu0
      %v4577 = vadd.f32 %v4480, %v4576
      %v4578 = vpop.f32.mrf.mxu0
      %v4579 = vpop.f32.mrf.mxu0
      %v4580 = vadd.f32 %v4483, %v4579
      %v4581 = vpop.f32.mrf.mxu0
      %4582 = vmatprep.mubr.bf16.mxu0 0
      %4583 = vmatmul.mubr.bf16.gmra.mxu0 %v4139
      %v4584 = vpop.f32.mrf.mxu0
      %v4585 = vadd.f32 %v4488, %v4584
      %v4586 = vpop.f32.mrf.mxu0
      %v4587 = vpop.f32.mrf.mxu0
      %v4588 = vadd.f32 %v4491, %v4587
      %v4589 = vpop.f32.mrf.mxu0
      %4590 = vmatprep.mubr.bf16.mxu0 0
      %4591 = vmatmul.mubr.bf16.gmra.mxu0 %v4151
      %v4592 = vpop.f32.mrf.mxu0
      %v4593 = vadd.f32 %v4496, %v4592
      %v4594 = vpop.f32.mrf.mxu0
      %v4595 = vpop.f32.mrf.mxu0
      %v4596 = vadd.f32 %v4499, %v4595
      %v4597 = vpop.f32.mrf.mxu0
      %4598 = vmatprep.mubr.bf16.mxu0 0
      %4599 = vmatmul.mubr.bf16.gmra.mxu0 %v4163
      %v4600 = vpop.f32.mrf.mxu0
      %v4601 = vadd.f32 %v4504, %v4600
      %v4602 = vpop.f32.mrf.mxu0
      %v4603 = vpop.f32.mrf.mxu0
      %v4604 = vadd.f32 %v4507, %v4603
      %v4605 = vpop.f32.mrf.mxu0
      %4606 = vmatprep.mubr.bf16.mxu0 0
      %4607 = vmatmul.mubr.bf16.gmra.mxu0 %v4175
      %v4608 = vpop.f32.mrf.mxu0
      %v4609 = vadd.f32 %v4512, %v4608
      %v4610 = vpop.f32.mrf.mxu0
      %v4611 = vpop.f32.mrf.mxu0
      %v4612 = vadd.f32 %v4515, %v4611
      %v4613 = vpop.f32.mrf.mxu0
      %4614 = vmatprep.mubr.bf16.mxu0 0
      %4615 = vmatmul.mubr.bf16.gmra.mxu0 %v4187
      %v4616 = vpop.f32.mrf.mxu0
      %v4617 = vadd.f32 %v4520, %v4616
      %v4618 = vpop.f32.mrf.mxu0
      %v4619 = vpop.f32.mrf.mxu0
      %v4620 = vadd.f32 %v4523, %v4619
      %v4621 = vpop.f32.mrf.mxu0
      %4622 = vmatprep.mubr.bf16.mxu0 0
      %4623 = vmatmul.mubr.bf16.gmra.mxu0 %v4199
      %v4624 = vpop.f32.mrf.mxu0
      %v4625 = vadd.f32 %v4528, %v4624
      %v4626 = vpop.f32.mrf.mxu0
      %v4627 = vpop.f32.mrf.mxu0
      %v4628 = vadd.f32 %v4531, %v4627
      %v4629 = vpop.f32.mrf.mxu0
      %4630 = vmatprep.mubr.bf16.mxu0 0
      %4631 = vmatmul.mubr.bf16.gmra.mxu0 %v4211
      %v4632 = vpop.f32.mrf.mxu0
      %v4633 = vadd.f32 %v4536, %v4632
      %v4634 = vpop.f32.mrf.mxu0
      %v4635 = vpop.f32.mrf.mxu0
      %v4636 = vadd.f32 %v4539, %v4635
      %v4637 = vpop.f32.mrf.mxu0
      %4638 = vdwg.mxu0
      %4639 = vmatprep.subr.bf16.mxu0 0
      %4640 = vmatpush1.bf16.msra.mxu0 %v4404
      %4641 = vmatprep.subr.bf16.mxu0 0
      %4642 = vmatpush1.bf16.msra.mxu0 %v4403
      %4643 = vmatprep.subr.bf16.mxu0 0
      %4644 = vmatpush1.bf16.msra.mxu0 %v4402
      %4645 = vmatprep.subr.bf16.mxu0 0
      %4646 = vmatpush1.bf16.msra.mxu0 %v4401
      %4647 = vmatprep.subr.bf16.mxu0 0
      %4648 = vmatpush1.bf16.msra.mxu0 %v4400
      %4649 = vmatprep.subr.bf16.mxu0 0
      %4650 = vmatpush1.bf16.msra.mxu0 %v4399
      %4651 = vmatprep.subr.bf16.mxu0 0
      %4652 = vmatpush1.bf16.msra.mxu0 %v4398
      %4653 = vmatprep.subr.bf16.mxu0 0
      %4654 = vmatpush1.bf16.msra.mxu0 %v4397
      %4655 = vmatprep.subr.bf16.mxu0 0
      %4656 = vmatpush2.bf16.msra.mxu0 %v4412
      %4657 = vmatprep.subr.bf16.mxu0 0
      %4658 = vmatpush2.bf16.msra.mxu0 %v4411
      %4659 = vmatprep.subr.bf16.mxu0 0
      %4660 = vmatpush2.bf16.msra.mxu0 %v4410
      %4661 = vmatprep.subr.bf16.mxu0 0
      %4662 = vmatpush2.bf16.msra.mxu0 %v4409
      %4663 = vmatprep.subr.bf16.mxu0 0
      %4664 = vmatpush2.bf16.msra.mxu0 %v4408
      %4665 = vmatprep.subr.bf16.mxu0 0
      %4666 = vmatpush2.bf16.msra.mxu0 %v4407
      %4667 = vmatprep.subr.bf16.mxu0 0
      %4668 = vmatpush2.bf16.msra.mxu0 %v4406
      %4669 = vmatprep.subr.bf16.mxu0 0
      %4670 = vmatpush2.bf16.msra.mxu0 %v4405
      %4671 = vmatprep.mubr.bf16.mxu0 %v4127
      %4672 = vmatmul.mubr.bf16.gmra.mxu0 %v3999
      %v4673 = vpop.f32.mrf.mxu0
      %v4674 = vadd.f32 0.0, %v4673
      %v4675 = vpop.f32.mrf.mxu0
      %v4676 = vpop.f32.mrf.mxu0
      %v4677 = vadd.f32 0.0, %v4676
      %v4678 = vpop.f32.mrf.mxu0
      %4679 = vmatprep.mubr.bf16.mxu0 %v4139
      %4680 = vmatmul.mubr.bf16.gmra.mxu0 %v4011
      %v4681 = vpop.f32.mrf.mxu0
      %v4682 = vadd.f32 0.0, %v4681
      %v4683 = vpop.f32.mrf.mxu0
      %v4684 = vpop.f32.mrf.mxu0
      %v4685 = vadd.f32 0.0, %v4684
      %v4686 = vpop.f32.mrf.mxu0
      %4687 = vmatprep.mubr.bf16.mxu0 %v4151
      %4688 = vmatmul.mubr.bf16.gmra.mxu0 %v4023
      %v4689 = vpop.f32.mrf.mxu0
      %v4690 = vadd.f32 0.0, %v4689
      %v4691 = vpop.f32.mrf.mxu0
      %v4692 = vpop.f32.mrf.mxu0
      %v4693 = vadd.f32 0.0, %v4692
      %v4694 = vpop.f32.mrf.mxu0
      %4695 = vmatprep.mubr.bf16.mxu0 %v4163
      %4696 = vmatmul.mubr.bf16.gmra.mxu0 %v4035
      %v4697 = vpop.f32.mrf.mxu0
      %v4698 = vadd.f32 0.0, %v4697
      %v4699 = vpop.f32.mrf.mxu0
      %v4700 = vpop.f32.mrf.mxu0
      %v4701 = vadd.f32 0.0, %v4700
      %v4702 = vpop.f32.mrf.mxu0
      %4703 = vmatprep.mubr.bf16.mxu0 %v4175
      %4704 = vmatmul.mubr.bf16.gmra.mxu0 %v4047
      %v4705 = vpop.f32.mrf.mxu0
      %v4706 = vadd.f32 0.0, %v4705
      %v4707 = vpop.f32.mrf.mxu0
      %v4708 = vpop.f32.mrf.mxu0
      %v4709 = vadd.f32 0.0, %v4708
      %v4710 = vpop.f32.mrf.mxu0
      %4711 = vmatprep.mubr.bf16.mxu0 %v4187
      %4712 = vmatmul.mubr.bf16.gmra.mxu0 %v4059
      %v4713 = vpop.f32.mrf.mxu0
      %v4714 = vadd.f32 0.0, %v4713
      %v4715 = vpop.f32.mrf.mxu0
      %v4716 = vpop.f32.mrf.mxu0
      %v4717 = vadd.f32 0.0, %v4716
      %v4718 = vpop.f32.mrf.mxu0
      %4719 = vmatprep.mubr.bf16.mxu0 %v4199
      %4720 = vmatmul.mubr.bf16.gmra.mxu0 %v4071
      %v4721 = vpop.f32.mrf.mxu0
      %v4722 = vadd.f32 0.0, %v4721
      %v4723 = vpop.f32.mrf.mxu0
      %v4724 = vpop.f32.mrf.mxu0
      %v4725 = vadd.f32 0.0, %v4724
      %v4726 = vpop.f32.mrf.mxu0
      %4727 = vmatprep.mubr.bf16.mxu0 %v4211
      %4728 = vmatmul.mubr.bf16.gmra.mxu0 %v4083
      %v4729 = vpop.f32.mrf.mxu0
      %v4730 = vadd.f32 0.0, %v4729
      %v4731 = vpop.f32.mrf.mxu0
      %v4732 = vpop.f32.mrf.mxu0
      %v4733 = vadd.f32 0.0, %v4732
      %v4734 = vpop.f32.mrf.mxu0
      %4735 = vdwg.mxu0
      %4736 = vmatprep.subr.bf16.mxu0 0
      %4737 = vmatpush1.bf16.msra.mxu0 %v4420
      %4738 = vmatprep.subr.bf16.mxu0 0
      %4739 = vmatpush1.bf16.msra.mxu0 %v4419
      %4740 = vmatprep.subr.bf16.mxu0 0
      %4741 = vmatpush1.bf16.msra.mxu0 %v4418
      %4742 = vmatprep.subr.bf16.mxu0 0
      %4743 = vmatpush1.bf16.msra.mxu0 %v4417
      %4744 = vmatprep.subr.bf16.mxu0 0
      %4745 = vmatpush1.bf16.msra.mxu0 %v4416
      %4746 = vmatprep.subr.bf16.mxu0 0
      %4747 = vmatpush1.bf16.msra.mxu0 %v4415
      %4748 = vmatprep.subr.bf16.mxu0 0
      %4749 = vmatpush1.bf16.msra.mxu0 %v4414
      %4750 = vmatprep.subr.bf16.mxu0 0
      %4751 = vmatpush1.bf16.msra.mxu0 %v4413
      %4752 = vmatprep.subr.bf16.mxu0 0
      %4753 = vmatpush2.bf16.msra.mxu0 0
      %4754 = vmatprep.subr.bf16.mxu0 0
      %4755 = vmatpush2.bf16.msra.mxu0 0
      %4756 = vmatprep.subr.bf16.mxu0 0
      %4757 = vmatpush2.bf16.msra.mxu0 0
      %4758 = vmatprep.subr.bf16.mxu0 0
      %4759 = vmatpush2.bf16.msra.mxu0 0
      %4760 = vmatprep.subr.bf16.mxu0 0
      %4761 = vmatpush2.bf16.msra.mxu0 0
      %4762 = vmatprep.subr.bf16.mxu0 0
      %4763 = vmatpush2.bf16.msra.mxu0 0
      %4764 = vmatprep.subr.bf16.mxu0 0
      %4765 = vmatpush2.bf16.msra.mxu0 0
      %4766 = vmatprep.subr.bf16.mxu0 0
      %4767 = vmatpush2.bf16.msra.mxu0 0
      %4768 = vmatprep.mubr.bf16.mxu0 0
      %4769 = vmatmul.mubr.bf16.gmra.mxu0 %v4222
      %v4770 = vpop.f32.mrf.mxu0
      %v4771 = vadd.f32 %v4674, %v4770
      %v4772 = vpop.f32.mrf.mxu0
      %v4773 = vpop.f32.mrf.mxu0
      %v4774 = vadd.f32 %v4677, %v4773
      %v4775 = vpop.f32.mrf.mxu0
      %4776 = vmatprep.mubr.bf16.mxu0 0
      %4777 = vmatmul.mubr.bf16.gmra.mxu0 %v4225
      %v4778 = vpop.f32.mrf.mxu0
      %v4779 = vadd.f32 %v4682, %v4778
      %v4780 = vpop.f32.mrf.mxu0
      %v4781 = vpop.f32.mrf.mxu0
      %v4782 = vadd.f32 %v4685, %v4781
      %v4783 = vpop.f32.mrf.mxu0
      %4784 = vmatprep.mubr.bf16.mxu0 0
      %4785 = vmatmul.mubr.bf16.gmra.mxu0 %v4228
      %v4786 = vpop.f32.mrf.mxu0
      %v4787 = vadd.f32 %v4690, %v4786
      %v4788 = vpop.f32.mrf.mxu0
      %v4789 = vpop.f32.mrf.mxu0
      %v4790 = vadd.f32 %v4693, %v4789
      %v4791 = vpop.f32.mrf.mxu0
      %4792 = vmatprep.mubr.bf16.mxu0 0
      %4793 = vmatmul.mubr.bf16.gmra.mxu0 %v4231
      %v4794 = vpop.f32.mrf.mxu0
      %v4795 = vadd.f32 %v4698, %v4794
      %v4796 = vpop.f32.mrf.mxu0
      %v4797 = vpop.f32.mrf.mxu0
      %v4798 = vadd.f32 %v4701, %v4797
      %v4799 = vpop.f32.mrf.mxu0
      %4800 = vmatprep.mubr.bf16.mxu0 0
      %4801 = vmatmul.mubr.bf16.gmra.mxu0 %v4234
      %v4802 = vpop.f32.mrf.mxu0
      %v4803 = vadd.f32 %v4706, %v4802
      %v4804 = vpop.f32.mrf.mxu0
      %v4805 = vpop.f32.mrf.mxu0
      %v4806 = vadd.f32 %v4709, %v4805
      %v4807 = vpop.f32.mrf.mxu0
      %4808 = vmatprep.mubr.bf16.mxu0 0
      %4809 = vmatmul.mubr.bf16.gmra.mxu0 %v4237
      %v4810 = vpop.f32.mrf.mxu0
      %v4811 = vadd.f32 %v4714, %v4810
      %v4812 = vpop.f32.mrf.mxu0
      %v4813 = vpop.f32.mrf.mxu0
      %v4814 = vadd.f32 %v4717, %v4813
      %v4815 = vpop.f32.mrf.mxu0
      %4816 = vmatprep.mubr.bf16.mxu0 0
      %4817 = vmatmul.mubr.bf16.gmra.mxu0 %v4240
      %v4818 = vpop.f32.mrf.mxu0
      %v4819 = vadd.f32 %v4722, %v4818
      %v4820 = vpop.f32.mrf.mxu0
      %v4821 = vpop.f32.mrf.mxu0
      %v4822 = vadd.f32 %v4725, %v4821
      %v4823 = vpop.f32.mrf.mxu0
      %4824 = vmatprep.mubr.bf16.mxu0 0
      %4825 = vmatmul.mubr.bf16.gmra.mxu0 %v4243
      %v4826 = vpop.f32.mrf.mxu0
      %v4827 = vadd.f32 %v4730, %v4826
      %v4828 = vpop.f32.mrf.mxu0
      %v4829 = vpop.f32.mrf.mxu0
      %v4830 = vadd.f32 %v4733, %v4829
      %v4831 = vpop.f32.mrf.mxu0
      %4832 = vdwg.mxu0
      %v4833 = vld [vmem:[#allocation4] sm:$0xff]
      %v4834 = vld [vmem:[#allocation4 + $0x8] sm:$0xff]
      %v4835 = vld [vmem:[#allocation4 + $0x10] sm:$0xff]
      %v4836 = vld [vmem:[#allocation4 + $0x18] sm:$0xff]
      %v4837 = vld [vmem:[#allocation4 + $0x20] sm:$0xff]
      %v4838 = vld [vmem:[#allocation4 + $0x28] sm:$0xff]
      %v4839 = vld [vmem:[#allocation4 + $0x30] sm:$0xff]
      %v4840 = vld [vmem:[#allocation4 + $0x38] sm:$0xff]
      %v4841 = vld [vmem:[#allocation4 + $0x40] sm:$0xff]
      %v4842 = vld [vmem:[#allocation4 + $0x48] sm:$0xff]
      %v4843 = vld [vmem:[#allocation4 + $0x50] sm:$0xff]
      %v4844 = vld [vmem:[#allocation4 + $0x58] sm:$0xff]
      %v4845 = vld [vmem:[#allocation4 + $0x60] sm:$0xff]
      %v4846 = vld [vmem:[#allocation4 + $0x68] sm:$0xff]
      %v4847 = vld [vmem:[#allocation4 + $0x70] sm:$0xff]
      %v4848 = vld [vmem:[#allocation4 + $0x78] sm:$0xff]
      %v4849 = vadd.f32 %v4833, %v4577
      %v4850 = vadd.f32 %v4834, %v4580
      %v4851 = vadd.f32 %v4835, %v4585
      %v4852 = vadd.f32 %v4836, %v4588
      %v4853 = vadd.f32 %v4837, %v4593
      %v4854 = vadd.f32 %v4838, %v4596
      %v4855 = vadd.f32 %v4839, %v4601
      %v4856 = vadd.f32 %v4840, %v4604
      %v4857 = vadd.f32 %v4841, %v4609
      %v4858 = vadd.f32 %v4842, %v4612
      %v4859 = vadd.f32 %v4843, %v4617
      %v4860 = vadd.f32 %v4844, %v4620
      %v4861 = vadd.f32 %v4845, %v4625
      %v4862 = vadd.f32 %v4846, %v4628
      %v4863 = vadd.f32 %v4847, %v4633
      %v4864 = vadd.f32 %v4848, %v4636
      %4865 = vst.msk [vmem:[#allocation4] sm:$0xff] %vm3793, %v4849
      %4866 = vst.msk [vmem:[#allocation4 + $0x8] sm:$0xff] %vm3793, %v4850
      %4867 = vst.msk [vmem:[#allocation4 + $0x10] sm:$0xff] %vm3793, %v4851
      %4868 = vst.msk [vmem:[#allocation4 + $0x18] sm:$0xff] %vm3793, %v4852
      %4869 = vst.msk [vmem:[#allocation4 + $0x20] sm:$0xff] %vm3793, %v4853
      %4870 = vst.msk [vmem:[#allocation4 + $0x28] sm:$0xff] %vm3793, %v4854
      %4871 = vst.msk [vmem:[#allocation4 + $0x30] sm:$0xff] %vm3793, %v4855
      %4872 = vst.msk [vmem:[#allocation4 + $0x38] sm:$0xff] %vm3793, %v4856
      %4873 = vst.msk [vmem:[#allocation4 + $0x40] sm:$0xff] %vm3793, %v4857
      %4874 = vst.msk [vmem:[#allocation4 + $0x48] sm:$0xff] %vm3793, %v4858
      %4875 = vst.msk [vmem:[#allocation4 + $0x50] sm:$0xff] %vm3793, %v4859
      %4876 = vst.msk [vmem:[#allocation4 + $0x58] sm:$0xff] %vm3793, %v4860
      %4877 = vst.msk [vmem:[#allocation4 + $0x60] sm:$0xff] %vm3793, %v4861
      %4878 = vst.msk [vmem:[#allocation4 + $0x68] sm:$0xff] %vm3793, %v4862
      %4879 = vst.msk [vmem:[#allocation4 + $0x70] sm:$0xff] %vm3793, %v4863
      %4880 = vst.msk [vmem:[#allocation4 + $0x78] sm:$0xff] %vm3793, %v4864
      %v4881 = vld [vmem:[#allocation5] sm:$0xff]
      %v4882 = vld [vmem:[#allocation5 + $0x8] sm:$0xff]
      %v4883 = vld [vmem:[#allocation5 + $0x10] sm:$0xff]
      %v4884 = vld [vmem:[#allocation5 + $0x18] sm:$0xff]
      %v4885 = vld [vmem:[#allocation5 + $0x20] sm:$0xff]
      %v4886 = vld [vmem:[#allocation5 + $0x28] sm:$0xff]
      %v4887 = vld [vmem:[#allocation5 + $0x30] sm:$0xff]
      %v4888 = vld [vmem:[#allocation5 + $0x38] sm:$0xff]
      %v4889 = vld [vmem:[#allocation5 + $0x40] sm:$0xff]
      %v4890 = vld [vmem:[#allocation5 + $0x48] sm:$0xff]
      %v4891 = vld [vmem:[#allocation5 + $0x50] sm:$0xff]
      %v4892 = vld [vmem:[#allocation5 + $0x58] sm:$0xff]
      %v4893 = vld [vmem:[#allocation5 + $0x60] sm:$0xff]
      %v4894 = vld [vmem:[#allocation5 + $0x68] sm:$0xff]
      %v4895 = vld [vmem:[#allocation5 + $0x70] sm:$0xff]
      %v4896 = vld [vmem:[#allocation5 + $0x78] sm:$0xff]
      %v4897 = vadd.f32 %v4881, %v4771
      %v4898 = vadd.f32 %v4882, %v4774
      %v4899 = vadd.f32 %v4883, %v4779
      %v4900 = vadd.f32 %v4884, %v4782
      %v4901 = vadd.f32 %v4885, %v4787
      %v4902 = vadd.f32 %v4886, %v4790
      %v4903 = vadd.f32 %v4887, %v4795
      %v4904 = vadd.f32 %v4888, %v4798
      %v4905 = vadd.f32 %v4889, %v4803
      %v4906 = vadd.f32 %v4890, %v4806
      %v4907 = vadd.f32 %v4891, %v4811
      %v4908 = vadd.f32 %v4892, %v4814
      %v4909 = vadd.f32 %v4893, %v4819
      %v4910 = vadd.f32 %v4894, %v4822
      %v4911 = vadd.f32 %v4895, %v4827
      %v4912 = vadd.f32 %v4896, %v4830
      %4913 = vst.msk [vmem:[#allocation5] sm:$0xff] %vm3793, %v4897
      %4914 = vst.msk [vmem:[#allocation5 + $0x8] sm:$0xff] %vm3793, %v4898
      %4915 = vst.msk [vmem:[#allocation5 + $0x10] sm:$0xff] %vm3793, %v4899
      %4916 = vst.msk [vmem:[#allocation5 + $0x18] sm:$0xff] %vm3793, %v4900
      %4917 = vst.msk [vmem:[#allocation5 + $0x20] sm:$0xff] %vm3793, %v4901
      %4918 = vst.msk [vmem:[#allocation5 + $0x28] sm:$0xff] %vm3793, %v4902
      %4919 = vst.msk [vmem:[#allocation5 + $0x30] sm:$0xff] %vm3793, %v4903
      %4920 = vst.msk [vmem:[#allocation5 + $0x38] sm:$0xff] %vm3793, %v4904
      %4921 = vst.msk [vmem:[#allocation5 + $0x40] sm:$0xff] %vm3793, %v4905
      %4922 = vst.msk [vmem:[#allocation5 + $0x48] sm:$0xff] %vm3793, %v4906
      %4923 = vst.msk [vmem:[#allocation5 + $0x50] sm:$0xff] %vm3793, %v4907
      %4924 = vst.msk [vmem:[#allocation5 + $0x58] sm:$0xff] %vm3793, %v4908
      %4925 = vst.msk [vmem:[#allocation5 + $0x60] sm:$0xff] %vm3793, %v4909
      %4926 = vst.msk [vmem:[#allocation5 + $0x68] sm:$0xff] %vm3793, %v4910
      %4927 = vst.msk [vmem:[#allocation5 + $0x70] sm:$0xff] %vm3793, %v4911
      %4928 = vst.msk [vmem:[#allocation5 + $0x78] sm:$0xff] %vm3793, %v4912
      %s4929 = scalar_lea.vmem [#allocation2], 24
      %v4930 = vld [vmem:[%s4929] sm:$0xf]
      %v4931 = vld [vmem:[%s4929 + $0x4] sm:$0xf]
      %v4932 = vld [vmem:[%s4929 + $0x8] sm:$0x1]
      %v4933 = vld [vmem:[%s4929 + $0xc] sm:$0xf]
      %v4934 = vld [vmem:[%s4929 + $0x10] sm:$0xf]
      %v4935 = vld [vmem:[%s4929 + $0x14] sm:$0x1]
      %v4936 = vld [vmem:[%s4929 + $0x18] sm:$0xf]
      %v4937 = vld [vmem:[%s4929 + $0x1c] sm:$0xf]
      %v4938 = vld [vmem:[%s4929 + $0x20] sm:$0x1]
      %v4939 = vld [vmem:[%s4929 + $0x24] sm:$0xf]
      %v4940 = vld [vmem:[%s4929 + $0x28] sm:$0xf]
      %v4941 = vld [vmem:[%s4929 + $0x2c] sm:$0x1]
      %v4942 = vld [vmem:[%s4929 + $0x30] sm:$0xf]
      %v4943 = vld [vmem:[%s4929 + $0x34] sm:$0xf]
      %v4944 = vld [vmem:[%s4929 + $0x38] sm:$0x1]
      %v4945 = vld [vmem:[%s4929 + $0x3c] sm:$0xf]
      %v4946 = vld [vmem:[%s4929 + $0x40] sm:$0xf]
      %v4947 = vld [vmem:[%s4929 + $0x44] sm:$0x1]
      %v4948 = vld [vmem:[%s4929 + $0x48] sm:$0xf]
      %v4949 = vld [vmem:[%s4929 + $0x4c] sm:$0xf]
      %v4950 = vld [vmem:[%s4929 + $0x50] sm:$0x1]
      %v4951 = vld [vmem:[%s4929 + $0x54] sm:$0xf]
      %v4952 = vld [vmem:[%s4929 + $0x58] sm:$0xf]
      %v4953 = vld [vmem:[%s4929 + $0x5c] sm:$0x1]
      %s4954 = scalar_lea.vmem [#allocation3], 24
      %v4955 = vld [vmem:[%s4954] sm:$0xf]
      %v4956 = vld [vmem:[%s4954 + $0x4] sm:$0xf]
      %v4957 = vld [vmem:[%s4954 + $0x8] sm:$0x1]
      %v4958 = vld [vmem:[%s4954 + $0xc] sm:$0xf]
      %v4959 = vld [vmem:[%s4954 + $0x10] sm:$0xf]
      %v4960 = vld [vmem:[%s4954 + $0x14] sm:$0x1]
      %v4961 = vld [vmem:[%s4954 + $0x18] sm:$0xf]
      %v4962 = vld [vmem:[%s4954 + $0x1c] sm:$0xf]
      %v4963 = vld [vmem:[%s4954 + $0x20] sm:$0x1]
      %v4964 = vld [vmem:[%s4954 + $0x24] sm:$0xf]
      %v4965 = vld [vmem:[%s4954 + $0x28] sm:$0xf]
      %v4966 = vld [vmem:[%s4954 + $0x2c] sm:$0x1]
      %v4967 = vld [vmem:[%s4954 + $0x30] sm:$0xf]
      %v4968 = vld [vmem:[%s4954 + $0x34] sm:$0xf]
      %v4969 = vld [vmem:[%s4954 + $0x38] sm:$0x1]
      %v4970 = vld [vmem:[%s4954 + $0x3c] sm:$0xf]
      %v4971 = vld [vmem:[%s4954 + $0x40] sm:$0xf]
      %v4972 = vld [vmem:[%s4954 + $0x44] sm:$0x1]
      %v4973 = vld [vmem:[%s4954 + $0x48] sm:$0xf]
      %v4974 = vld [vmem:[%s4954 + $0x4c] sm:$0xf]
      %v4975 = vld [vmem:[%s4954 + $0x50] sm:$0x1]
      %v4976 = vld [vmem:[%s4954 + $0x54] sm:$0xf]
      %v4977 = vld [vmem:[%s4954 + $0x58] sm:$0xf]
      %v4978 = vld [vmem:[%s4954 + $0x5c] sm:$0x1]
      %v4995 = vunpack.c.l.b16 %v4955
      %v4996 = vunpack.c.l.b16 %v4956
      %v4997 = vunpack.c.l.b16 %v4958
      %v4998 = vunpack.c.l.b16 %v4959
      %v4999 = vunpack.c.l.b16 %v4961
      %v5000 = vunpack.c.l.b16 %v4962
      %v5001 = vunpack.c.l.b16 %v4964
      %v5002 = vunpack.c.l.b16 %v4965
      %v5003 = vunpack.c.l.b16 %v4967
      %v5004 = vunpack.c.l.b16 %v4968
      %v5005 = vunpack.c.l.b16 %v4970
      %v5006 = vunpack.c.l.b16 %v4971
      %v5007 = vunpack.c.l.b16 %v4973
      %v5008 = vunpack.c.l.b16 %v4974
      %v5009 = vunpack.c.l.b16 %v4976
      %v5010 = vunpack.c.l.b16 %v4977
      %v5011 = vpack.c.b16 %v4996, %v4995
      %v5012 = vpack.c.b16 %v4998, %v4997
      %v5013 = vpack.c.b16 %v5000, %v4999
      %v5014 = vpack.c.b16 %v5002, %v5001
      %v5015 = vpack.c.b16 %v5004, %v5003
      %v5016 = vpack.c.b16 %v5006, %v5005
      %v5017 = vpack.c.b16 %v5008, %v5007
      %v5018 = vpack.c.b16 %v5010, %v5009
      %v5051 = vunpack.c.l.b16 %v4930
      %v5052 = vunpack.c.l.b16 %v4931
      %v5053 = vunpack.c.l.b16 %v4932
      %v5054 = vunpack.c.l.b16 %v4933
      %v5055 = vunpack.c.l.b16 %v4934
      %v5056 = vunpack.c.l.b16 %v4935
      %v5057 = vunpack.c.l.b16 %v4936
      %v5058 = vunpack.c.l.b16 %v4937
      %v5059 = vunpack.c.l.b16 %v4938
      %v5060 = vunpack.c.l.b16 %v4939
      %v5061 = vunpack.c.l.b16 %v4940
      %v5062 = vunpack.c.l.b16 %v4941
      %v5063 = vunpack.c.l.b16 %v4942
      %v5064 = vunpack.c.l.b16 %v4943
      %v5065 = vunpack.c.l.b16 %v4944
      %v5066 = vunpack.c.l.b16 %v4945
      %v5067 = vunpack.c.l.b16 %v4946
      %v5068 = vunpack.c.l.b16 %v4947
      %v5069 = vunpack.c.l.b16 %v4948
      %v5070 = vunpack.c.l.b16 %v4949
      %v5071 = vunpack.c.l.b16 %v4950
      %v5072 = vunpack.c.l.b16 %v4951
      %v5073 = vunpack.c.l.b16 %v4952
      %v5074 = vunpack.c.l.b16 %v4953
      %v5075 = vpack.c.b16 %v5052, %v5051
      %v5076 = vpack.c.b16 %v5053, %v5053
      %v5077 = vpack.c.b16 %v5055, %v5054
      %v5078 = vpack.c.b16 %v5056, %v5056
      %v5079 = vpack.c.b16 %v5058, %v5057
      %v5080 = vpack.c.b16 %v5059, %v5059
      %v5081 = vpack.c.b16 %v5061, %v5060
      %v5082 = vpack.c.b16 %v5062, %v5062
      %v5083 = vpack.c.b16 %v5064, %v5063
      %v5084 = vpack.c.b16 %v5065, %v5065
      %v5085 = vpack.c.b16 %v5067, %v5066
      %v5086 = vpack.c.b16 %v5068, %v5068
      %v5087 = vpack.c.b16 %v5070, %v5069
      %v5088 = vpack.c.b16 %v5071, %v5071
      %v5089 = vpack.c.b16 %v5073, %v5072
      %v5090 = vpack.c.b16 %v5074, %v5074
      %v5092 = vshrl.u32 %v5075, 16
      %v5094 = vshll.u32 %v5075, 16
      %v5096 = vrot.slane %v5094, 1
      %v5097 = vor.u32 %v5092, %v5096
      %v5099 = vshll.u32 %v5076, 16
      %v5101 = vrot.slane %v5099, 1
      %v5102 = vsel %vm280, %v5097, %v5101
      %v5104 = vshrl.u32 %v5077, 16
      %v5106 = vshll.u32 %v5077, 16
      %v5108 = vrot.slane %v5106, 1
      %v5109 = vor.u32 %v5104, %v5108
      %v5111 = vshll.u32 %v5078, 16
      %v5113 = vrot.slane %v5111, 1
      %v5114 = vsel %vm280, %v5109, %v5113
      %v5116 = vshrl.u32 %v5079, 16
      %v5118 = vshll.u32 %v5079, 16
      %v5120 = vrot.slane %v5118, 1
      %v5121 = vor.u32 %v5116, %v5120
      %v5123 = vshll.u32 %v5080, 16
      %v5125 = vrot.slane %v5123, 1
      %v5126 = vsel %vm280, %v5121, %v5125
      %v5128 = vshrl.u32 %v5081, 16
      %v5130 = vshll.u32 %v5081, 16
      %v5132 = vrot.slane %v5130, 1
      %v5133 = vor.u32 %v5128, %v5132
      %v5135 = vshll.u32 %v5082, 16
      %v5137 = vrot.slane %v5135, 1
      %v5138 = vsel %vm280, %v5133, %v5137
      %v5140 = vshrl.u32 %v5083, 16
      %v5142 = vshll.u32 %v5083, 16
      %v5144 = vrot.slane %v5142, 1
      %v5145 = vor.u32 %v5140, %v5144
      %v5147 = vshll.u32 %v5084, 16
      %v5149 = vrot.slane %v5147, 1
      %v5150 = vsel %vm280, %v5145, %v5149
      %v5152 = vshrl.u32 %v5085, 16
      %v5154 = vshll.u32 %v5085, 16
      %v5156 = vrot.slane %v5154, 1
      %v5157 = vor.u32 %v5152, %v5156
      %v5159 = vshll.u32 %v5086, 16
      %v5161 = vrot.slane %v5159, 1
      %v5162 = vsel %vm280, %v5157, %v5161
      %v5164 = vshrl.u32 %v5087, 16
      %v5166 = vshll.u32 %v5087, 16
      %v5168 = vrot.slane %v5166, 1
      %v5169 = vor.u32 %v5164, %v5168
      %v5171 = vshll.u32 %v5088, 16
      %v5173 = vrot.slane %v5171, 1
      %v5174 = vsel %vm280, %v5169, %v5173
      %v5176 = vshrl.u32 %v5089, 16
      %v5178 = vshll.u32 %v5089, 16
      %v5180 = vrot.slane %v5178, 1
      %v5181 = vor.u32 %v5176, %v5180
      %v5183 = vshll.u32 %v5090, 16
      %v5185 = vrot.slane %v5183, 1
      %v5186 = vsel %vm280, %v5181, %v5185
      %v5203 = vunpack.c.l.b16 %v4957
      %v5204 = vunpack.c.l.b16 %v4960
      %v5205 = vunpack.c.l.b16 %v4963
      %v5206 = vunpack.c.l.b16 %v4966
      %v5207 = vunpack.c.l.b16 %v4969
      %v5208 = vunpack.c.l.b16 %v4972
      %v5209 = vunpack.c.l.b16 %v4975
      %v5210 = vunpack.c.l.b16 %v4978
      %v5211 = vpack.c.b16 %v5203, %v5203
      %v5212 = vpack.c.b16 %v5204, %v5204
      %v5213 = vpack.c.b16 %v5205, %v5205
      %v5214 = vpack.c.b16 %v5206, %v5206
      %v5215 = vpack.c.b16 %v5207, %v5207
      %v5216 = vpack.c.b16 %v5208, %v5208
      %v5217 = vpack.c.b16 %v5209, %v5209
      %v5218 = vpack.c.b16 %v5210, %v5210
      %v5220 = vshrl.u32 %v5011, 16
      %v5222 = vshll.u32 %v5011, 16
      %v5224 = vrot.slane %v5222, 1
      %v5225 = vor.u32 %v5220, %v5224
      %v5227 = vshll.u32 %v5211, 16
      %v5229 = vrot.slane %v5227, 1
      %v5230 = vsel %vm280, %v5225, %v5229
      %v5232 = vshrl.u32 %v5012, 16
      %v5234 = vshll.u32 %v5012, 16
      %v5236 = vrot.slane %v5234, 1
      %v5237 = vor.u32 %v5232, %v5236
      %v5239 = vshll.u32 %v5212, 16
      %v5241 = vrot.slane %v5239, 1
      %v5242 = vsel %vm280, %v5237, %v5241
      %v5244 = vshrl.u32 %v5013, 16
      %v5246 = vshll.u32 %v5013, 16
      %v5248 = vrot.slane %v5246, 1
      %v5249 = vor.u32 %v5244, %v5248
      %v5251 = vshll.u32 %v5213, 16
      %v5253 = vrot.slane %v5251, 1
      %v5254 = vsel %vm280, %v5249, %v5253
      %v5256 = vshrl.u32 %v5014, 16
      %v5258 = vshll.u32 %v5014, 16
      %v5260 = vrot.slane %v5258, 1
      %v5261 = vor.u32 %v5256, %v5260
      %v5263 = vshll.u32 %v5214, 16
      %v5265 = vrot.slane %v5263, 1
      %v5266 = vsel %vm280, %v5261, %v5265
      %v5268 = vshrl.u32 %v5015, 16
      %v5270 = vshll.u32 %v5015, 16
      %v5272 = vrot.slane %v5270, 1
      %v5273 = vor.u32 %v5268, %v5272
      %v5275 = vshll.u32 %v5215, 16
      %v5277 = vrot.slane %v5275, 1
      %v5278 = vsel %vm280, %v5273, %v5277
      %v5280 = vshrl.u32 %v5016, 16
      %v5282 = vshll.u32 %v5016, 16
      %v5284 = vrot.slane %v5282, 1
      %v5285 = vor.u32 %v5280, %v5284
      %v5287 = vshll.u32 %v5216, 16
      %v5289 = vrot.slane %v5287, 1
      %v5290 = vsel %vm280, %v5285, %v5289
      %v5292 = vshrl.u32 %v5017, 16
      %v5294 = vshll.u32 %v5017, 16
      %v5296 = vrot.slane %v5294, 1
      %v5297 = vor.u32 %v5292, %v5296
      %v5299 = vshll.u32 %v5217, 16
      %v5301 = vrot.slane %v5299, 1
      %v5302 = vsel %vm280, %v5297, %v5301
      %v5304 = vshrl.u32 %v5018, 16
      %v5306 = vshll.u32 %v5018, 16
      %v5308 = vrot.slane %v5306, 1
      %v5309 = vor.u32 %v5304, %v5308
      %v5311 = vshll.u32 %v5218, 16
      %v5313 = vrot.slane %v5311, 1
      %v5314 = vsel %vm280, %v5309, %v5313
      %v5323 = vrot.slane %v5075, 1
      %v5324 = vrot.slane %v5076, 1
      %v5325 = vsel %vm362, %v5323, %v5324
      %v5326 = vrot.slane %v5077, 1
      %v5327 = vrot.slane %v5078, 1
      %v5328 = vsel %vm362, %v5326, %v5327
      %v5329 = vrot.slane %v5079, 1
      %v5330 = vrot.slane %v5080, 1
      %v5331 = vsel %vm362, %v5329, %v5330
      %v5332 = vrot.slane %v5081, 1
      %v5333 = vrot.slane %v5082, 1
      %v5334 = vsel %vm362, %v5332, %v5333
      %v5335 = vrot.slane %v5083, 1
      %v5336 = vrot.slane %v5084, 1
      %v5337 = vsel %vm362, %v5335, %v5336
      %v5338 = vrot.slane %v5085, 1
      %v5339 = vrot.slane %v5086, 1
      %v5340 = vsel %vm362, %v5338, %v5339
      %v5341 = vrot.slane %v5087, 1
      %v5342 = vrot.slane %v5088, 1
      %v5343 = vsel %vm362, %v5341, %v5342
      %v5344 = vrot.slane %v5089, 1
      %v5345 = vrot.slane %v5090, 1
      %v5346 = vsel %vm362, %v5344, %v5345
      %s5355 = scalar_lea.vmem %s2, 384
      %v5356 = vld [vmem:[%s5355] sm:$0xf]
      %v5357 = vld [vmem:[%s5355 + $0x4] sm:$0xf]
      %v5358 = vld [vmem:[%s5355 + $0x8] sm:$0xf]
      %v5359 = vld [vmem:[%s5355 + $0xc] sm:$0xf]
      %v5360 = vld [vmem:[%s5355 + $0x10] sm:$0xf]
      %v5361 = vld [vmem:[%s5355 + $0x14] sm:$0xf]
      %v5362 = vld [vmem:[%s5355 + $0x18] sm:$0xf]
      %v5363 = vld [vmem:[%s5355 + $0x1c] sm:$0xf]
      %v5364 = vld [vmem:[%s5355 + $0x20] sm:$0xf]
      %v5365 = vld [vmem:[%s5355 + $0x24] sm:$0xf]
      %v5366 = vld [vmem:[%s5355 + $0x28] sm:$0xf]
      %v5367 = vld [vmem:[%s5355 + $0x2c] sm:$0xf]
      %v5368 = vld [vmem:[%s5355 + $0x30] sm:$0xf]
      %v5369 = vld [vmem:[%s5355 + $0x34] sm:$0xf]
      %v5370 = vld [vmem:[%s5355 + $0x38] sm:$0xf]
      %v5371 = vld [vmem:[%s5355 + $0x3c] sm:$0xf]
      %v5372 = vld [vmem:[%s5355 + $0x40] sm:$0xf]
      %v5373 = vld [vmem:[%s5355 + $0x44] sm:$0xf]
      %v5374 = vld [vmem:[%s5355 + $0x48] sm:$0xf]
      %v5375 = vld [vmem:[%s5355 + $0x4c] sm:$0xf]
      %v5376 = vld [vmem:[%s5355 + $0x50] sm:$0xf]
      %v5377 = vld [vmem:[%s5355 + $0x54] sm:$0xf]
      %v5378 = vld [vmem:[%s5355 + $0x58] sm:$0xf]
      %v5379 = vld [vmem:[%s5355 + $0x5c] sm:$0xf]
      %v5380 = vld [vmem:[%s5355 + $0x60] sm:$0xf]
      %v5381 = vld [vmem:[%s5355 + $0x64] sm:$0xf]
      %v5382 = vld [vmem:[%s5355 + $0x68] sm:$0xf]
      %v5383 = vld [vmem:[%s5355 + $0x6c] sm:$0xf]
      %v5384 = vld [vmem:[%s5355 + $0x70] sm:$0xf]
      %v5385 = vld [vmem:[%s5355 + $0x74] sm:$0xf]
      %v5386 = vld [vmem:[%s5355 + $0x78] sm:$0xf]
      %v5387 = vld [vmem:[%s5355 + $0x7c] sm:$0xf]
      %v5388 = vld [vmem:[%s5355 + $0x80] sm:$0xf]
      %v5389 = vld [vmem:[%s5355 + $0x84] sm:$0xf]
      %v5390 = vld [vmem:[%s5355 + $0x88] sm:$0xf]
      %v5391 = vld [vmem:[%s5355 + $0x8c] sm:$0xf]
      %v5392 = vld [vmem:[%s5355 + $0x90] sm:$0xf]
      %v5393 = vld [vmem:[%s5355 + $0x94] sm:$0xf]
      %v5394 = vld [vmem:[%s5355 + $0x98] sm:$0xf]
      %v5395 = vld [vmem:[%s5355 + $0x9c] sm:$0xf]
      %v5396 = vld [vmem:[%s5355 + $0xa0] sm:$0xf]
      %v5397 = vld [vmem:[%s5355 + $0xa4] sm:$0xf]
      %v5398 = vld [vmem:[%s5355 + $0xa8] sm:$0xf]
      %v5399 = vld [vmem:[%s5355 + $0xac] sm:$0xf]
      %v5400 = vld [vmem:[%s5355 + $0xb0] sm:$0xf]
      %v5401 = vld [vmem:[%s5355 + $0xb4] sm:$0xf]
      %v5402 = vld [vmem:[%s5355 + $0xb8] sm:$0xf]
      %v5403 = vld [vmem:[%s5355 + $0xbc] sm:$0xf]
      %v5452 = vunpack.c.l.b16 %v5356
      %v5453 = vunpack.c.l.b16 %v5357
      %v5454 = vunpack.c.l.b16 %v5358
      %v5455 = vunpack.c.l.b16 %v5359
      %v5456 = vunpack.c.l.b16 %v5360
      %v5457 = vunpack.c.l.b16 %v5361
      %v5458 = vunpack.c.l.b16 %v5362
      %v5459 = vunpack.c.l.b16 %v5363
      %v5460 = vunpack.c.l.b16 %v5364
      %v5461 = vunpack.c.l.b16 %v5365
      %v5462 = vunpack.c.l.b16 %v5366
      %v5463 = vunpack.c.l.b16 %v5367
      %v5464 = vunpack.c.l.b16 %v5368
      %v5465 = vunpack.c.l.b16 %v5369
      %v5466 = vunpack.c.l.b16 %v5370
      %v5467 = vunpack.c.l.b16 %v5371
      %v5468 = vunpack.c.l.b16 %v5372
      %v5469 = vunpack.c.l.b16 %v5373
      %v5470 = vunpack.c.l.b16 %v5374
      %v5471 = vunpack.c.l.b16 %v5375
      %v5472 = vunpack.c.l.b16 %v5376
      %v5473 = vunpack.c.l.b16 %v5377
      %v5474 = vunpack.c.l.b16 %v5378
      %v5475 = vunpack.c.l.b16 %v5379
      %v5476 = vunpack.c.l.b16 %v5380
      %v5477 = vunpack.c.l.b16 %v5381
      %v5478 = vunpack.c.l.b16 %v5382
      %v5479 = vunpack.c.l.b16 %v5383
      %v5480 = vunpack.c.l.b16 %v5384
      %v5481 = vunpack.c.l.b16 %v5385
      %v5482 = vunpack.c.l.b16 %v5386
      %v5483 = vunpack.c.l.b16 %v5387
      %v5484 = vunpack.c.l.b16 %v5388
      %v5485 = vunpack.c.l.b16 %v5389
      %v5486 = vunpack.c.l.b16 %v5390
      %v5487 = vunpack.c.l.b16 %v5391
      %v5488 = vunpack.c.l.b16 %v5392
      %v5489 = vunpack.c.l.b16 %v5393
      %v5490 = vunpack.c.l.b16 %v5394
      %v5491 = vunpack.c.l.b16 %v5395
      %v5492 = vunpack.c.l.b16 %v5396
      %v5493 = vunpack.c.l.b16 %v5397
      %v5494 = vunpack.c.l.b16 %v5398
      %v5495 = vunpack.c.l.b16 %v5399
      %v5496 = vunpack.c.l.b16 %v5400
      %v5497 = vunpack.c.l.b16 %v5401
      %v5498 = vunpack.c.l.b16 %v5402
      %v5499 = vunpack.c.l.b16 %v5403
      %v5500 = vpack.c.b16 %v5453, %v5452
      %v5501 = vpack.c.b16 %v5455, %v5454
      %v5502 = vpack.c.b16 %v5457, %v5456
      %v5503 = vpack.c.b16 %v5459, %v5458
      %v5504 = vpack.c.b16 %v5461, %v5460
      %v5505 = vpack.c.b16 %v5463, %v5462
      %v5506 = vpack.c.b16 %v5465, %v5464
      %v5507 = vpack.c.b16 %v5467, %v5466
      %v5508 = vpack.c.b16 %v5469, %v5468
      %v5509 = vpack.c.b16 %v5471, %v5470
      %v5510 = vpack.c.b16 %v5473, %v5472
      %v5511 = vpack.c.b16 %v5475, %v5474
      %v5512 = vpack.c.b16 %v5477, %v5476
      %v5513 = vpack.c.b16 %v5479, %v5478
      %v5514 = vpack.c.b16 %v5481, %v5480
      %v5515 = vpack.c.b16 %v5483, %v5482
      %v5516 = vpack.c.b16 %v5485, %v5484
      %v5517 = vpack.c.b16 %v5487, %v5486
      %v5518 = vpack.c.b16 %v5489, %v5488
      %v5519 = vpack.c.b16 %v5491, %v5490
      %v5520 = vpack.c.b16 %v5493, %v5492
      %v5521 = vpack.c.b16 %v5495, %v5494
      %v5522 = vpack.c.b16 %v5497, %v5496
      %v5523 = vpack.c.b16 %v5499, %v5498
      %5548 = vmatprep.subr.bf16.mxu0 0
      %5549 = vmatpush1.bf16.msra.mxu0 %v5507
      %5550 = vmatprep.subr.bf16.mxu0 0
      %5551 = vmatpush1.bf16.msra.mxu0 %v5506
      %5552 = vmatprep.subr.bf16.mxu0 0
      %5553 = vmatpush1.bf16.msra.mxu0 %v5505
      %5554 = vmatprep.subr.bf16.mxu0 0
      %5555 = vmatpush1.bf16.msra.mxu0 %v5504
      %5556 = vmatprep.subr.bf16.mxu0 0
      %5557 = vmatpush1.bf16.msra.mxu0 %v5503
      %5558 = vmatprep.subr.bf16.mxu0 0
      %5559 = vmatpush1.bf16.msra.mxu0 %v5502
      %5560 = vmatprep.subr.bf16.mxu0 0
      %5561 = vmatpush1.bf16.msra.mxu0 %v5501
      %5562 = vmatprep.subr.bf16.mxu0 0
      %5563 = vmatpush1.bf16.msra.mxu0 %v5500
      %5564 = vmatprep.subr.bf16.mxu0 0
      %5565 = vmatpush2.bf16.msra.mxu0 %v5515
      %5566 = vmatprep.subr.bf16.mxu0 0
      %5567 = vmatpush2.bf16.msra.mxu0 %v5514
      %5568 = vmatprep.subr.bf16.mxu0 0
      %5569 = vmatpush2.bf16.msra.mxu0 %v5513
      %5570 = vmatprep.subr.bf16.mxu0 0
      %5571 = vmatpush2.bf16.msra.mxu0 %v5512
      %5572 = vmatprep.subr.bf16.mxu0 0
      %5573 = vmatpush2.bf16.msra.mxu0 %v5511
      %5574 = vmatprep.subr.bf16.mxu0 0
      %5575 = vmatpush2.bf16.msra.mxu0 %v5510
      %5576 = vmatprep.subr.bf16.mxu0 0
      %5577 = vmatpush2.bf16.msra.mxu0 %v5509
      %5578 = vmatprep.subr.bf16.mxu0 0
      %5579 = vmatpush2.bf16.msra.mxu0 %v5508
      %5580 = vmatprep.mubr.bf16.mxu0 %v5102
      %5581 = vmatmul.mubr.bf16.gmra.mxu0 %v5011
      %v5582 = vpop.f32.mrf.mxu0
      %v5583 = vadd.f32 0.0, %v5582
      %v5584 = vpop.f32.mrf.mxu0
      %v5585 = vpop.f32.mrf.mxu0
      %v5586 = vadd.f32 0.0, %v5585
      %v5587 = vpop.f32.mrf.mxu0
      %5588 = vmatprep.mubr.bf16.mxu0 %v5114
      %5589 = vmatmul.mubr.bf16.gmra.mxu0 %v5012
      %v5590 = vpop.f32.mrf.mxu0
      %v5591 = vadd.f32 0.0, %v5590
      %v5592 = vpop.f32.mrf.mxu0
      %v5593 = vpop.f32.mrf.mxu0
      %v5594 = vadd.f32 0.0, %v5593
      %v5595 = vpop.f32.mrf.mxu0
      %5596 = vmatprep.mubr.bf16.mxu0 %v5126
      %5597 = vmatmul.mubr.bf16.gmra.mxu0 %v5013
      %v5598 = vpop.f32.mrf.mxu0
      %v5599 = vadd.f32 0.0, %v5598
      %v5600 = vpop.f32.mrf.mxu0
      %v5601 = vpop.f32.mrf.mxu0
      %v5602 = vadd.f32 0.0, %v5601
      %v5603 = vpop.f32.mrf.mxu0
      %5604 = vmatprep.mubr.bf16.mxu0 %v5138
      %5605 = vmatmul.mubr.bf16.gmra.mxu0 %v5014
      %v5606 = vpop.f32.mrf.mxu0
      %v5607 = vadd.f32 0.0, %v5606
      %v5608 = vpop.f32.mrf.mxu0
      %v5609 = vpop.f32.mrf.mxu0
      %v5610 = vadd.f32 0.0, %v5609
      %v5611 = vpop.f32.mrf.mxu0
      %5612 = vmatprep.mubr.bf16.mxu0 %v5150
      %5613 = vmatmul.mubr.bf16.gmra.mxu0 %v5015
      %v5614 = vpop.f32.mrf.mxu0
      %v5615 = vadd.f32 0.0, %v5614
      %v5616 = vpop.f32.mrf.mxu0
      %v5617 = vpop.f32.mrf.mxu0
      %v5618 = vadd.f32 0.0, %v5617
      %v5619 = vpop.f32.mrf.mxu0
      %5620 = vmatprep.mubr.bf16.mxu0 %v5162
      %5621 = vmatmul.mubr.bf16.gmra.mxu0 %v5016
      %v5622 = vpop.f32.mrf.mxu0
      %v5623 = vadd.f32 0.0, %v5622
      %v5624 = vpop.f32.mrf.mxu0
      %v5625 = vpop.f32.mrf.mxu0
      %v5626 = vadd.f32 0.0, %v5625
      %v5627 = vpop.f32.mrf.mxu0
      %5628 = vmatprep.mubr.bf16.mxu0 %v5174
      %5629 = vmatmul.mubr.bf16.gmra.mxu0 %v5017
      %v5630 = vpop.f32.mrf.mxu0
      %v5631 = vadd.f32 0.0, %v5630
      %v5632 = vpop.f32.mrf.mxu0
      %v5633 = vpop.f32.mrf.mxu0
      %v5634 = vadd.f32 0.0, %v5633
      %v5635 = vpop.f32.mrf.mxu0
      %5636 = vmatprep.mubr.bf16.mxu0 %v5186
      %5637 = vmatmul.mubr.bf16.gmra.mxu0 %v5018
      %v5638 = vpop.f32.mrf.mxu0
      %v5639 = vadd.f32 0.0, %v5638
      %v5640 = vpop.f32.mrf.mxu0
      %v5641 = vpop.f32.mrf.mxu0
      %v5642 = vadd.f32 0.0, %v5641
      %v5643 = vpop.f32.mrf.mxu0
      %5644 = vdwg.mxu0
      %5645 = vmatprep.subr.bf16.mxu0 0
      %5646 = vmatpush1.bf16.msra.mxu0 %v5523
      %5647 = vmatprep.subr.bf16.mxu0 0
      %5648 = vmatpush1.bf16.msra.mxu0 %v5522
      %5649 = vmatprep.subr.bf16.mxu0 0
      %5650 = vmatpush1.bf16.msra.mxu0 %v5521
      %5651 = vmatprep.subr.bf16.mxu0 0
      %5652 = vmatpush1.bf16.msra.mxu0 %v5520
      %5653 = vmatprep.subr.bf16.mxu0 0
      %5654 = vmatpush1.bf16.msra.mxu0 %v5519
      %5655 = vmatprep.subr.bf16.mxu0 0
      %5656 = vmatpush1.bf16.msra.mxu0 %v5518
      %5657 = vmatprep.subr.bf16.mxu0 0
      %5658 = vmatpush1.bf16.msra.mxu0 %v5517
      %5659 = vmatprep.subr.bf16.mxu0 0
      %5660 = vmatpush1.bf16.msra.mxu0 %v5516
      %5661 = vmatprep.subr.bf16.mxu0 0
      %5662 = vmatpush2.bf16.msra.mxu0 0
      %5663 = vmatprep.subr.bf16.mxu0 0
      %5664 = vmatpush2.bf16.msra.mxu0 0
      %5665 = vmatprep.subr.bf16.mxu0 0
      %5666 = vmatpush2.bf16.msra.mxu0 0
      %5667 = vmatprep.subr.bf16.mxu0 0
      %5668 = vmatpush2.bf16.msra.mxu0 0
      %5669 = vmatprep.subr.bf16.mxu0 0
      %5670 = vmatpush2.bf16.msra.mxu0 0
      %5671 = vmatprep.subr.bf16.mxu0 0
      %5672 = vmatpush2.bf16.msra.mxu0 0
      %5673 = vmatprep.subr.bf16.mxu0 0
      %5674 = vmatpush2.bf16.msra.mxu0 0
      %5675 = vmatprep.subr.bf16.mxu0 0
      %5676 = vmatpush2.bf16.msra.mxu0 0
      %5677 = vmatprep.mubr.bf16.mxu0 0
      %5678 = vmatmul.mubr.bf16.gmra.mxu0 %v5230
      %v5679 = vpop.f32.mrf.mxu0
      %v5680 = vadd.f32 %v5583, %v5679
      %v5681 = vpop.f32.mrf.mxu0
      %v5682 = vpop.f32.mrf.mxu0
      %v5683 = vadd.f32 %v5586, %v5682
      %v5684 = vpop.f32.mrf.mxu0
      %5685 = vmatprep.mubr.bf16.mxu0 0
      %5686 = vmatmul.mubr.bf16.gmra.mxu0 %v5242
      %v5687 = vpop.f32.mrf.mxu0
      %v5688 = vadd.f32 %v5591, %v5687
      %v5689 = vpop.f32.mrf.mxu0
      %v5690 = vpop.f32.mrf.mxu0
      %v5691 = vadd.f32 %v5594, %v5690
      %v5692 = vpop.f32.mrf.mxu0
      %5693 = vmatprep.mubr.bf16.mxu0 0
      %5694 = vmatmul.mubr.bf16.gmra.mxu0 %v5254
      %v5695 = vpop.f32.mrf.mxu0
      %v5696 = vadd.f32 %v5599, %v5695
      %v5697 = vpop.f32.mrf.mxu0
      %v5698 = vpop.f32.mrf.mxu0
      %v5699 = vadd.f32 %v5602, %v5698
      %v5700 = vpop.f32.mrf.mxu0
      %5701 = vmatprep.mubr.bf16.mxu0 0
      %5702 = vmatmul.mubr.bf16.gmra.mxu0 %v5266
      %v5703 = vpop.f32.mrf.mxu0
      %v5704 = vadd.f32 %v5607, %v5703
      %v5705 = vpop.f32.mrf.mxu0
      %v5706 = vpop.f32.mrf.mxu0
      %v5707 = vadd.f32 %v5610, %v5706
      %v5708 = vpop.f32.mrf.mxu0
      %5709 = vmatprep.mubr.bf16.mxu0 0
      %5710 = vmatmul.mubr.bf16.gmra.mxu0 %v5278
      %v5711 = vpop.f32.mrf.mxu0
      %v5712 = vadd.f32 %v5615, %v5711
      %v5713 = vpop.f32.mrf.mxu0
      %v5714 = vpop.f32.mrf.mxu0
      %v5715 = vadd.f32 %v5618, %v5714
      %v5716 = vpop.f32.mrf.mxu0
      %5717 = vmatprep.mubr.bf16.mxu0 0
      %5718 = vmatmul.mubr.bf16.gmra.mxu0 %v5290
      %v5719 = vpop.f32.mrf.mxu0
      %v5720 = vadd.f32 %v5623, %v5719
      %v5721 = vpop.f32.mrf.mxu0
      %v5722 = vpop.f32.mrf.mxu0
      %v5723 = vadd.f32 %v5626, %v5722
      %v5724 = vpop.f32.mrf.mxu0
      %5725 = vmatprep.mubr.bf16.mxu0 0
      %5726 = vmatmul.mubr.bf16.gmra.mxu0 %v5302
      %v5727 = vpop.f32.mrf.mxu0
      %v5728 = vadd.f32 %v5631, %v5727
      %v5729 = vpop.f32.mrf.mxu0
      %v5730 = vpop.f32.mrf.mxu0
      %v5731 = vadd.f32 %v5634, %v5730
      %v5732 = vpop.f32.mrf.mxu0
      %5733 = vmatprep.mubr.bf16.mxu0 0
      %5734 = vmatmul.mubr.bf16.gmra.mxu0 %v5314
      %v5735 = vpop.f32.mrf.mxu0
      %v5736 = vadd.f32 %v5639, %v5735
      %v5737 = vpop.f32.mrf.mxu0
      %v5738 = vpop.f32.mrf.mxu0
      %v5739 = vadd.f32 %v5642, %v5738
      %v5740 = vpop.f32.mrf.mxu0
      %5741 = vdwg.mxu0
      %5742 = vmatprep.subr.bf16.mxu0 0
      %5743 = vmatpush1.bf16.msra.mxu0 %v5507
      %5744 = vmatprep.subr.bf16.mxu0 0
      %5745 = vmatpush1.bf16.msra.mxu0 %v5506
      %5746 = vmatprep.subr.bf16.mxu0 0
      %5747 = vmatpush1.bf16.msra.mxu0 %v5505
      %5748 = vmatprep.subr.bf16.mxu0 0
      %5749 = vmatpush1.bf16.msra.mxu0 %v5504
      %5750 = vmatprep.subr.bf16.mxu0 0
      %5751 = vmatpush1.bf16.msra.mxu0 %v5503
      %5752 = vmatprep.subr.bf16.mxu0 0
      %5753 = vmatpush1.bf16.msra.mxu0 %v5502
      %5754 = vmatprep.subr.bf16.mxu0 0
      %5755 = vmatpush1.bf16.msra.mxu0 %v5501
      %5756 = vmatprep.subr.bf16.mxu0 0
      %5757 = vmatpush1.bf16.msra.mxu0 %v5500
      %5758 = vmatprep.subr.bf16.mxu0 0
      %5759 = vmatpush2.bf16.msra.mxu0 %v5515
      %5760 = vmatprep.subr.bf16.mxu0 0
      %5761 = vmatpush2.bf16.msra.mxu0 %v5514
      %5762 = vmatprep.subr.bf16.mxu0 0
      %5763 = vmatpush2.bf16.msra.mxu0 %v5513
      %5764 = vmatprep.subr.bf16.mxu0 0
      %5765 = vmatpush2.bf16.msra.mxu0 %v5512
      %5766 = vmatprep.subr.bf16.mxu0 0
      %5767 = vmatpush2.bf16.msra.mxu0 %v5511
      %5768 = vmatprep.subr.bf16.mxu0 0
      %5769 = vmatpush2.bf16.msra.mxu0 %v5510
      %5770 = vmatprep.subr.bf16.mxu0 0
      %5771 = vmatpush2.bf16.msra.mxu0 %v5509
      %5772 = vmatprep.subr.bf16.mxu0 0
      %5773 = vmatpush2.bf16.msra.mxu0 %v5508
      %5774 = vmatprep.mubr.bf16.mxu0 %v5230
      %5775 = vmatmul.mubr.bf16.gmra.mxu0 %v5102
      %v5776 = vpop.f32.mrf.mxu0
      %v5777 = vadd.f32 0.0, %v5776
      %v5778 = vpop.f32.mrf.mxu0
      %v5779 = vpop.f32.mrf.mxu0
      %v5780 = vadd.f32 0.0, %v5779
      %v5781 = vpop.f32.mrf.mxu0
      %5782 = vmatprep.mubr.bf16.mxu0 %v5242
      %5783 = vmatmul.mubr.bf16.gmra.mxu0 %v5114
      %v5784 = vpop.f32.mrf.mxu0
      %v5785 = vadd.f32 0.0, %v5784
      %v5786 = vpop.f32.mrf.mxu0
      %v5787 = vpop.f32.mrf.mxu0
      %v5788 = vadd.f32 0.0, %v5787
      %v5789 = vpop.f32.mrf.mxu0
      %5790 = vmatprep.mubr.bf16.mxu0 %v5254
      %5791 = vmatmul.mubr.bf16.gmra.mxu0 %v5126
      %v5792 = vpop.f32.mrf.mxu0
      %v5793 = vadd.f32 0.0, %v5792
      %v5794 = vpop.f32.mrf.mxu0
      %v5795 = vpop.f32.mrf.mxu0
      %v5796 = vadd.f32 0.0, %v5795
      %v5797 = vpop.f32.mrf.mxu0
      %5798 = vmatprep.mubr.bf16.mxu0 %v5266
      %5799 = vmatmul.mubr.bf16.gmra.mxu0 %v5138
      %v5800 = vpop.f32.mrf.mxu0
      %v5801 = vadd.f32 0.0, %v5800
      %v5802 = vpop.f32.mrf.mxu0
      %v5803 = vpop.f32.mrf.mxu0
      %v5804 = vadd.f32 0.0, %v5803
      %v5805 = vpop.f32.mrf.mxu0
      %5806 = vmatprep.mubr.bf16.mxu0 %v5278
      %5807 = vmatmul.mubr.bf16.gmra.mxu0 %v5150
      %v5808 = vpop.f32.mrf.mxu0
      %v5809 = vadd.f32 0.0, %v5808
      %v5810 = vpop.f32.mrf.mxu0
      %v5811 = vpop.f32.mrf.mxu0
      %v5812 = vadd.f32 0.0, %v5811
      %v5813 = vpop.f32.mrf.mxu0
      %5814 = vmatprep.mubr.bf16.mxu0 %v5290
      %5815 = vmatmul.mubr.bf16.gmra.mxu0 %v5162
      %v5816 = vpop.f32.mrf.mxu0
      %v5817 = vadd.f32 0.0, %v5816
      %v5818 = vpop.f32.mrf.mxu0
      %v5819 = vpop.f32.mrf.mxu0
      %v5820 = vadd.f32 0.0, %v5819
      %v5821 = vpop.f32.mrf.mxu0
      %5822 = vmatprep.mubr.bf16.mxu0 %v5302
      %5823 = vmatmul.mubr.bf16.gmra.mxu0 %v5174
      %v5824 = vpop.f32.mrf.mxu0
      %v5825 = vadd.f32 0.0, %v5824
      %v5826 = vpop.f32.mrf.mxu0
      %v5827 = vpop.f32.mrf.mxu0
      %v5828 = vadd.f32 0.0, %v5827
      %v5829 = vpop.f32.mrf.mxu0
      %5830 = vmatprep.mubr.bf16.mxu0 %v5314
      %5831 = vmatmul.mubr.bf16.gmra.mxu0 %v5186
      %v5832 = vpop.f32.mrf.mxu0
      %v5833 = vadd.f32 0.0, %v5832
      %v5834 = vpop.f32.mrf.mxu0
      %v5835 = vpop.f32.mrf.mxu0
      %v5836 = vadd.f32 0.0, %v5835
      %v5837 = vpop.f32.mrf.mxu0
      %5838 = vdwg.mxu0
      %5839 = vmatprep.subr.bf16.mxu0 0
      %5840 = vmatpush1.bf16.msra.mxu0 %v5523
      %5841 = vmatprep.subr.bf16.mxu0 0
      %5842 = vmatpush1.bf16.msra.mxu0 %v5522
      %5843 = vmatprep.subr.bf16.mxu0 0
      %5844 = vmatpush1.bf16.msra.mxu0 %v5521
      %5845 = vmatprep.subr.bf16.mxu0 0
      %5846 = vmatpush1.bf16.msra.mxu0 %v5520
      %5847 = vmatprep.subr.bf16.mxu0 0
      %5848 = vmatpush1.bf16.msra.mxu0 %v5519
      %5849 = vmatprep.subr.bf16.mxu0 0
      %5850 = vmatpush1.bf16.msra.mxu0 %v5518
      %5851 = vmatprep.subr.bf16.mxu0 0
      %5852 = vmatpush1.bf16.msra.mxu0 %v5517
      %5853 = vmatprep.subr.bf16.mxu0 0
      %5854 = vmatpush1.bf16.msra.mxu0 %v5516
      %5855 = vmatprep.subr.bf16.mxu0 0
      %5856 = vmatpush2.bf16.msra.mxu0 0
      %5857 = vmatprep.subr.bf16.mxu0 0
      %5858 = vmatpush2.bf16.msra.mxu0 0
      %5859 = vmatprep.subr.bf16.mxu0 0
      %5860 = vmatpush2.bf16.msra.mxu0 0
      %5861 = vmatprep.subr.bf16.mxu0 0
      %5862 = vmatpush2.bf16.msra.mxu0 0
      %5863 = vmatprep.subr.bf16.mxu0 0
      %5864 = vmatpush2.bf16.msra.mxu0 0
      %5865 = vmatprep.subr.bf16.mxu0 0
      %5866 = vmatpush2.bf16.msra.mxu0 0
      %5867 = vmatprep.subr.bf16.mxu0 0
      %5868 = vmatpush2.bf16.msra.mxu0 0
      %5869 = vmatprep.subr.bf16.mxu0 0
      %5870 = vmatpush2.bf16.msra.mxu0 0
      %5871 = vmatprep.mubr.bf16.mxu0 0
      %5872 = vmatmul.mubr.bf16.gmra.mxu0 %v5325
      %v5873 = vpop.f32.mrf.mxu0
      %v5874 = vadd.f32 %v5777, %v5873
      %v5875 = vpop.f32.mrf.mxu0
      %v5876 = vpop.f32.mrf.mxu0
      %v5877 = vadd.f32 %v5780, %v5876
      %v5878 = vpop.f32.mrf.mxu0
      %5879 = vmatprep.mubr.bf16.mxu0 0
      %5880 = vmatmul.mubr.bf16.gmra.mxu0 %v5328
      %v5881 = vpop.f32.mrf.mxu0
      %v5882 = vadd.f32 %v5785, %v5881
      %v5883 = vpop.f32.mrf.mxu0
      %v5884 = vpop.f32.mrf.mxu0
      %v5885 = vadd.f32 %v5788, %v5884
      %v5886 = vpop.f32.mrf.mxu0
      %5887 = vmatprep.mubr.bf16.mxu0 0
      %5888 = vmatmul.mubr.bf16.gmra.mxu0 %v5331
      %v5889 = vpop.f32.mrf.mxu0
      %v5890 = vadd.f32 %v5793, %v5889
      %v5891 = vpop.f32.mrf.mxu0
      %v5892 = vpop.f32.mrf.mxu0
      %v5893 = vadd.f32 %v5796, %v5892
      %v5894 = vpop.f32.mrf.mxu0
      %5895 = vmatprep.mubr.bf16.mxu0 0
      %5896 = vmatmul.mubr.bf16.gmra.mxu0 %v5334
      %v5897 = vpop.f32.mrf.mxu0
      %v5898 = vadd.f32 %v5801, %v5897
      %v5899 = vpop.f32.mrf.mxu0
      %v5900 = vpop.f32.mrf.mxu0
      %v5901 = vadd.f32 %v5804, %v5900
      %v5902 = vpop.f32.mrf.mxu0
      %5903 = vmatprep.mubr.bf16.mxu0 0
      %5904 = vmatmul.mubr.bf16.gmra.mxu0 %v5337
      %v5905 = vpop.f32.mrf.mxu0
      %v5906 = vadd.f32 %v5809, %v5905
      %v5907 = vpop.f32.mrf.mxu0
      %v5908 = vpop.f32.mrf.mxu0
      %v5909 = vadd.f32 %v5812, %v5908
      %v5910 = vpop.f32.mrf.mxu0
      %5911 = vmatprep.mubr.bf16.mxu0 0
      %5912 = vmatmul.mubr.bf16.gmra.mxu0 %v5340
      %v5913 = vpop.f32.mrf.mxu0
      %v5914 = vadd.f32 %v5817, %v5913
      %v5915 = vpop.f32.mrf.mxu0
      %v5916 = vpop.f32.mrf.mxu0
      %v5917 = vadd.f32 %v5820, %v5916
      %v5918 = vpop.f32.mrf.mxu0
      %5919 = vmatprep.mubr.bf16.mxu0 0
      %5920 = vmatmul.mubr.bf16.gmra.mxu0 %v5343
      %v5921 = vpop.f32.mrf.mxu0
      %v5922 = vadd.f32 %v5825, %v5921
      %v5923 = vpop.f32.mrf.mxu0
      %v5924 = vpop.f32.mrf.mxu0
      %v5925 = vadd.f32 %v5828, %v5924
      %v5926 = vpop.f32.mrf.mxu0
      %5927 = vmatprep.mubr.bf16.mxu0 0
      %5928 = vmatmul.mubr.bf16.gmra.mxu0 %v5346
      %v5929 = vpop.f32.mrf.mxu0
      %v5930 = vadd.f32 %v5833, %v5929
      %v5931 = vpop.f32.mrf.mxu0
      %v5932 = vpop.f32.mrf.mxu0
      %v5933 = vadd.f32 %v5836, %v5932
      %v5934 = vpop.f32.mrf.mxu0
      %5935 = vdwg.mxu0
      %v5936 = vld [vmem:[#allocation4] sm:$0xff]
      %v5937 = vld [vmem:[#allocation4 + $0x8] sm:$0xff]
      %v5938 = vld [vmem:[#allocation4 + $0x10] sm:$0xff]
      %v5939 = vld [vmem:[#allocation4 + $0x18] sm:$0xff]
      %v5940 = vld [vmem:[#allocation4 + $0x20] sm:$0xff]
      %v5941 = vld [vmem:[#allocation4 + $0x28] sm:$0xff]
      %v5942 = vld [vmem:[#allocation4 + $0x30] sm:$0xff]
      %v5943 = vld [vmem:[#allocation4 + $0x38] sm:$0xff]
      %v5944 = vld [vmem:[#allocation4 + $0x40] sm:$0xff]
      %v5945 = vld [vmem:[#allocation4 + $0x48] sm:$0xff]
      %v5946 = vld [vmem:[#allocation4 + $0x50] sm:$0xff]
      %v5947 = vld [vmem:[#allocation4 + $0x58] sm:$0xff]
      %v5948 = vld [vmem:[#allocation4 + $0x60] sm:$0xff]
      %v5949 = vld [vmem:[#allocation4 + $0x68] sm:$0xff]
      %v5950 = vld [vmem:[#allocation4 + $0x70] sm:$0xff]
      %v5951 = vld [vmem:[#allocation4 + $0x78] sm:$0xff]
      %v5952 = vadd.f32 %v5936, %v5680
      %v5953 = vadd.f32 %v5937, %v5683
      %v5954 = vadd.f32 %v5938, %v5688
      %v5955 = vadd.f32 %v5939, %v5691
      %v5956 = vadd.f32 %v5940, %v5696
      %v5957 = vadd.f32 %v5941, %v5699
      %v5958 = vadd.f32 %v5942, %v5704
      %v5959 = vadd.f32 %v5943, %v5707
      %v5960 = vadd.f32 %v5944, %v5712
      %v5961 = vadd.f32 %v5945, %v5715
      %v5962 = vadd.f32 %v5946, %v5720
      %v5963 = vadd.f32 %v5947, %v5723
      %v5964 = vadd.f32 %v5948, %v5728
      %v5965 = vadd.f32 %v5949, %v5731
      %v5966 = vadd.f32 %v5950, %v5736
      %v5967 = vadd.f32 %v5951, %v5739
      %5968 = vst.msk [vmem:[#allocation4] sm:$0xff] %vm3793, %v5952
      %5969 = vst.msk [vmem:[#allocation4 + $0x8] sm:$0xff] %vm3793, %v5953
      %5970 = vst.msk [vmem:[#allocation4 + $0x10] sm:$0xff] %vm3793, %v5954
      %5971 = vst.msk [vmem:[#allocation4 + $0x18] sm:$0xff] %vm3793, %v5955
      %5972 = vst.msk [vmem:[#allocation4 + $0x20] sm:$0xff] %vm3793, %v5956
      %5973 = vst.msk [vmem:[#allocation4 + $0x28] sm:$0xff] %vm3793, %v5957
      %5974 = vst.msk [vmem:[#allocation4 + $0x30] sm:$0xff] %vm3793, %v5958
      %5975 = vst.msk [vmem:[#allocation4 + $0x38] sm:$0xff] %vm3793, %v5959
      %5976 = vst.msk [vmem:[#allocation4 + $0x40] sm:$0xff] %vm3793, %v5960
      %5977 = vst.msk [vmem:[#allocation4 + $0x48] sm:$0xff] %vm3793, %v5961
      %5978 = vst.msk [vmem:[#allocation4 + $0x50] sm:$0xff] %vm3793, %v5962
      %5979 = vst.msk [vmem:[#allocation4 + $0x58] sm:$0xff] %vm3793, %v5963
      %5980 = vst.msk [vmem:[#allocation4 + $0x60] sm:$0xff] %vm3793, %v5964
      %5981 = vst.msk [vmem:[#allocation4 + $0x68] sm:$0xff] %vm3793, %v5965
      %5982 = vst.msk [vmem:[#allocation4 + $0x70] sm:$0xff] %vm3793, %v5966
      %5983 = vst.msk [vmem:[#allocation4 + $0x78] sm:$0xff] %vm3793, %v5967
      %v5984 = vld [vmem:[#allocation5] sm:$0xff]
      %v5985 = vld [vmem:[#allocation5 + $0x8] sm:$0xff]
      %v5986 = vld [vmem:[#allocation5 + $0x10] sm:$0xff]
      %v5987 = vld [vmem:[#allocation5 + $0x18] sm:$0xff]
      %v5988 = vld [vmem:[#allocation5 + $0x20] sm:$0xff]
      %v5989 = vld [vmem:[#allocation5 + $0x28] sm:$0xff]
      %v5990 = vld [vmem:[#allocation5 + $0x30] sm:$0xff]
      %v5991 = vld [vmem:[#allocation5 + $0x38] sm:$0xff]
      %v5992 = vld [vmem:[#allocation5 + $0x40] sm:$0xff]
      %v5993 = vld [vmem:[#allocation5 + $0x48] sm:$0xff]
      %v5994 = vld [vmem:[#allocation5 + $0x50] sm:$0xff]
      %v5995 = vld [vmem:[#allocation5 + $0x58] sm:$0xff]
      %v5996 = vld [vmem:[#allocation5 + $0x60] sm:$0xff]
      %v5997 = vld [vmem:[#allocation5 + $0x68] sm:$0xff]
      %v5998 = vld [vmem:[#allocation5 + $0x70] sm:$0xff]
      %v5999 = vld [vmem:[#allocation5 + $0x78] sm:$0xff]
      %v6000 = vadd.f32 %v5984, %v5874
      %v6001 = vadd.f32 %v5985, %v5877
      %v6002 = vadd.f32 %v5986, %v5882
      %v6003 = vadd.f32 %v5987, %v5885
      %v6004 = vadd.f32 %v5988, %v5890
      %v6005 = vadd.f32 %v5989, %v5893
      %v6006 = vadd.f32 %v5990, %v5898
      %v6007 = vadd.f32 %v5991, %v5901
      %v6008 = vadd.f32 %v5992, %v5906
      %v6009 = vadd.f32 %v5993, %v5909
      %v6010 = vadd.f32 %v5994, %v5914
      %v6011 = vadd.f32 %v5995, %v5917
      %v6012 = vadd.f32 %v5996, %v5922
      %v6013 = vadd.f32 %v5997, %v5925
      %v6014 = vadd.f32 %v5998, %v5930
      %v6015 = vadd.f32 %v5999, %v5933
      %6016 = vst.msk [vmem:[#allocation5] sm:$0xff] %vm3793, %v6000
      %6017 = vst.msk [vmem:[#allocation5 + $0x8] sm:$0xff] %vm3793, %v6001
      %6018 = vst.msk [vmem:[#allocation5 + $0x10] sm:$0xff] %vm3793, %v6002
      %6019 = vst.msk [vmem:[#allocation5 + $0x18] sm:$0xff] %vm3793, %v6003
      %6020 = vst.msk [vmem:[#allocation5 + $0x20] sm:$0xff] %vm3793, %v6004
      %6021 = vst.msk [vmem:[#allocation5 + $0x28] sm:$0xff] %vm3793, %v6005
      %6022 = vst.msk [vmem:[#allocation5 + $0x30] sm:$0xff] %vm3793, %v6006
      %6023 = vst.msk [vmem:[#allocation5 + $0x38] sm:$0xff] %vm3793, %v6007
      %6024 = vst.msk [vmem:[#allocation5 + $0x40] sm:$0xff] %vm3793, %v6008
      %6025 = vst.msk [vmem:[#allocation5 + $0x48] sm:$0xff] %vm3793, %v6009
      %6026 = vst.msk [vmem:[#allocation5 + $0x50] sm:$0xff] %vm3793, %v6010
      %6027 = vst.msk [vmem:[#allocation5 + $0x58] sm:$0xff] %vm3793, %v6011
      %6028 = vst.msk [vmem:[#allocation5 + $0x60] sm:$0xff] %vm3793, %v6012
      %6029 = vst.msk [vmem:[#allocation5 + $0x68] sm:$0xff] %vm3793, %v6013
      %6030 = vst.msk [vmem:[#allocation5 + $0x70] sm:$0xff] %vm3793, %v6014
      %6031 = vst.msk [vmem:[#allocation5 + $0x78] sm:$0xff] %vm3793, %v6015
      %v6032 = vld [vmem:[#allocation4] sm:$0xff]
      %v6033 = vld [vmem:[#allocation4 + $0x8] sm:$0xff]
      %v6034 = vld [vmem:[#allocation4 + $0x10] sm:$0xff]
      %v6035 = vld [vmem:[#allocation4 + $0x18] sm:$0xff]
      %v6036 = vld [vmem:[#allocation4 + $0x20] sm:$0xff]
      %v6037 = vld [vmem:[#allocation4 + $0x28] sm:$0xff]
      %v6038 = vld [vmem:[#allocation4 + $0x30] sm:$0xff]
      %v6039 = vld [vmem:[#allocation4 + $0x38] sm:$0xff]
      %v6040 = vld [vmem:[#allocation4 + $0x40] sm:$0xff]
      %v6041 = vld [vmem:[#allocation4 + $0x48] sm:$0xff]
      %v6042 = vld [vmem:[#allocation4 + $0x50] sm:$0xff]
      %v6043 = vld [vmem:[#allocation4 + $0x58] sm:$0xff]
      %v6044 = vld [vmem:[#allocation4 + $0x60] sm:$0xff]
      %v6045 = vld [vmem:[#allocation4 + $0x68] sm:$0xff]
      %v6046 = vld [vmem:[#allocation4 + $0x70] sm:$0xff]
      %v6047 = vld [vmem:[#allocation4 + $0x78] sm:$0xff]
      %v6048 = vmax.f32 %v6032, 0.0
      %v6049 = vmax.f32 %v6033, 0.0
      %v6050 = vmax.f32 %v6034, 0.0
      %v6051 = vmax.f32 %v6035, 0.0
      %v6052 = vmax.f32 %v6036, 0.0
      %v6053 = vmax.f32 %v6037, 0.0
      %v6054 = vmax.f32 %v6038, 0.0
      %v6055 = vmax.f32 %v6039, 0.0
      %v6056 = vmax.f32 %v6040, 0.0
      %v6057 = vmax.f32 %v6041, 0.0
      %v6058 = vmax.f32 %v6042, 0.0
      %v6059 = vmax.f32 %v6043, 0.0
      %v6060 = vmax.f32 %v6044, 0.0
      %v6061 = vmax.f32 %v6045, 0.0
      %v6062 = vmax.f32 %v6046, 0.0
      %v6063 = vmax.f32 %v6047, 0.0
      %v6064 = vld [vmem:[#allocation5] sm:$0xff]
      %v6065 = vld [vmem:[#allocation5 + $0x8] sm:$0xff]
      %v6066 = vld [vmem:[#allocation5 + $0x10] sm:$0xff]
      %v6067 = vld [vmem:[#allocation5 + $0x18] sm:$0xff]
      %v6068 = vld [vmem:[#allocation5 + $0x20] sm:$0xff]
      %v6069 = vld [vmem:[#allocation5 + $0x28] sm:$0xff]
      %v6070 = vld [vmem:[#allocation5 + $0x30] sm:$0xff]
      %v6071 = vld [vmem:[#allocation5 + $0x38] sm:$0xff]
      %v6072 = vld [vmem:[#allocation5 + $0x40] sm:$0xff]
      %v6073 = vld [vmem:[#allocation5 + $0x48] sm:$0xff]
      %v6074 = vld [vmem:[#allocation5 + $0x50] sm:$0xff]
      %v6075 = vld [vmem:[#allocation5 + $0x58] sm:$0xff]
      %v6076 = vld [vmem:[#allocation5 + $0x60] sm:$0xff]
      %v6077 = vld [vmem:[#allocation5 + $0x68] sm:$0xff]
      %v6078 = vld [vmem:[#allocation5 + $0x70] sm:$0xff]
      %v6079 = vld [vmem:[#allocation5 + $0x78] sm:$0xff]
      %v6080 = vmax.f32 %v6064, 0.0
      %v6081 = vmax.f32 %v6065, 0.0
      %v6082 = vmax.f32 %v6066, 0.0
      %v6083 = vmax.f32 %v6067, 0.0
      %v6084 = vmax.f32 %v6068, 0.0
      %v6085 = vmax.f32 %v6069, 0.0
      %v6086 = vmax.f32 %v6070, 0.0
      %v6087 = vmax.f32 %v6071, 0.0
      %v6088 = vmax.f32 %v6072, 0.0
      %v6089 = vmax.f32 %v6073, 0.0
      %v6090 = vmax.f32 %v6074, 0.0
      %v6091 = vmax.f32 %v6075, 0.0
      %v6092 = vmax.f32 %v6076, 0.0
      %v6093 = vmax.f32 %v6077, 0.0
      %v6094 = vmax.f32 %v6078, 0.0
      %v6095 = vmax.f32 %v6079, 0.0
      %6112 = vrot.lane.b32.xlu0 %v6080, 4
      %v6113 = vpop.permute.xlu0 %6112
      %6114 = vrot.lane.b32.xlu0 %v6081, 4
      %v6115 = vpop.permute.xlu0 %6114
      %6116 = vrot.lane.b32.xlu0 %v6082, 4
      %v6117 = vpop.permute.xlu0 %6116
      %6118 = vrot.lane.b32.xlu0 %v6083, 4
      %v6119 = vpop.permute.xlu0 %6118
      %6120 = vrot.lane.b32.xlu0 %v6084, 4
      %v6121 = vpop.permute.xlu0 %6120
      %6122 = vrot.lane.b32.xlu0 %v6085, 4
      %v6123 = vpop.permute.xlu0 %6122
      %6124 = vrot.lane.b32.xlu0 %v6086, 4
      %v6125 = vpop.permute.xlu0 %6124
      %6126 = vrot.lane.b32.xlu0 %v6087, 4
      %v6127 = vpop.permute.xlu0 %6126
      %6128 = vrot.lane.b32.xlu0 %v6088, 4
      %v6129 = vpop.permute.xlu0 %6128
      %6130 = vrot.lane.b32.xlu0 %v6089, 4
      %v6131 = vpop.permute.xlu0 %6130
      %6132 = vrot.lane.b32.xlu0 %v6090, 4
      %v6133 = vpop.permute.xlu0 %6132
      %6134 = vrot.lane.b32.xlu0 %v6091, 4
      %v6135 = vpop.permute.xlu0 %6134
      %6136 = vrot.lane.b32.xlu0 %v6092, 4
      %v6137 = vpop.permute.xlu0 %6136
      %6138 = vrot.lane.b32.xlu0 %v6093, 4
      %v6139 = vpop.permute.xlu0 %6138
      %6140 = vrot.lane.b32.xlu0 %v6094, 4
      %v6141 = vpop.permute.xlu0 %6140
      %6142 = vrot.lane.b32.xlu0 %v6095, 4
      %v6143 = vpop.permute.xlu0 %6142
      %v6160 = vsel %vm3793, %v6048, %v6113
      %v6161 = vsel %vm3793, %v6049, %v6115
      %v6162 = vsel %vm3793, %v6050, %v6117
      %v6163 = vsel %vm3793, %v6051, %v6119
      %v6164 = vsel %vm3793, %v6052, %v6121
      %v6165 = vsel %vm3793, %v6053, %v6123
      %v6166 = vsel %vm3793, %v6054, %v6125
      %v6167 = vsel %vm3793, %v6055, %v6127
      %v6168 = vsel %vm3793, %v6056, %v6129
      %v6169 = vsel %vm3793, %v6057, %v6131
      %v6170 = vsel %vm3793, %v6058, %v6133
      %v6171 = vsel %vm3793, %v6059, %v6135
      %v6172 = vsel %vm3793, %v6060, %v6137
      %v6173 = vsel %vm3793, %v6061, %v6139
      %v6174 = vsel %vm3793, %v6062, %v6141
      %v6175 = vsel %vm3793, %v6063, %v6143
      %v6176 = vpack.c.bf16 %v6161, %v6160
      %v6177 = vpack.c.bf16 %v6163, %v6162
      %v6178 = vpack.c.bf16 %v6165, %v6164
      %v6179 = vpack.c.bf16 %v6167, %v6166
      %v6180 = vpack.c.bf16 %v6169, %v6168
      %v6181 = vpack.c.bf16 %v6171, %v6170
      %v6182 = vpack.c.bf16 %v6173, %v6172
      %v6183 = vpack.c.bf16 %v6175, %v6174
      %v6192 = vunpack.c.l.b16 %v6176
      %v6193 = vunpack.c.h.b16 %v6176
      %v6194 = vunpack.c.l.b16 %v6177
      %v6195 = vunpack.c.h.b16 %v6177
      %v6196 = vunpack.c.l.b16 %v6178
      %v6197 = vunpack.c.h.b16 %v6178
      %v6198 = vunpack.c.l.b16 %v6179
      %v6199 = vunpack.c.h.b16 %v6179
      %v6200 = vunpack.c.l.b16 %v6180
      %v6201 = vunpack.c.h.b16 %v6180
      %v6202 = vunpack.c.l.b16 %v6181
      %v6203 = vunpack.c.h.b16 %v6181
      %v6204 = vunpack.c.l.b16 %v6182
      %v6205 = vunpack.c.h.b16 %v6182
      %v6206 = vunpack.c.l.b16 %v6183
      %v6207 = vunpack.c.h.b16 %v6183
      %v6208 = vpack.c.b16 %v6192, %v6192
      %v6209 = vpack.c.b16 %v6193, %v6193
      %v6210 = vpack.c.b16 %v6194, %v6194
      %v6211 = vpack.c.b16 %v6195, %v6195
      %v6212 = vpack.c.b16 %v6196, %v6196
      %v6213 = vpack.c.b16 %v6197, %v6197
      %v6214 = vpack.c.b16 %v6198, %v6198
      %v6215 = vpack.c.b16 %v6199, %v6199
      %v6216 = vpack.c.b16 %v6200, %v6200
      %v6217 = vpack.c.b16 %v6201, %v6201
      %v6218 = vpack.c.b16 %v6202, %v6202
      %v6219 = vpack.c.b16 %v6203, %v6203
      %v6220 = vpack.c.b16 %v6204, %v6204
      %v6221 = vpack.c.b16 %v6205, %v6205
      %v6222 = vpack.c.b16 %v6206, %v6206
      %v6223 = vpack.c.b16 %v6207, %v6207
      %vm6240 = vcmask 60416
      %6241 = vst.msk [vmem:[%s208] sm:$0xf] %vm6240, %v6208
      %6242 = vst.msk [vmem:[%s208 + $0x4] sm:$0xf] %vm6240, %v6209
      %6243 = vst.msk [vmem:[%s208 + $0x8] sm:$0xf] %vm6240, %v6210
      %6244 = vst.msk [vmem:[%s208 + $0xc] sm:$0xf] %vm6240, %v6211
      %6245 = vst.msk [vmem:[%s208 + $0x10] sm:$0xf] %vm6240, %v6212
      %6246 = vst.msk [vmem:[%s208 + $0x14] sm:$0xf] %vm6240, %v6213
      %6247 = vst.msk [vmem:[%s208 + $0x18] sm:$0xf] %vm6240, %v6214
      %6248 = vst.msk [vmem:[%s208 + $0x1c] sm:$0xf] %vm6240, %v6215
      %6249 = vst.msk [vmem:[%s208 + $0x20] sm:$0xf] %vm6240, %v6216
      %6250 = vst.msk [vmem:[%s208 + $0x24] sm:$0xf] %vm6240, %v6217
      %6251 = vst.msk [vmem:[%s208 + $0x28] sm:$0xf] %vm6240, %v6218
      %6252 = vst.msk [vmem:[%s208 + $0x2c] sm:$0xf] %vm6240, %v6219
      %6253 = vst.msk [vmem:[%s208 + $0x30] sm:$0xf] %vm6240, %v6220
      %6254 = vst.msk [vmem:[%s208 + $0x34] sm:$0xf] %vm6240, %v6221
      %6255 = vst.msk [vmem:[%s208 + $0x38] sm:$0xf] %vm6240, %v6222
      %6256 = vst.msk [vmem:[%s208 + $0x3c] sm:$0xf] %vm6240, %v6223
      %s6257 = smul.u32 8, %s19
      %p6258 = scmp.lt.s32.totalorder %s18, 1
      %s6259 = scalar_select %p6258, %s18, 1
      %p6260 = scmp.lt.s32.totalorder %s6257, 31
      %s6261 = scalar_select %p6260, %s6257, 31
      %s6262 = smul.addr %s6261, 2
      %s6263 = smul.addr %s6259, 64
      %s6264 = sadd.s32 %s6262, %s6263
      %s6265 = smul.addr %s6264, 4
      %s6266 = scalar_lea.vmem %s3, %s6265
      // Predicated region
      $region41: #{tpu_custom_call.1} parent=31 // pred_check
        %p6267 = pneg %p118
      $region42: #{tpu_custom_call.1} parent=31 // pred_check_branch
        %6269 = sbr.rel (%p6267) target = $region44
      $region43: #{tpu_custom_call.1} parent=31 // pred_region
        %s6270 = smul.u32 8, %s19
      $region44: #{tpu_custom_call.1} parent=31 // pred_fallthru
        _
    $region32: #{tpu_custom_call.1} parent=5 // pred_fallthru
      _
    %p6271 = scmp.le.s32.totalorder 2, %s9
    // Predicated region
    $region45: #{tpu_custom_call.1} parent=5 // pred_check
      %p6272 = pneg %p6271
    $region46: #{tpu_custom_call.1} parent=5 // pred_check_branch
      %6274 = sbr.rel (%p6272) target = $region48
    $region47: #{tpu_custom_call.1} parent=5 // pred_region
      %s6275 = ssub.s32 %s9, 2
      // Predicated region
      $region49: #{tpu_custom_call.1} parent=47 // pred_check
        %p6276 = pneg %p124
      $region50: #{tpu_custom_call.1} parent=47 // pred_check_branch
        %6278 = sbr.rel (%p6276) target = $region52
      $region51: #{tpu_custom_call.1} parent=47 // pred_region
        %s6279 = smul.u32 8, %s21
        %p6280 = scmp.lt.s32.totalorder %s20, 1
        %s6281 = scalar_select %p6280, %s20, 1
        %p6282 = scmp.lt.s32.totalorder %s6279, 31
        %s6283 = scalar_select %p6282, %s6279, 31
        %s6284 = smul.addr %s6283, 2
        %s6285 = smul.addr %s6281, 64
        %s6286 = sadd.s32 %s6284, %s6285
        %s6287 = smul.addr %s6286, 4
        %s6288 = scalar_lea.vmem %s3, %s6287
      $region52: #{tpu_custom_call.1} parent=47 // pred_fallthru
        _
    $region48: #{tpu_custom_call.1} parent=5 // pred_fallthru
      _
  $region6: #{tpu_custom_call.1} parent=0 // loop_footer
    %s13 = sadd.s32 1, %s9
  $region7: #{tpu_custom_call.1} parent=0 // loop_footer_branch
    %8 = sbr.rel target = $region3
  $region8: #{tpu_custom_call.1} parent=0 // loop_exit
    _

</llo_original>
